<compile_context>
chip_gen: v7x
topology: tpu7x:2x2x1
jax: 0.10.0
libtpu: 0.0.40
codegen_flags: <defaults>
</compile_context>

<pallas_src>
import jax
import jax.numpy as jnp
from jax.experimental import pallas as pl
from jax.experimental.pallas import tpu as pltpu

# ---------------------------------------------------------------------------
# Problem constants (small, but consistent with the module's forward pass)
# ---------------------------------------------------------------------------
N_QUANT = 200            # module-level global `n_quant`
NUM_ACTIONS = 4          # Breakout action space size
DEPTHS = (32, 64, 64)    # nature_cnn depths
FINAL_LAYER = 512        # nature_cnn final linear width
IN_CHANNELS = 4          # frame-stack k=4
SPATIAL = 36             # 36 -> 8 -> 3 -> 1 through the conv stack
BATCH = 2

S1, K1 = 4, 8            # conv1 stride / kernel
S2, K2 = 2, 4            # conv2
S3, K3 = 1, 3            # conv3
OH1 = (SPATIAL - K1) // S1 + 1   # 8
OH2 = (OH1 - K2) // S2 + 1       # 3
OH3 = (OH2 - K3) // S3 + 1       # 1 -> flatten size = 64

CONV1_K = 2 * 2 * IN_CHANNELS * S1 * S1   # 256 (2x2 s2d taps x 64 s2d channels)
CONV2_K = K2 * K2 * DEPTHS[0]             # 512
CONV3_K = K3 * K3 * DEPTHS[1]             # 576

# packed weight buffer (w1 padded to 64 lanes, stacked with w2, w3)
W1_ROWS, W2_ROWS, W3_ROWS = CONV1_K, CONV2_K, CONV3_K
W123_ROWS = W1_ROWS + W2_ROWS + W3_ROWS   # 1344
W123_COLS = DEPTHS[1]                     # 64

# packed conv/fc1 biases at 128-aligned lane offsets (cheap in-kernel slices)
B1_OFF, B2_OFF, B3_OFF, B4_OFF = 0, 128, 256, 384
BCONV_LANES = B4_OFF + FINAL_LAYER        # 896

FC2_OUT = NUM_ACTIONS * N_QUANT           # 800
FC2_BLK = 512                             # fc2 output-column tile (grid axis)
FC2_PAD = 2 * FC2_BLK                     # 1024 (800 padded up)


# ---------------------------------------------------------------------------
# Single fused Pallas kernel:
#   conv1+relu -> conv2+relu -> conv3+relu -> fc1+relu -> fc2 (one 512-col tile)
# ---------------------------------------------------------------------------
def _qrdqn_fused_kernel(x_ref, w123_ref, bconv_ref, w4_ref, w5_ref, b5_ref, o_ref):
    f32 = jnp.float32
    cdt = jnp.bfloat16                                 # MXU-native operand dtype
    relu = lambda v: jnp.maximum(v, 0.0)

    x = x_ref[...]                                     # (N, 9, 9, 64) f32 s2d input
    n = x.shape[0]

    # ---- unpack packed weights (bf16) and biases (f32) ----------------------
    w1 = w123_ref[0:W1_ROWS, 0:DEPTHS[0]]                      # (256, 32)
    w2 = w123_ref[W1_ROWS:W1_ROWS + W2_ROWS, :]                # (512, 64)
    w3 = w123_ref[W1_ROWS + W2_ROWS:W123_ROWS, :]              # (576, 64)
    b1 = bconv_ref[:, B1_OFF:B1_OFF + DEPTHS[0]]               # (1, 32)
    b2 = bconv_ref[:, B2_OFF:B2_OFF + DEPTHS[1]]               # (1, 64)
    b3 = bconv_ref[:, B3_OFF:B3_OFF + DEPTHS[2]]               # (1, 64)
    b4 = bconv_ref[:, B4_OFF:B4_OFF + FINAL_LAYER]             # (1, 512)

    # ---- conv1: 8x8 stride-4 conv == 2x2 stride-1 conv on the s2d input -----
    shifted = [x[:, di:di + OH1, dj:dj + OH1, :]               # 4 shifted slices
               for di in range(2) for dj in range(2)]
    p1 = jnp.concatenate(shifted, axis=-1)                     # (N, 8, 8, 256)
    p1 = p1.reshape(n * OH1 * OH1, CONV1_K)                    # (N*64, 256)
    h1 = relu(jnp.dot(p1.astype(cdt), w1,
                      preferred_element_type=f32) + b1)        # (N*64, 32)

    # ---- conv2: 4x4 stride-2, 8x8 -> 3x3 -------------------------------------
    # Split h1 once into the 4 stride-2 parity planes; every tap is then a
    # contiguous 3x3 slice, one 16-way concat builds the full patch matrix and
    # a single MXU matmul evaluates the layer.
    h1s = h1.reshape(n, 4, 2, 4, 2, DEPTHS[0])                 # (n, y', pi, x', pj, c)
    planes = [[h1s[:, :, pi, :, pj, :] for pj in range(2)]     # each (n, 4, 4, 32)
              for pi in range(2)]
    chunks = []
    for i in range(K2):
        a, pi = i // 2, i % 2
        for j in range(K2):
            b_, pj = j // 2, j % 2
            chunks.append(planes[pi][pj][:, a:a + OH2, b_:b_ + OH2, :])  # (n,3,3,32)
    p2 = jnp.concatenate(chunks, axis=-1)                      # (n, 3, 3, 512) cols (i,j,c)
    p2 = p2.reshape(n * OH2 * OH2, CONV2_K)                    # (n*9, 512) rows (n,oy,ox)
    h2 = relu(jnp.dot(p2.astype(cdt), w2,
                      preferred_element_type=f32) + b2)        # (n*9, 64)

    # ---- conv3: 3x3 on a 3x3 map -> 1x1 == dense over all 9 positions -------
    h2r = h2.reshape(n, OH2 * OH2, DEPTHS[1])                  # (n, 9, 64)
    f3 = jnp.concatenate([h2r[:, p, :] for p in range(OH2 * OH2)], axis=-1)  # (n, 576)
    h3 = relu(jnp.dot(f3.astype(cdt), w3,
                      preferred_element_type=f32) + b3)        # (n, 64) == Flatten output

    # ---- fc1 + ReLU ----------------------------------------------------------
    h4 = relu(jnp.dot(h3.astype(cdt), w4_ref[...],
                      preferred_element_type=f32) + b4)        # (n, 512)

    # ---- fc2: this grid step's 512-column block ------------------------------
    out = jnp.dot(h4.astype(cdt), w5_ref[...],
                  preferred_element_type=f32) + b5_ref[...]    # (n, 512)
    o_ref[...] = out.astype(o_ref.dtype)


# ---------------------------------------------------------------------------
# Wrapper: one cheap space-to-depth of the input, then one pallas_call
# ---------------------------------------------------------------------------
def _space_to_depth(x):
    """(N, C, H, W) -> (N, H/S1, W/S1, C*S1*S1) with depth index c*16 + hs*4 + ws."""
    n, c, h, w = x.shape
    hb, wb = h // S1, w // S1
    y = x.reshape(n, c, hb, S1, wb, S1)
    y = y.transpose(0, 2, 4, 1, 3, 5)                # (n, hb, wb, c, hs, ws)
    return y.reshape(n, hb, wb, c * S1 * S1)


def qrdqn_forward_fused(kp, x):
    """x: (N, 4, 36, 36) f32 -> (N, NUM_ACTIONS, N_QUANT) f32."""
    n = x.shape[0]
    xs2d = _space_to_depth(x)                        # (N, 9, 9, 64)
    grid_j = FC2_PAD // FC2_BLK                      # 2 fc2 output-column tiles
    out = pl.pallas_call(
        _qrdqn_fused_kernel,
        out_shape=jax.ShapeDtypeStruct((n, FC2_PAD), jnp.float32),
        grid=(grid_j,),
        in_specs=[
            pl.BlockSpec((n, OH1 + 1, OH1 + 1, IN_CHANNELS * S1 * S1),
                         lambda j: (0, 0, 0, 0)),                    # x (resident)
            pl.BlockSpec((W123_ROWS, W123_COLS), lambda j: (0, 0)),  # packed w1|w2|w3
            pl.BlockSpec((1, BCONV_LANES), lambda j: (0, 0)),        # packed b1..b4
            pl.BlockSpec((DEPTHS[2] * OH3 * OH3, FINAL_LAYER),
                         lambda j: (0, 0)),                          # w4
            pl.BlockSpec((FINAL_LAYER, FC2_BLK), lambda j: (0, j)),  # w5 column tile
            pl.BlockSpec((1, FC2_BLK), lambda j: (0, j)),            # b5 column tile
        ],
        out_specs=pl.BlockSpec((n, FC2_BLK), lambda j: (0, j)),
        compiler_params=pltpu.CompilerParams(
            dimension_semantics=("parallel",)),      # v7x: one fc2 tile per TensorCore
    )(xs2d, kp["w123"], kp["bconv"], kp["w4"], kp["w5"], kp["b5"])
    return out[:, :FC2_OUT].reshape(n, NUM_ACTIONS, N_QUANT)


network_forward = jax.jit(qrdqn_forward_fused)


# ---------------------------------------------------------------------------
# Parameters: PyTorch layouts for reference, kernel-ready layouts prepared once
# ---------------------------------------------------------------------------
def init_params(key):
    def nrm(k, shape, scale=0.05):
        return scale * jax.random.normal(k, shape, dtype=jnp.float32)

    ks = jax.random.split(key, 10)
    n_flatten = DEPTHS[2] * OH3 * OH3                 # 64
    return {
        "conv1_w": nrm(ks[0], (DEPTHS[0], IN_CHANNELS, K1, K1)),
        "conv1_b": nrm(ks[1], (DEPTHS[0],)),
        "conv2_w": nrm(ks[2], (DEPTHS[1], DEPTHS[0], K2, K2)),
        "conv2_b": nrm(ks[3], (DEPTHS[1],)),
        "conv3_w": nrm(ks[4], (DEPTHS[2], DEPTHS[1], K3, K3)),
        "conv3_b": nrm(ks[5], (DEPTHS[2],)),
        "fc1_w": nrm(ks[6], (FINAL_LAYER, n_flatten)),            # PyTorch Linear (out, in)
        "fc1_b": nrm(ks[7], (FINAL_LAYER,)),
        "fc2_w": nrm(ks[8], (NUM_ACTIONS * N_QUANT, FINAL_LAYER)),
        "fc2_b": nrm(ks[9], (NUM_ACTIONS * N_QUANT,)),
    }


def prepare_kernel_params(params):
    """One-time rearrangement/packing of PyTorch-layout params into kernel layouts."""
    f32, bf16 = jnp.float32, jnp.bfloat16

    # conv1 OIHW (32,4,8,8) -> (di, dj, c, hs, ws, o) -> (256, 32); kh=di*4+hs, kw=dj*4+ws
    w1 = params["conv1_w"].reshape(DEPTHS[0], IN_CHANNELS, 2, S1, 2, S1)
    w1 = w1.transpose(2, 4, 1, 3, 5, 0).reshape(CONV1_K, DEPTHS[0])
    w1 = jnp.pad(w1, ((0, 0), (0, W123_COLS - DEPTHS[0])))        # pad cols 32 -> 64
    # conv2 OIHW (64,32,4,4) -> (i, j, c, o) -> (512, 64)
    w2 = params["conv2_w"].transpose(2, 3, 1, 0).reshape(CONV2_K, DEPTHS[1])
    # conv3 OIHW (64,64,3,3) -> (i, j, c, o) -> (576, 64)
    w3 = params["conv3_w"].transpose(2, 3, 1, 0).reshape(CONV3_K, DEPTHS[2])
    w123 = jnp.concatenate([w1, w2, w3], axis=0).astype(bf16)     # (1344, 64) bf16

    # FC weights pre-transposed to (in, out); fc2 padded to 1024 output lanes
    w4 = params["fc1_w"].T.astype(bf16)                           # (64, 512) bf16
    w5 = jnp.zeros((FINAL_LAYER, FC2_PAD), f32).at[:, :FC2_OUT].set(params["fc2_w"].T)
    w5 = w5.astype(bf16)                                          # (512, 1024) bf16

    # conv/fc1 biases packed at 128-aligned lane offsets (kept f32)
    bconv = jnp.zeros((1, BCONV_LANES), f32)
    bconv = bconv.at[0, B1_OFF:B1_OFF + DEPTHS[0]].set(params["conv1_b"])
    bconv = bconv.at[0, B2_OFF:B2_OFF + DEPTHS[1]].set(params["conv2_b"])
    bconv = bconv.at[0, B3_OFF:B3_OFF + DEPTHS[2]].set(params["conv3_b"])
    bconv = bconv.at[0, B4_OFF:B4_OFF + FINAL_LAYER].set(params["fc1_b"])
    b5 = jnp.zeros((1, FC2_PAD), f32).at[0, :FC2_OUT].set(params["fc2_b"])

    kp = {"w123": w123, "bconv": bconv, "w4": w4, "w5": w5, "b5": b5}
    return jax.tree_util.tree_map(jax.device_put, kp)


# ---------------------------------------------------------------------------
if __name__ == "__main__":
    key = jax.random.PRNGKey(0)
    k_param, k_x = jax.random.split(key)
    params = init_params(k_param)
    kparams = prepare_kernel_params(params)           # done ONCE, outside the hot path
    x = jax.random.uniform(k_x, (BATCH, IN_CHANNELS, SPATIAL, SPATIAL), dtype=jnp.float32)

    out = network_forward(kparams, x)
    out = jax.block_until_ready(out)

    assert out.shape == (BATCH, NUM_ACTIONS, N_QUANT), out.shape
    assert out.dtype == jnp.float32
    assert bool(jnp.all(jnp.isfinite(out)))

    # sanity check against pure-JAX f32 reference (lax conv + dense), PyTorch semantics
    def ref_forward(params, x):
        def conv(x, w, b, s):
            y = jax.lax.conv_general_dilated(
                x, w, window_strides=(s, s), padding="VALID",
                dimension_numbers=("NCHW", "OIHW", "NCHW"))
            return jax.nn.relu(y + b[None, :, None, None])
        h = conv(x, params["conv1_w"], params["conv1_b"], S1)
        h = conv(h, params["conv2_w"], params["conv2_b"], S2)
        h = conv(h, params["conv3_w"], params["conv3_b"], S3)
        h = h.reshape(x.shape[0], -1)
        h = jax.nn.relu(h @ params["fc1_w"].T + params["fc1_b"])
        h = h @ params["fc2_w"].T + params["fc2_b"]
        return h.reshape(x.shape[0], NUM_ACTIONS, N_QUANT)

    ref = ref_forward(params, x)
    max_err = float(jnp.max(jnp.abs(out - ref)))
    # tolerance relaxed vs the f32 version because weights/dot operands are bf16
    assert bool(jnp.allclose(out, ref, atol=1e-2, rtol=1e-2)), max_err

    print("KERNEL_OK")
</pallas_src>

<mosaic_0001>
module attributes {stable_mosaic.version = 11 : i64} {
  func.func @_qrdqn_fused_kernel(%arg0: i32, %arg1: memref<2x9x9x64xf32, #tpu.memory_space<vmem>>, %arg2: memref<1344x64xbf16, #tpu.memory_space<vmem>>, %arg3: memref<1x896xf32, #tpu.memory_space<vmem>>, %arg4: memref<64x512xbf16, #tpu.memory_space<vmem>>, %arg5: memref<512x512xbf16, #tpu.memory_space<vmem>>, %arg6: memref<1x512xf32, #tpu.memory_space<vmem>>, %arg7: memref<2x512xf32, #tpu.memory_space<vmem>>) attributes {dimension_semantics = [#tpu.dimension_semantics<parallel>], iteration_bounds = array<i64: 2>, scalar_prefetch = 0 : i64, scratch_operands = 0 : i64, tpu.core_type = #tpu.core_type<tc>, window_params = [{pipeline_mode = #tpu.pipeline_mode<synchronous>, transform_indices = @transform_0, window_bounds = array<i64: 2, 9, 9, 64>}, {pipeline_mode = #tpu.pipeline_mode<synchronous>, transform_indices = @transform_1, window_bounds = array<i64: 1344, 64>}, {pipeline_mode = #tpu.pipeline_mode<synchronous>, transform_indices = @transform_2, window_bounds = array<i64: 1, 896>}, {pipeline_mode = #tpu.pipeline_mode<synchronous>, transform_indices = @transform_3, window_bounds = array<i64: 64, 512>}, {transform_indices = @transform_4, window_bounds = array<i64: 512, 512>}, {transform_indices = @transform_5, window_bounds = array<i64: 1, 512>}, {transform_indices = @transform_6, window_bounds = array<i64: 2, 512>}]} {
    %c0 = arith.constant 0 : index
    %c0_0 = arith.constant 0 : index
    %c0_1 = arith.constant 0 : index
    %c0_2 = arith.constant 0 : index
    %0 = vector.load %arg1[%c0, %c0_0, %c0_1, %c0_2] : memref<2x9x9x64xf32, #tpu.memory_space<vmem>>, vector<2x9x9x64xf32>
    %c0_3 = arith.constant 0 : index
    %c0_4 = arith.constant 0 : index
    %1 = vector.load %arg2[%c0_3, %c0_4] : memref<1344x64xbf16, #tpu.memory_space<vmem>>, vector<256x32xbf16>
    %c256 = arith.constant 256 : index
    %c0_5 = arith.constant 0 : index
    %2 = vector.load %arg2[%c256, %c0_5] : memref<1344x64xbf16, #tpu.memory_space<vmem>>, vector<512x64xbf16>
    %c768 = arith.constant 768 : index
    %c0_6 = arith.constant 0 : index
    %3 = vector.load %arg2[%c768, %c0_6] : memref<1344x64xbf16, #tpu.memory_space<vmem>>, vector<576x64xbf16>
    %c0_7 = arith.constant 0 : index
    %c0_8 = arith.constant 0 : index
    %4 = vector.load %arg3[%c0_7, %c0_8] : memref<1x896xf32, #tpu.memory_space<vmem>>, vector<1x32xf32>
    %c0_9 = arith.constant 0 : index
    %c128 = arith.constant 128 : index
    %5 = vector.load %arg3[%c0_9, %c128] : memref<1x896xf32, #tpu.memory_space<vmem>>, vector<1x64xf32>
    %c0_10 = arith.constant 0 : index
    %c256_11 = arith.constant 256 : index
    %6 = vector.load %arg3[%c0_10, %c256_11] : memref<1x896xf32, #tpu.memory_space<vmem>>, vector<1x64xf32>
    %c0_12 = arith.constant 0 : index
    %c384 = arith.constant 384 : index
    %7 = vector.load %arg3[%c0_12, %c384] : memref<1x896xf32, #tpu.memory_space<vmem>>, vector<1x512xf32>
    %8 = vector.extract_strided_slice %0 {offsets = [0, 0, 0, 0], sizes = [2, 8, 8, 64], strides = [1, 1, 1, 1]} : vector<2x9x9x64xf32> to vector<2x8x8x64xf32>
    %9 = vector.extract_strided_slice %0 {offsets = [0, 0, 1, 0], sizes = [2, 8, 8, 64], strides = [1, 1, 1, 1]} : vector<2x9x9x64xf32> to vector<2x8x8x64xf32>
    %10 = vector.extract_strided_slice %0 {offsets = [0, 1, 0, 0], sizes = [2, 8, 8, 64], strides = [1, 1, 1, 1]} : vector<2x9x9x64xf32> to vector<2x8x8x64xf32>
    %11 = vector.extract_strided_slice %0 {offsets = [0, 1, 1, 0], sizes = [2, 8, 8, 64], strides = [1, 1, 1, 1]} : vector<2x9x9x64xf32> to vector<2x8x8x64xf32>
    %12 = tpu.concatenate %8, %9, %10, %11 in 3 : vector<2x8x8x64xf32>, vector<2x8x8x64xf32>, vector<2x8x8x64xf32>, vector<2x8x8x64xf32> -> vector<2x8x8x256xf32>
    %13 = vector.shape_cast %12 : vector<2x8x8x256xf32> to vector<128x256xf32>
    %14 = arith.truncf %13 : vector<128x256xf32> to vector<128x256xbf16>
    %cst = arith.constant dense<0.000000e+00> : vector<128x32xf32>
    %15 = tpu.matmul %14, %1, %cst {dimension_numbers = #tpu.dot_dimension_numbers<[1], [0], [0], [1], [0, 0, 1, 1], [], []>} : vector<128x256xbf16>, vector<256x32xbf16>, vector<128x32xf32> -> vector<128x32xf32>
    %16 = vector.broadcast %4 : vector<1x32xf32> to vector<128x32xf32>
    %17 = arith.addf %15, %16 : vector<128x32xf32>
    %cst_13 = arith.constant 0.000000e+00 : f32
    %18 = vector.broadcast %cst_13 : f32 to vector<128x32xf32>
    %19 = arith.maximumf %17, %18 : vector<128x32xf32>
    %20 = vector.shape_cast %19 : vector<128x32xf32> to vector<2x4x2x4x2x32xf32>
    %21 = vector.extract_strided_slice %20 {offsets = [0, 0, 0, 0, 0, 0], sizes = [2, 4, 1, 4, 1, 32], strides = [1, 1, 1, 1, 1, 1]} : vector<2x4x2x4x2x32xf32> to vector<2x4x1x4x1x32xf32>
    %22 = vector.shape_cast %21 : vector<2x4x1x4x1x32xf32> to vector<2x4x4x32xf32>
    %23 = vector.extract_strided_slice %20 {offsets = [0, 0, 0, 0, 1, 0], sizes = [2, 4, 1, 4, 1, 32], strides = [1, 1, 1, 1, 1, 1]} : vector<2x4x2x4x2x32xf32> to vector<2x4x1x4x1x32xf32>
    %24 = vector.shape_cast %23 : vector<2x4x1x4x1x32xf32> to vector<2x4x4x32xf32>
    %25 = vector.extract_strided_slice %20 {offsets = [0, 0, 1, 0, 0, 0], sizes = [2, 4, 1, 4, 1, 32], strides = [1, 1, 1, 1, 1, 1]} : vector<2x4x2x4x2x32xf32> to vector<2x4x1x4x1x32xf32>
    %26 = vector.shape_cast %25 : vector<2x4x1x4x1x32xf32> to vector<2x4x4x32xf32>
    %27 = vector.extract_strided_slice %20 {offsets = [0, 0, 1, 0, 1, 0], sizes = [2, 4, 1, 4, 1, 32], strides = [1, 1, 1, 1, 1, 1]} : vector<2x4x2x4x2x32xf32> to vector<2x4x1x4x1x32xf32>
    %28 = vector.shape_cast %27 : vector<2x4x1x4x1x32xf32> to vector<2x4x4x32xf32>
    %29 = vector.extract_strided_slice %22 {offsets = [0, 0, 0, 0], sizes = [2, 3, 3, 32], strides = [1, 1, 1, 1]} : vector<2x4x4x32xf32> to vector<2x3x3x32xf32>
    %30 = vector.extract_strided_slice %24 {offsets = [0, 0, 0, 0], sizes = [2, 3, 3, 32], strides = [1, 1, 1, 1]} : vector<2x4x4x32xf32> to vector<2x3x3x32xf32>
    %31 = vector.extract_strided_slice %22 {offsets = [0, 0, 1, 0], sizes = [2, 3, 3, 32], strides = [1, 1, 1, 1]} : vector<2x4x4x32xf32> to vector<2x3x3x32xf32>
    %32 = vector.extract_strided_slice %24 {offsets = [0, 0, 1, 0], sizes = [2, 3, 3, 32], strides = [1, 1, 1, 1]} : vector<2x4x4x32xf32> to vector<2x3x3x32xf32>
    %33 = vector.extract_strided_slice %26 {offsets = [0, 0, 0, 0], sizes = [2, 3, 3, 32], strides = [1, 1, 1, 1]} : vector<2x4x4x32xf32> to vector<2x3x3x32xf32>
    %34 = vector.extract_strided_slice %28 {offsets = [0, 0, 0, 0], sizes = [2, 3, 3, 32], strides = [1, 1, 1, 1]} : vector<2x4x4x32xf32> to vector<2x3x3x32xf32>
    %35 = vector.extract_strided_slice %26 {offsets = [0, 0, 1, 0], sizes = [2, 3, 3, 32], strides = [1, 1, 1, 1]} : vector<2x4x4x32xf32> to vector<2x3x3x32xf32>
    %36 = vector.extract_strided_slice %28 {offsets = [0, 0, 1, 0], sizes = [2, 3, 3, 32], strides = [1, 1, 1, 1]} : vector<2x4x4x32xf32> to vector<2x3x3x32xf32>
    %37 = vector.extract_strided_slice %22 {offsets = [0, 1, 0, 0], sizes = [2, 3, 3, 32], strides = [1, 1, 1, 1]} : vector<2x4x4x32xf32> to vector<2x3x3x32xf32>
    %38 = vector.extract_strided_slice %24 {offsets = [0, 1, 0, 0], sizes = [2, 3, 3, 32], strides = [1, 1, 1, 1]} : vector<2x4x4x32xf32> to vector<2x3x3x32xf32>
    %39 = vector.extract_strided_slice %22 {offsets = [0, 1, 1, 0], sizes = [2, 3, 3, 32], strides = [1, 1, 1, 1]} : vector<2x4x4x32xf32> to vector<2x3x3x32xf32>
    %40 = vector.extract_strided_slice %24 {offsets = [0, 1, 1, 0], sizes = [2, 3, 3, 32], strides = [1, 1, 1, 1]} : vector<2x4x4x32xf32> to vector<2x3x3x32xf32>
    %41 = vector.extract_strided_slice %26 {offsets = [0, 1, 0, 0], sizes = [2, 3, 3, 32], strides = [1, 1, 1, 1]} : vector<2x4x4x32xf32> to vector<2x3x3x32xf32>
    %42 = vector.extract_strided_slice %28 {offsets = [0, 1, 0, 0], sizes = [2, 3, 3, 32], strides = [1, 1, 1, 1]} : vector<2x4x4x32xf32> to vector<2x3x3x32xf32>
    %43 = vector.extract_strided_slice %26 {offsets = [0, 1, 1, 0], sizes = [2, 3, 3, 32], strides = [1, 1, 1, 1]} : vector<2x4x4x32xf32> to vector<2x3x3x32xf32>
    %44 = vector.extract_strided_slice %28 {offsets = [0, 1, 1, 0], sizes = [2, 3, 3, 32], strides = [1, 1, 1, 1]} : vector<2x4x4x32xf32> to vector<2x3x3x32xf32>
    %45 = tpu.concatenate %29, %30, %31, %32, %33, %34, %35, %36, %37, %38, %39, %40, %41, %42, %43, %44 in 3 : vector<2x3x3x32xf32>, vector<2x3x3x32xf32>, vector<2x3x3x32xf32>, vector<2x3x3x32xf32>, vector<2x3x3x32xf32>, vector<2x3x3x32xf32>, vector<2x3x3x32xf32>, vector<2x3x3x32xf32>, vector<2x3x3x32xf32>, vector<2x3x3x32xf32>, vector<2x3x3x32xf32>, vector<2x3x3x32xf32>, vector<2x3x3x32xf32>, vector<2x3x3x32xf32>, vector<2x3x3x32xf32>, vector<2x3x3x32xf32> -> vector<2x3x3x512xf32>
    %46 = vector.shape_cast %45 : vector<2x3x3x512xf32> to vector<18x512xf32>
    %47 = arith.truncf %46 : vector<18x512xf32> to vector<18x512xbf16>
    %cst_14 = arith.constant dense<0.000000e+00> : vector<18x64xf32>
    %48 = tpu.matmul %47, %2, %cst_14 {dimension_numbers = #tpu.dot_dimension_numbers<[1], [0], [0], [1], [0, 0, 1, 1], [], []>} : vector<18x512xbf16>, vector<512x64xbf16>, vector<18x64xf32> -> vector<18x64xf32>
    %49 = vector.broadcast %5 : vector<1x64xf32> to vector<18x64xf32>
    %50 = arith.addf %48, %49 : vector<18x64xf32>
    %cst_15 = arith.constant 0.000000e+00 : f32
    %51 = vector.broadcast %cst_15 : f32 to vector<18x64xf32>
    %52 = arith.maximumf %50, %51 : vector<18x64xf32>
    %53 = vector.shape_cast %52 : vector<18x64xf32> to vector<2x9x64xf32>
    %54 = vector.extract_strided_slice %53 {offsets = [0, 0, 0], sizes = [2, 1, 64], strides = [1, 1, 1]} : vector<2x9x64xf32> to vector<2x1x64xf32>
    %55 = vector.shape_cast %54 : vector<2x1x64xf32> to vector<2x64xf32>
    %56 = vector.extract_strided_slice %53 {offsets = [0, 1, 0], sizes = [2, 1, 64], strides = [1, 1, 1]} : vector<2x9x64xf32> to vector<2x1x64xf32>
    %57 = vector.shape_cast %56 : vector<2x1x64xf32> to vector<2x64xf32>
    %58 = vector.extract_strided_slice %53 {offsets = [0, 2, 0], sizes = [2, 1, 64], strides = [1, 1, 1]} : vector<2x9x64xf32> to vector<2x1x64xf32>
    %59 = vector.shape_cast %58 : vector<2x1x64xf32> to vector<2x64xf32>
    %60 = vector.extract_strided_slice %53 {offsets = [0, 3, 0], sizes = [2, 1, 64], strides = [1, 1, 1]} : vector<2x9x64xf32> to vector<2x1x64xf32>
    %61 = vector.shape_cast %60 : vector<2x1x64xf32> to vector<2x64xf32>
    %62 = vector.extract_strided_slice %53 {offsets = [0, 4, 0], sizes = [2, 1, 64], strides = [1, 1, 1]} : vector<2x9x64xf32> to vector<2x1x64xf32>
    %63 = vector.shape_cast %62 : vector<2x1x64xf32> to vector<2x64xf32>
    %64 = vector.extract_strided_slice %53 {offsets = [0, 5, 0], sizes = [2, 1, 64], strides = [1, 1, 1]} : vector<2x9x64xf32> to vector<2x1x64xf32>
    %65 = vector.shape_cast %64 : vector<2x1x64xf32> to vector<2x64xf32>
    %66 = vector.extract_strided_slice %53 {offsets = [0, 6, 0], sizes = [2, 1, 64], strides = [1, 1, 1]} : vector<2x9x64xf32> to vector<2x1x64xf32>
    %67 = vector.shape_cast %66 : vector<2x1x64xf32> to vector<2x64xf32>
    %68 = vector.extract_strided_slice %53 {offsets = [0, 7, 0], sizes = [2, 1, 64], strides = [1, 1, 1]} : vector<2x9x64xf32> to vector<2x1x64xf32>
    %69 = vector.shape_cast %68 : vector<2x1x64xf32> to vector<2x64xf32>
    %70 = vector.extract_strided_slice %53 {offsets = [0, 8, 0], sizes = [2, 1, 64], strides = [1, 1, 1]} : vector<2x9x64xf32> to vector<2x1x64xf32>
    %71 = vector.shape_cast %70 : vector<2x1x64xf32> to vector<2x64xf32>
    %72 = tpu.concatenate %55, %57, %59, %61, %63, %65, %67, %69, %71 in 1 : vector<2x64xf32>, vector<2x64xf32>, vector<2x64xf32>, vector<2x64xf32>, vector<2x64xf32>, vector<2x64xf32>, vector<2x64xf32>, vector<2x64xf32>, vector<2x64xf32> -> vector<2x576xf32>
    %73 = arith.truncf %72 : vector<2x576xf32> to vector<2x576xbf16>
    %cst_16 = arith.constant dense<0.000000e+00> : vector<2x64xf32>
    %74 = tpu.matmul %73, %3, %cst_16 {dimension_numbers = #tpu.dot_dimension_numbers<[1], [0], [0], [1], [0, 0, 1, 1], [], []>} : vector<2x576xbf16>, vector<576x64xbf16>, vector<2x64xf32> -> vector<2x64xf32>
    %75 = vector.broadcast %6 : vector<1x64xf32> to vector<2x64xf32>
    %76 = arith.addf %74, %75 : vector<2x64xf32>
    %cst_17 = arith.constant 0.000000e+00 : f32
    %77 = vector.broadcast %cst_17 : f32 to vector<2x64xf32>
    %78 = arith.maximumf %76, %77 : vector<2x64xf32>
    %79 = arith.truncf %78 : vector<2x64xf32> to vector<2x64xbf16>
    %c0_18 = arith.constant 0 : index
    %c0_19 = arith.constant 0 : index
    %80 = vector.load %arg4[%c0_18, %c0_19] : memref<64x512xbf16, #tpu.memory_space<vmem>>, vector<64x512xbf16>
    %cst_20 = arith.constant dense<0.000000e+00> : vector<2x512xf32>
    %81 = tpu.matmul %79, %80, %cst_20 {dimension_numbers = #tpu.dot_dimension_numbers<[1], [0], [0], [1], [0, 0, 1, 1], [], []>} : vector<2x64xbf16>, vector<64x512xbf16>, vector<2x512xf32> -> vector<2x512xf32>
    %82 = vector.broadcast %7 : vector<1x512xf32> to vector<2x512xf32>
    %83 = arith.addf %81, %82 : vector<2x512xf32>
    %cst_21 = arith.constant 0.000000e+00 : f32
    %84 = vector.broadcast %cst_21 : f32 to vector<2x512xf32>
    %85 = arith.maximumf %83, %84 : vector<2x512xf32>
    %86 = arith.truncf %85 : vector<2x512xf32> to vector<2x512xbf16>
    %c0_22 = arith.constant 0 : index
    %c0_23 = arith.constant 0 : index
    %87 = vector.load %arg5[%c0_22, %c0_23] : memref<512x512xbf16, #tpu.memory_space<vmem>>, vector<512x512xbf16>
    %cst_24 = arith.constant dense<0.000000e+00> : vector<2x512xf32>
    %88 = tpu.matmul %86, %87, %cst_24 {dimension_numbers = #tpu.dot_dimension_numbers<[1], [0], [0], [1], [0, 0, 1, 1], [], []>} : vector<2x512xbf16>, vector<512x512xbf16>, vector<2x512xf32> -> vector<2x512xf32>
    %c0_25 = arith.constant 0 : index
    %c0_26 = arith.constant 0 : index
    %89 = vector.load %arg6[%c0_25, %c0_26] : memref<1x512xf32, #tpu.memory_space<vmem>>, vector<1x512xf32>
    %90 = vector.broadcast %89 : vector<1x512xf32> to vector<2x512xf32>
    %91 = arith.addf %88, %90 : vector<2x512xf32>
    %c0_27 = arith.constant 0 : index
    %c0_28 = arith.constant 0 : index
    %92 = vector.load %arg7[%c0_27, %c0_28] : memref<2x512xf32, #tpu.memory_space<vmem>>, vector<2x512xf32>
    tpu.vector_store %arg7[%c0_27, %c0_28], %91 {strides = array<i32>} : memref<2x512xf32, #tpu.memory_space<vmem>>, vector<2x512xf32>,
    return
  }
  func.func @transform_0(%arg0: i32) -> (i32, i32, i32, i32) {
    %c0_i32 = arith.constant 0 : i32
    %c0_i32_0 = arith.constant 0 : i32
    %c0_i32_1 = arith.constant 0 : i32
    %c0_i32_2 = arith.constant 0 : i32
    %c0_i32_3 = arith.constant 0 : i32
    return %c0_i32, %c0_i32_0, %c0_i32_1, %c0_i32_2 : i32, i32, i32, i32
  }
  func.func @transform_1(%arg0: i32) -> (i32, i32) {
    %c0_i32 = arith.constant 0 : i32
    %c0_i32_0 = arith.constant 0 : i32
    %c0_i32_1 = arith.constant 0 : i32
    return %c0_i32, %c0_i32_0 : i32, i32
  }
  func.func @transform_2(%arg0: i32) -> (i32, i32) {
    %c0_i32 = arith.constant 0 : i32
    %c0_i32_0 = arith.constant 0 : i32
    %c0_i32_1 = arith.constant 0 : i32
    return %c0_i32, %c0_i32_0 : i32, i32
  }
  func.func @transform_3(%arg0: i32) -> (i32, i32) {
    %c0_i32 = arith.constant 0 : i32
    %c0_i32_0 = arith.constant 0 : i32
    %c0_i32_1 = arith.constant 0 : i32
    return %c0_i32, %c0_i32_0 : i32, i32
  }
  func.func @transform_4(%arg0: i32) -> (i32, i32) {
    %c0_i32 = arith.constant 0 : i32
    %c0_i32_0 = arith.constant 0 : i32
    return %c0_i32, %arg0 : i32, i32
  }
  func.func @transform_5(%arg0: i32) -> (i32, i32) {
    %c0_i32 = arith.constant 0 : i32
    %c0_i32_0 = arith.constant 0 : i32
    return %c0_i32, %arg0 : i32, i32
  }
  func.func @transform_6(%arg0: i32) -> (i32, i32) {
    %c0_i32 = arith.constant 0 : i32
    %c0_i32_0 = arith.constant 0 : i32
    return %c0_i32, %arg0 : i32, i32
  }
}

</mosaic_0001>

<llo_original>
// kernel: qrdqn_forward_fused.1
$region0: #{qrdqn_forward_fused.1}
  #allocation0 [shape = 'u32[]', space=smem, size = 0x4, offset = 0x4, fixed_abs, tag = 'smem constant byte address 0x4 - core index']
  #allocation1 [shape = 'u32[144,128]{1,0:T(1,128)}', space=vmem, size = 0x12000, scoped, tag = 'internal scratch']
  %s0 = inlined_call_operand.vmem [shape: f32[2,9,9,64], index: 0, kind: input, shape index: {}]
  %s1 = inlined_call_operand.vmem [shape: bf16[1344,64], index: 1, kind: input, shape index: {}]
  %s2 = inlined_call_operand.vmem [shape: f32[1,896], index: 2, kind: input, shape index: {}]
  %s3 = inlined_call_operand.vmem [shape: bf16[64,512], index: 3, kind: input, shape index: {}]
  %s4 = inlined_call_operand.vmem [shape: bf16[512,1024], index: 4, kind: input, shape index: {}]
  %s5 = inlined_call_operand.vmem [shape: f32[1,1024], index: 5, kind: input, shape index: {}]
  %s6 = inlined_call_operand.vmem [shape: f32[2,1024], index: 6, kind: output, shape index: {}]
  %s7 = sld [smem:[#allocation0]]
  $region80: #{qrdqn_forward_fused.1} parent=0
    _
  %s9 = ssub.s32 1, %s7
  %s10 = scalar_select 0, %s9, %s7
  $region1: #{qrdqn_forward_fused.1} parent=0
    #allocation2 [shape = 'u8[1048576]{0}', space=vmem, size = 0x100000, scoped, tag = 'input window, operand 4']
    loop: start=0, step=1, limit=4
    $region2: #{qrdqn_forward_fused.1} parent=1 // loop_pre_header
      _
    $region3: #{qrdqn_forward_fused.1} parent=1 // loop_header
      %s12 = sphi 0, %s16
      %p13 = scmp.ge.s32.totalorder %s12, 4
      %s20 = sphi 0, %s20
      %s22 = sphi 0, %s20
      %s23 = sphi 0, %s22
      %s37 = sphi 0, %s23
      %s41 = sphi 0, %s41
      %s43 = sphi 0, %s41
      %s44 = sphi 0, %s43
      %s58 = sphi 0, %s44
      %s62 = sphi 0, %s62
      %s64 = sphi 0, %s62
      %s65 = sphi 0, %s64
      %s79 = sphi 0, %s65
      %s83 = sphi 0, %s83
      %s85 = sphi 0, %s83
      %s86 = sphi 0, %s85
      %s100 = sphi 0, %s86
      %s106 = sphi 0, %s108
      %s109 = sphi 0, %s106
      %s110 = sphi 0, %s109
      %s126 = sphi 0, %s110
      %s132 = sphi 0, %s134
      %s135 = sphi 0, %s132
      %s136 = sphi 0, %s135
      %s152 = sphi 0, %s136
      %s158 = sphi 0, %s160
      %s161 = sphi 0, %s158
      %s162 = sphi 0, %s161
      %s178 = sphi 0, %s162
    $region4: #{qrdqn_forward_fused.1} parent=1 // loop_header_branch
      %15 = sbr.rel (%p13) target = $region8
    $region5: #{qrdqn_forward_fused.1} parent=1 // loop_body
      %s17 = ssub.s32 %s12, 1
      %s18 = ssub.s32 %s12, 2
      %s19 = sadd.s32 %s12, 1
      %s21 = sadd.s32 %s20, 1
      %p24 = scmp.eq.s32.totalorder %s12, 1
      %p25 = scmp.ne.s32.totalorder %s20, %s22
      %p26 = scmp.eq.s32.totalorder %s12, 0
      %p27 = por %p25, %p26
      %p28 = scmp.ne.s32.totalorder %s20, %s22
      %p29 = scmp.eq.s32.totalorder %s17, 1
      %p30 = por %p28, %p29
      %p31 = scmp.ne.s32.totalorder %s22, %s23
      %p32 = scmp.eq.s32.totalorder %s17, 0
      %p33 = por %p31, %p32
      %p34 = scmp.ne.s32.totalorder %s22, %s23
      %p35 = scmp.eq.s32.totalorder %s18, 1
      %p36 = por %p34, %p35
      %p38 = scmp.ne.s32.totalorder %s23, %s37
      %p39 = scmp.eq.s32.totalorder %s18, 0
      %p40 = por %p38, %p39
      %s42 = sadd.s32 %s41, 1
      %p45 = scmp.eq.s32.totalorder %s12, 1
      %p46 = scmp.ne.s32.totalorder %s41, %s43
      %p47 = scmp.eq.s32.totalorder %s12, 0
      %p48 = por %p46, %p47
      %p49 = scmp.ne.s32.totalorder %s41, %s43
      %p50 = scmp.eq.s32.totalorder %s17, 1
      %p51 = por %p49, %p50
      %p52 = scmp.ne.s32.totalorder %s43, %s44
      %p53 = scmp.eq.s32.totalorder %s17, 0
      %p54 = por %p52, %p53
      %p55 = scmp.ne.s32.totalorder %s43, %s44
      %p56 = scmp.eq.s32.totalorder %s18, 1
      %p57 = por %p55, %p56
      %p59 = scmp.ne.s32.totalorder %s44, %s58
      %p60 = scmp.eq.s32.totalorder %s18, 0
      %p61 = por %p59, %p60
      %s63 = sadd.s32 %s62, 1
      %p66 = scmp.eq.s32.totalorder %s12, 1
      %p67 = scmp.ne.s32.totalorder %s62, %s64
      %p68 = scmp.eq.s32.totalorder %s12, 0
      %p69 = por %p67, %p68
      %p70 = scmp.ne.s32.totalorder %s62, %s64
      %p71 = scmp.eq.s32.totalorder %s17, 1
      %p72 = por %p70, %p71
      %p73 = scmp.ne.s32.totalorder %s64, %s65
      %p74 = scmp.eq.s32.totalorder %s17, 0
      %p75 = por %p73, %p74
      %p76 = scmp.ne.s32.totalorder %s64, %s65
      %p77 = scmp.eq.s32.totalorder %s18, 1
      %p78 = por %p76, %p77
      %p80 = scmp.ne.s32.totalorder %s65, %s79
      %p81 = scmp.eq.s32.totalorder %s18, 0
      %p82 = por %p80, %p81
      %s84 = sadd.s32 %s83, 1
      %p87 = scmp.eq.s32.totalorder %s12, 1
      %p88 = scmp.ne.s32.totalorder %s83, %s85
      %p89 = scmp.eq.s32.totalorder %s12, 0
      %p90 = por %p88, %p89
      %p91 = scmp.ne.s32.totalorder %s83, %s85
      %p92 = scmp.eq.s32.totalorder %s17, 1
      %p93 = por %p91, %p92
      %p94 = scmp.ne.s32.totalorder %s85, %s86
      %p95 = scmp.eq.s32.totalorder %s17, 0
      %p96 = por %p94, %p95
      %p97 = scmp.ne.s32.totalorder %s85, %s86
      %p98 = scmp.eq.s32.totalorder %s18, 1
      %p99 = por %p97, %p98
      %p101 = scmp.ne.s32.totalorder %s86, %s100
      %p102 = scmp.eq.s32.totalorder %s18, 0
      %p103 = por %p101, %p102
      %s104 = ssub.s32 %s12, %s19
      %p105 = scmp.eq.s32.totalorder %s104, 0
      %s107 = sadd.s32 %s106, 1
      %s108 = scalar_select %p105, %s106, %s107
      %p111 = pneg %p105
      %p112 = scmp.eq.s32.totalorder %s12, 1
      %p113 = por %p111, %p112
      %p114 = scmp.ne.s32.totalorder %s106, %s109
      %p115 = scmp.eq.s32.totalorder %s12, 0
      %p116 = por %p114, %p115
      %p117 = scmp.ne.s32.totalorder %s106, %s109
      %p118 = scmp.eq.s32.totalorder %s17, 1
      %p119 = por %p117, %p118
      %p120 = scmp.ne.s32.totalorder %s109, %s110
      %p121 = scmp.eq.s32.totalorder %s17, 0
      %p122 = por %p120, %p121
      %p123 = scmp.ne.s32.totalorder %s109, %s110
      %p124 = scmp.eq.s32.totalorder %s18, 1
      %p125 = por %p123, %p124
      %p127 = scmp.ne.s32.totalorder %s110, %s126
      %p128 = scmp.eq.s32.totalorder %s18, 0
      %p129 = por %p127, %p128
      %s130 = ssub.s32 %s12, %s19
      %p131 = scmp.eq.s32.totalorder %s130, 0
      %s133 = sadd.s32 %s132, 1
      %s134 = scalar_select %p131, %s132, %s133
      %p137 = pneg %p131
      %p138 = scmp.eq.s32.totalorder %s12, 1
      %p139 = por %p137, %p138
      %p140 = scmp.ne.s32.totalorder %s132, %s135
      %p141 = scmp.eq.s32.totalorder %s12, 0
      %p142 = por %p140, %p141
      %p143 = scmp.ne.s32.totalorder %s132, %s135
      %p144 = scmp.eq.s32.totalorder %s17, 1
      %p145 = por %p143, %p144
      %p146 = scmp.ne.s32.totalorder %s135, %s136
      %p147 = scmp.eq.s32.totalorder %s17, 0
      %p148 = por %p146, %p147
      %p149 = scmp.ne.s32.totalorder %s135, %s136
      %p150 = scmp.eq.s32.totalorder %s18, 1
      %p151 = por %p149, %p150
      %p153 = scmp.ne.s32.totalorder %s136, %s152
      %p154 = scmp.eq.s32.totalorder %s18, 0
      %p155 = por %p153, %p154
      %s156 = ssub.s32 %s12, %s19
      %p157 = scmp.eq.s32.totalorder %s156, 0
      %s159 = sadd.s32 %s158, 1
      %s160 = scalar_select %p157, %s158, %s159
      %p163 = pneg %p157
      %p164 = scmp.eq.s32.totalorder %s12, 1
      %p165 = por %p163, %p164
      %p166 = scmp.ne.s32.totalorder %s158, %s161
      %p167 = scmp.eq.s32.totalorder %s12, 0
      %p168 = por %p166, %p167
      %p169 = scmp.ne.s32.totalorder %s158, %s161
      %p170 = scmp.eq.s32.totalorder %s17, 1
      %p171 = por %p169, %p170
      %p172 = scmp.ne.s32.totalorder %s161, %s162
      %p173 = scmp.eq.s32.totalorder %s17, 0
      %p174 = por %p172, %p173
      %p175 = scmp.ne.s32.totalorder %s161, %s162
      %p176 = scmp.eq.s32.totalorder %s18, 1
      %p177 = por %p175, %p176
      %p179 = scmp.ne.s32.totalorder %s162, %s178
      %p180 = scmp.eq.s32.totalorder %s18, 0
      %p181 = por %p179, %p180
      %p182 = scmp.le.s32.totalorder 1, %s12
      %p183 = scmp.lt.s32.totalorder %s12, 3
      %p184 = pnand %p182, %p183
      %p185 = pneg %p184
      // Predicated region
      $region9: #{qrdqn_forward_fused.1} parent=5 // pred_check
        _
      $region10: #{qrdqn_forward_fused.1} parent=5 // pred_check_branch
        %187 = sbr.rel (%p184) target = $region12
      $region11: #{qrdqn_forward_fused.1} parent=5 // pred_region
        %s188 = ssub.s32 %s12, 1
        // Predicated region
        $region13: #{qrdqn_forward_fused.1} parent=11 // pred_check
          %p189 = pneg %p33
        $region14: #{qrdqn_forward_fused.1} parent=11 // pred_check_branch
          %191 = sbr.rel (%p189) target = $region16
        $region15: #{qrdqn_forward_fused.1} parent=11 // pred_region
          _
        $region16: #{qrdqn_forward_fused.1} parent=11 // pred_fallthru
          _
        // Predicated region
        $region17: #{qrdqn_forward_fused.1} parent=11 // pred_check
          %p192 = pneg %p54
        $region18: #{qrdqn_forward_fused.1} parent=11 // pred_check_branch
          %194 = sbr.rel (%p192) target = $region20
        $region19: #{qrdqn_forward_fused.1} parent=11 // pred_region
          _
        $region20: #{qrdqn_forward_fused.1} parent=11 // pred_fallthru
          _
        // Predicated region
        $region21: #{qrdqn_forward_fused.1} parent=11 // pred_check
          %p195 = pneg %p75
        $region22: #{qrdqn_forward_fused.1} parent=11 // pred_check_branch
          %197 = sbr.rel (%p195) target = $region24
        $region23: #{qrdqn_forward_fused.1} parent=11 // pred_region
          _
        $region24: #{qrdqn_forward_fused.1} parent=11 // pred_fallthru
          _
        // Predicated region
        $region25: #{qrdqn_forward_fused.1} parent=11 // pred_check
          %p198 = pneg %p96
        $region26: #{qrdqn_forward_fused.1} parent=11 // pred_check_branch
          %200 = sbr.rel (%p198) target = $region28
        $region27: #{qrdqn_forward_fused.1} parent=11 // pred_region
          _
        $region28: #{qrdqn_forward_fused.1} parent=11 // pred_fallthru
          _
      $region12: #{qrdqn_forward_fused.1} parent=5 // pred_fallthru
        _
      %p201 = scmp.lt.s32.totalorder %s12, 2
      // Predicated region
      $region29: #{qrdqn_forward_fused.1} parent=5 // pred_check
        %p202 = pneg %p201
      $region30: #{qrdqn_forward_fused.1} parent=5 // pred_check_branch
        %204 = sbr.rel (%p202) target = $region32
      $region31: #{qrdqn_forward_fused.1} parent=5 // pred_region
        // Predicated region
        $region33: #{qrdqn_forward_fused.1} parent=31 // pred_check
          %p205 = pneg %p116
        $region34: #{qrdqn_forward_fused.1} parent=31 // pred_check_branch
          %207 = sbr.rel (%p205) target = $region36
        $region35: #{qrdqn_forward_fused.1} parent=31 // pred_region
          %s208 = sand.u32 %s106, 1
          %s209 = sand.u32 %s106, 1
          %s210 = smul.addr %s209, 1024
          %s211 = scalar_lea.vmem [#allocation2], %s210
          %s212 = smul.u32 4, %s12
          %s213 = smul.addr %s212, 4
          %s214 = scalar_lea.vmem %s4, %s213
          // Predicated region
          $region37: #{qrdqn_forward_fused.1} parent=35 // pred_check
            _
          $region38: #{qrdqn_forward_fused.1} parent=35 // pred_check_branch
            %216 = sbr.rel (0) target = $region40
          $region39: #{qrdqn_forward_fused.1} parent=35 // pred_region
            // Predicated region
            $region41: #{qrdqn_forward_fused.1} parent=39 // pred_check
              _
            $region42: #{qrdqn_forward_fused.1} parent=39 // pred_check_branch
              %218 = sbr.rel (0) target = $region44
            $region43: #{qrdqn_forward_fused.1} parent=39 // pred_region
              loop: start=0, step=1, limit=1
              $region45: #{qrdqn_forward_fused.1} parent=43 // loop_pre_header
                _
              $region46: #{qrdqn_forward_fused.1} parent=43 // loop_header
                %s220 = sphi 0, %s224
                %p221 = scmp.ge.s32.totalorder %s220, 1
                %s225 = sphi %s214, %s214
                %s226 = sphi %s211, %s211
              $region47: #{qrdqn_forward_fused.1} parent=43 // loop_header_branch
                %223 = sbr.rel (%p221) target = $region51
              $region48: #{qrdqn_forward_fused.1} parent=43 // loop_body
                %v227 = vld [vmem:[%s225] sm:$0xff]
                %228 = vst [vmem:[%s226] sm:$0xff] %v227
                %v229 = vld [vmem:[%s225 + $0x8] sm:$0xff]
                %230 = vst [vmem:[%s226 + $0x8] sm:$0xff] %v229
                %v231 = vld [vmem:[%s225 + $0x20] sm:$0xff]
                %232 = vst [vmem:[%s226 + $0x10] sm:$0xff] %v231
                %v233 = vld [vmem:[%s225 + $0x28] sm:$0xff]
                %234 = vst [vmem:[%s226 + $0x18] sm:$0xff] %v233
                %v235 = vld [vmem:[%s225 + $0x40] sm:$0xff]
                %236 = vst [vmem:[%s226 + $0x20] sm:$0xff] %v235
                %v237 = vld [vmem:[%s225 + $0x48] sm:$0xff]
                %238 = vst [vmem:[%s226 + $0x28] sm:$0xff] %v237
                %v239 = vld [vmem:[%s225 + $0x60] sm:$0xff]
                %240 = vst [vmem:[%s226 + $0x30] sm:$0xff] %v239
                %v241 = vld [vmem:[%s225 + $0x68] sm:$0xff]
                %242 = vst [vmem:[%s226 + $0x38] sm:$0xff] %v241
                %v243 = vld [vmem:[%s225 + $0x80] sm:$0xff]
                %244 = vst [vmem:[%s226 + $0x40] sm:$0xff] %v243
                %v245 = vld [vmem:[%s225 + $0x88] sm:$0xff]
                %246 = vst [vmem:[%s226 + $0x48] sm:$0xff] %v245
                %v247 = vld [vmem:[%s225 + $0xa0] sm:$0xff]
                %248 = vst [vmem:[%s226 + $0x50] sm:$0xff] %v247
                %v249 = vld [vmem:[%s225 + $0xa8] sm:$0xff]
                %250 = vst [vmem:[%s226 + $0x58] sm:$0xff] %v249
                %v251 = vld [vmem:[%s225 + $0xc0] sm:$0xff]
                %252 = vst [vmem:[%s226 + $0x60] sm:$0xff] %v251
                %v253 = vld [vmem:[%s225 + $0xc8] sm:$0xff]
                %254 = vst [vmem:[%s226 + $0x68] sm:$0xff] %v253
                %v255 = vld [vmem:[%s225 + $0xe0] sm:$0xff]
                %256 = vst [vmem:[%s226 + $0x70] sm:$0xff] %v255
                %v257 = vld [vmem:[%s225 + $0xe8] sm:$0xff]
                %258 = vst [vmem:[%s226 + $0x78] sm:$0xff] %v257
                %v259 = vld [vmem:[%s225 + $0x100] sm:$0xff]
                %260 = vst [vmem:[%s226 + $0x80] sm:$0xff] %v259
                %v261 = vld [vmem:[%s225 + $0x108] sm:$0xff]
                %262 = vst [vmem:[%s226 + $0x88] sm:$0xff] %v261
                %v263 = vld [vmem:[%s225 + $0x120] sm:$0xff]
                %264 = vst [vmem:[%s226 + $0x90] sm:$0xff] %v263
                %v265 = vld [vmem:[%s225 + $0x128] sm:$0xff]
                %266 = vst [vmem:[%s226 + $0x98] sm:$0xff] %v265
                %v267 = vld [vmem:[%s225 + $0x140] sm:$0xff]
                %268 = vst [vmem:[%s226 + $0xa0] sm:$0xff] %v267
                %v269 = vld [vmem:[%s225 + $0x148] sm:$0xff]
                %270 = vst [vmem:[%s226 + $0xa8] sm:$0xff] %v269
                %v271 = vld [vmem:[%s225 + $0x160] sm:$0xff]
                %272 = vst [vmem:[%s226 + $0xb0] sm:$0xff] %v271
                %v273 = vld [vmem:[%s225 + $0x168] sm:$0xff]
                %274 = vst [vmem:[%s226 + $0xb8] sm:$0xff] %v273
                %v275 = vld [vmem:[%s225 + $0x180] sm:$0xff]
                %276 = vst [vmem:[%s226 + $0xc0] sm:$0xff] %v275
                %v277 = vld [vmem:[%s225 + $0x188] sm:$0xff]
                %278 = vst [vmem:[%s226 + $0xc8] sm:$0xff] %v277
                %v279 = vld [vmem:[%s225 + $0x1a0] sm:$0xff]
                %280 = vst [vmem:[%s226 + $0xd0] sm:$0xff] %v279
                %v281 = vld [vmem:[%s225 + $0x1a8] sm:$0xff]
                %282 = vst [vmem:[%s226 + $0xd8] sm:$0xff] %v281
                %v283 = vld [vmem:[%s225 + $0x1c0] sm:$0xff]
                %284 = vst [vmem:[%s226 + $0xe0] sm:$0xff] %v283
                %v285 = vld [vmem:[%s225 + $0x1c8] sm:$0xff]
                %286 = vst [vmem:[%s226 + $0xe8] sm:$0xff] %v285
                %v287 = vld [vmem:[%s225 + $0x1e0] sm:$0xff]
                %288 = vst [vmem:[%s226 + $0xf0] sm:$0xff] %v287
                %v289 = vld [vmem:[%s225 + $0x1e8] sm:$0xff]
                %290 = vst [vmem:[%s226 + $0xf8] sm:$0xff] %v289
                %v291 = vld [vmem:[%s225 + $0x200] sm:$0xff]
                %292 = vst [vmem:[%s226 + $0x100] sm:$0xff] %v291
                %v293 = vld [vmem:[%s225 + $0x208] sm:$0xff]
                %294 = vst [vmem:[%s226 + $0x108] sm:$0xff] %v293
                %v295 = vld [vmem:[%s225 + $0x220] sm:$0xff]
                %296 = vst [vmem:[%s226 + $0x110] sm:$0xff] %v295
                %v297 = vld [vmem:[%s225 + $0x228] sm:$0xff]
                %298 = vst [vmem:[%s226 + $0x118] sm:$0xff] %v297
                %v299 = vld [vmem:[%s225 + $0x240] sm:$0xff]
                %300 = vst [vmem:[%s226 + $0x120] sm:$0xff] %v299
                %v301 = vld [vmem:[%s225 + $0x248] sm:$0xff]
                %302 = vst [vmem:[%s226 + $0x128] sm:$0xff] %v301
                %v303 = vld [vmem:[%s225 + $0x260] sm:$0xff]
                %304 = vst [vmem:[%s226 + $0x130] sm:$0xff] %v303
                %v305 = vld [vmem:[%s225 + $0x268] sm:$0xff]
                %306 = vst [vmem:[%s226 + $0x138] sm:$0xff] %v305
                %v307 = vld [vmem:[%s225 + $0x280] sm:$0xff]
                %308 = vst [vmem:[%s226 + $0x140] sm:$0xff] %v307
                %v309 = vld [vmem:[%s225 + $0x288] sm:$0xff]
                %310 = vst [vmem:[%s226 + $0x148] sm:$0xff] %v309
                %v311 = vld [vmem:[%s225 + $0x2a0] sm:$0xff]
                %312 = vst [vmem:[%s226 + $0x150] sm:$0xff] %v311
                %v313 = vld [vmem:[%s225 + $0x2a8] sm:$0xff]
                %314 = vst [vmem:[%s226 + $0x158] sm:$0xff] %v313
                %v315 = vld [vmem:[%s225 + $0x2c0] sm:$0xff]
                %316 = vst [vmem:[%s226 + $0x160] sm:$0xff] %v315
                %v317 = vld [vmem:[%s225 + $0x2c8] sm:$0xff]
                %318 = vst [vmem:[%s226 + $0x168] sm:$0xff] %v317
                %v319 = vld [vmem:[%s225 + $0x2e0] sm:$0xff]
                %320 = vst [vmem:[%s226 + $0x170] sm:$0xff] %v319
                %v321 = vld [vmem:[%s225 + $0x2e8] sm:$0xff]
                %322 = vst [vmem:[%s226 + $0x178] sm:$0xff] %v321
                %v323 = vld [vmem:[%s225 + $0x300] sm:$0xff]
                %324 = vst [vmem:[%s226 + $0x180] sm:$0xff] %v323
                %v325 = vld [vmem:[%s225 + $0x308] sm:$0xff]
                %326 = vst [vmem:[%s226 + $0x188] sm:$0xff] %v325
                %v327 = vld [vmem:[%s225 + $0x320] sm:$0xff]
                %328 = vst [vmem:[%s226 + $0x190] sm:$0xff] %v327
                %v329 = vld [vmem:[%s225 + $0x328] sm:$0xff]
                %330 = vst [vmem:[%s226 + $0x198] sm:$0xff] %v329
                %v331 = vld [vmem:[%s225 + $0x340] sm:$0xff]
                %332 = vst [vmem:[%s226 + $0x1a0] sm:$0xff] %v331
                %v333 = vld [vmem:[%s225 + $0x348] sm:$0xff]
                %334 = vst [vmem:[%s226 + $0x1a8] sm:$0xff] %v333
                %v335 = vld [vmem:[%s225 + $0x360] sm:$0xff]
                %336 = vst [vmem:[%s226 + $0x1b0] sm:$0xff] %v335
                %v337 = vld [vmem:[%s225 + $0x368] sm:$0xff]
                %338 = vst [vmem:[%s226 + $0x1b8] sm:$0xff] %v337
                %v339 = vld [vmem:[%s225 + $0x380] sm:$0xff]
                %340 = vst [vmem:[%s226 + $0x1c0] sm:$0xff] %v339
                %v341 = vld [vmem:[%s225 + $0x388] sm:$0xff]
                %342 = vst [vmem:[%s226 + $0x1c8] sm:$0xff] %v341
                %v343 = vld [vmem:[%s225 + $0x3a0] sm:$0xff]
                %344 = vst [vmem:[%s226 + $0x1d0] sm:$0xff] %v343
                %v345 = vld [vmem:[%s225 + $0x3a8] sm:$0xff]
                %346 = vst [vmem:[%s226 + $0x1d8] sm:$0xff] %v345
                %v347 = vld [vmem:[%s225 + $0x3c0] sm:$0xff]
                %348 = vst [vmem:[%s226 + $0x1e0] sm:$0xff] %v347
                %v349 = vld [vmem:[%s225 + $0x3c8] sm:$0xff]
                %350 = vst [vmem:[%s226 + $0x1e8] sm:$0xff] %v349
                %v351 = vld [vmem:[%s225 + $0x3e0] sm:$0xff]
                %352 = vst [vmem:[%s226 + $0x1f0] sm:$0xff] %v351
                %v353 = vld [vmem:[%s225 + $0x3e8] sm:$0xff]
                %354 = vst [vmem:[%s226 + $0x1f8] sm:$0xff] %v353
                %v355 = vld [vmem:[%s225 + $0x400] sm:$0xff]
                %356 = vst [vmem:[%s226 + $0x200] sm:$0xff] %v355
                %v357 = vld [vmem:[%s225 + $0x408] sm:$0xff]
                %358 = vst [vmem:[%s226 + $0x208] sm:$0xff] %v357
                %v359 = vld [vmem:[%s225 + $0x420] sm:$0xff]
                %360 = vst [vmem:[%s226 + $0x210] sm:$0xff] %v359
                %v361 = vld [vmem:[%s225 + $0x428] sm:$0xff]
                %362 = vst [vmem:[%s226 + $0x218] sm:$0xff] %v361
                %v363 = vld [vmem:[%s225 + $0x440] sm:$0xff]
                %364 = vst [vmem:[%s226 + $0x220] sm:$0xff] %v363
                %v365 = vld [vmem:[%s225 + $0x448] sm:$0xff]
                %366 = vst [vmem:[%s226 + $0x228] sm:$0xff] %v365
                %v367 = vld [vmem:[%s225 + $0x460] sm:$0xff]
                %368 = vst [vmem:[%s226 + $0x230] sm:$0xff] %v367
                %v369 = vld [vmem:[%s225 + $0x468] sm:$0xff]
                %370 = vst [vmem:[%s226 + $0x238] sm:$0xff] %v369
                %v371 = vld [vmem:[%s225 + $0x480] sm:$0xff]
                %372 = vst [vmem:[%s226 + $0x240] sm:$0xff] %v371
                %v373 = vld [vmem:[%s225 + $0x488] sm:$0xff]
                %374 = vst [vmem:[%s226 + $0x248] sm:$0xff] %v373
                %v375 = vld [vmem:[%s225 + $0x4a0] sm:$0xff]
                %376 = vst [vmem:[%s226 + $0x250] sm:$0xff] %v375
                %v377 = vld [vmem:[%s225 + $0x4a8] sm:$0xff]
                %378 = vst [vmem:[%s226 + $0x258] sm:$0xff] %v377
                %v379 = vld [vmem:[%s225 + $0x4c0] sm:$0xff]
                %380 = vst [vmem:[%s226 + $0x260] sm:$0xff] %v379
                %v381 = vld [vmem:[%s225 + $0x4c8] sm:$0xff]
                %382 = vst [vmem:[%s226 + $0x268] sm:$0xff] %v381
                %v383 = vld [vmem:[%s225 + $0x4e0] sm:$0xff]
                %384 = vst [vmem:[%s226 + $0x270] sm:$0xff] %v383
                %v385 = vld [vmem:[%s225 + $0x4e8] sm:$0xff]
                %386 = vst [vmem:[%s226 + $0x278] sm:$0xff] %v385
                %v387 = vld [vmem:[%s225 + $0x500] sm:$0xff]
                %388 = vst [vmem:[%s226 + $0x280] sm:$0xff] %v387
                %v389 = vld [vmem:[%s225 + $0x508] sm:$0xff]
                %390 = vst [vmem:[%s226 + $0x288] sm:$0xff] %v389
                %v391 = vld [vmem:[%s225 + $0x520] sm:$0xff]
                %392 = vst [vmem:[%s226 + $0x290] sm:$0xff] %v391
                %v393 = vld [vmem:[%s225 + $0x528] sm:$0xff]
                %394 = vst [vmem:[%s226 + $0x298] sm:$0xff] %v393
                %v395 = vld [vmem:[%s225 + $0x540] sm:$0xff]
                %396 = vst [vmem:[%s226 + $0x2a0] sm:$0xff] %v395
                %v397 = vld [vmem:[%s225 + $0x548] sm:$0xff]
                %398 = vst [vmem:[%s226 + $0x2a8] sm:$0xff] %v397
                %v399 = vld [vmem:[%s225 + $0x560] sm:$0xff]
                %400 = vst [vmem:[%s226 + $0x2b0] sm:$0xff] %v399
                %v401 = vld [vmem:[%s225 + $0x568] sm:$0xff]
                %402 = vst [vmem:[%s226 + $0x2b8] sm:$0xff] %v401
                %v403 = vld [vmem:[%s225 + $0x580] sm:$0xff]
                %404 = vst [vmem:[%s226 + $0x2c0] sm:$0xff] %v403
                %v405 = vld [vmem:[%s225 + $0x588] sm:$0xff]
                %406 = vst [vmem:[%s226 + $0x2c8] sm:$0xff] %v405
                %v407 = vld [vmem:[%s225 + $0x5a0] sm:$0xff]
                %408 = vst [vmem:[%s226 + $0x2d0] sm:$0xff] %v407
                %v409 = vld [vmem:[%s225 + $0x5a8] sm:$0xff]
                %410 = vst [vmem:[%s226 + $0x2d8] sm:$0xff] %v409
                %v411 = vld [vmem:[%s225 + $0x5c0] sm:$0xff]
                %412 = vst [vmem:[%s226 + $0x2e0] sm:$0xff] %v411
                %v413 = vld [vmem:[%s225 + $0x5c8] sm:$0xff]
                %414 = vst [vmem:[%s226 + $0x2e8] sm:$0xff] %v413
                %v415 = vld [vmem:[%s225 + $0x5e0] sm:$0xff]
                %416 = vst [vmem:[%s226 + $0x2f0] sm:$0xff] %v415
                %v417 = vld [vmem:[%s225 + $0x5e8] sm:$0xff]
                %418 = vst [vmem:[%s226 + $0x2f8] sm:$0xff] %v417
                %v419 = vld [vmem:[%s225 + $0x600] sm:$0xff]
                %420 = vst [vmem:[%s226 + $0x300] sm:$0xff] %v419
                %v421 = vld [vmem:[%s225 + $0x608] sm:$0xff]
                %422 = vst [vmem:[%s226 + $0x308] sm:$0xff] %v421
                %v423 = vld [vmem:[%s225 + $0x620] sm:$0xff]
                %424 = vst [vmem:[%s226 + $0x310] sm:$0xff] %v423
                %v425 = vld [vmem:[%s225 + $0x628] sm:$0xff]
                %426 = vst [vmem:[%s226 + $0x318] sm:$0xff] %v425
                %v427 = vld [vmem:[%s225 + $0x640] sm:$0xff]
                %428 = vst [vmem:[%s226 + $0x320] sm:$0xff] %v427
                %v429 = vld [vmem:[%s225 + $0x648] sm:$0xff]
                %430 = vst [vmem:[%s226 + $0x328] sm:$0xff] %v429
                %v431 = vld [vmem:[%s225 + $0x660] sm:$0xff]
                %432 = vst [vmem:[%s226 + $0x330] sm:$0xff] %v431
                %v433 = vld [vmem:[%s225 + $0x668] sm:$0xff]
                %434 = vst [vmem:[%s226 + $0x338] sm:$0xff] %v433
                %v435 = vld [vmem:[%s225 + $0x680] sm:$0xff]
                %436 = vst [vmem:[%s226 + $0x340] sm:$0xff] %v435
                %v437 = vld [vmem:[%s225 + $0x688] sm:$0xff]
                %438 = vst [vmem:[%s226 + $0x348] sm:$0xff] %v437
                %v439 = vld [vmem:[%s225 + $0x6a0] sm:$0xff]
                %440 = vst [vmem:[%s226 + $0x350] sm:$0xff] %v439
                %v441 = vld [vmem:[%s225 + $0x6a8] sm:$0xff]
                %442 = vst [vmem:[%s226 + $0x358] sm:$0xff] %v441
                %v443 = vld [vmem:[%s225 + $0x6c0] sm:$0xff]
                %444 = vst [vmem:[%s226 + $0x360] sm:$0xff] %v443
                %v445 = vld [vmem:[%s225 + $0x6c8] sm:$0xff]
                %446 = vst [vmem:[%s226 + $0x368] sm:$0xff] %v445
                %v447 = vld [vmem:[%s225 + $0x6e0] sm:$0xff]
                %448 = vst [vmem:[%s226 + $0x370] sm:$0xff] %v447
                %v449 = vld [vmem:[%s225 + $0x6e8] sm:$0xff]
                %450 = vst [vmem:[%s226 + $0x378] sm:$0xff] %v449
                %v451 = vld [vmem:[%s225 + $0x700] sm:$0xff]
                %452 = vst [vmem:[%s226 + $0x380] sm:$0xff] %v451
                %v453 = vld [vmem:[%s225 + $0x708] sm:$0xff]
                %454 = vst [vmem:[%s226 + $0x388] sm:$0xff] %v453
                %v455 = vld [vmem:[%s225 + $0x720] sm:$0xff]
                %456 = vst [vmem:[%s226 + $0x390] sm:$0xff] %v455
                %v457 = vld [vmem:[%s225 + $0x728] sm:$0xff]
                %458 = vst [vmem:[%s226 + $0x398] sm:$0xff] %v457
                %v459 = vld [vmem:[%s225 + $0x740] sm:$0xff]
                %460 = vst [vmem:[%s226 + $0x3a0] sm:$0xff] %v459
                %v461 = vld [vmem:[%s225 + $0x748] sm:$0xff]
                %462 = vst [vmem:[%s226 + $0x3a8] sm:$0xff] %v461
                %v463 = vld [vmem:[%s225 + $0x760] sm:$0xff]
                %464 = vst [vmem:[%s226 + $0x3b0] sm:$0xff] %v463
                %v465 = vld [vmem:[%s225 + $0x768] sm:$0xff]
                %466 = vst [vmem:[%s226 + $0x3b8] sm:$0xff] %v465
                %v467 = vld [vmem:[%s225 + $0x780] sm:$0xff]
                %468 = vst [vmem:[%s226 + $0x3c0] sm:$0xff] %v467
                %v469 = vld [vmem:[%s225 + $0x788] sm:$0xff]
                %470 = vst [vmem:[%s226 + $0x3c8] sm:$0xff] %v469
                %v471 = vld [vmem:[%s225 + $0x7a0] sm:$0xff]
                %472 = vst [vmem:[%s226 + $0x3d0] sm:$0xff] %v471
                %v473 = vld [vmem:[%s225 + $0x7a8] sm:$0xff]
                %474 = vst [vmem:[%s226 + $0x3d8] sm:$0xff] %v473
                %v475 = vld [vmem:[%s225 + $0x7c0] sm:$0xff]
                %476 = vst [vmem:[%s226 + $0x3e0] sm:$0xff] %v475
                %v477 = vld [vmem:[%s225 + $0x7c8] sm:$0xff]
                %478 = vst [vmem:[%s226 + $0x3e8] sm:$0xff] %v477
                %v479 = vld [vmem:[%s225 + $0x7e0] sm:$0xff]
                %480 = vst [vmem:[%s226 + $0x3f0] sm:$0xff] %v479
                %v481 = vld [vmem:[%s225 + $0x7e8] sm:$0xff]
                %482 = vst [vmem:[%s226 + $0x3f8] sm:$0xff] %v481
              $region49: #{qrdqn_forward_fused.1} parent=43 // loop_footer
                %s224 = sadd.s32 1, %s220
              $region50: #{qrdqn_forward_fused.1} parent=43 // loop_footer_branch
                %219 = sbr.rel target = $region46
              $region51: #{qrdqn_forward_fused.1} parent=43 // loop_exit
                _
            $region44: #{qrdqn_forward_fused.1} parent=39 // pred_fallthru
              _
            // Predicated region
            $region52: #{qrdqn_forward_fused.1} parent=39 // pred_check
              _
            $region53: #{qrdqn_forward_fused.1} parent=39 // pred_check_branch
              %484 = sbr.rel target = $region55
            $region54: #{qrdqn_forward_fused.1} parent=39 // pred_region
              _
            $region55: #{qrdqn_forward_fused.1} parent=39 // pred_fallthru
              _
          $region40: #{qrdqn_forward_fused.1} parent=35 // pred_fallthru
            _
          %485 = vnop
        $region36: #{qrdqn_forward_fused.1} parent=31 // pred_fallthru
          _
        // Predicated region
        $region56: #{qrdqn_forward_fused.1} parent=31 // pred_check
          %p486 = pneg %p142
        $region57: #{qrdqn_forward_fused.1} parent=31 // pred_check_branch
          %488 = sbr.rel (%p486) target = $region59
        $region58: #{qrdqn_forward_fused.1} parent=31 // pred_region
          %s489 = smul.u32 4, %s12
          %p490 = scmp.lt.s32.totalorder %s489, 7
          %s491 = scalar_select %p490, %s489, 7
          %s492 = scalar_lea.vmem %s5, %s491
          %s493 = smul.u32 4, %s12
        $region59: #{qrdqn_forward_fused.1} parent=31 // pred_fallthru
          _
      $region32: #{qrdqn_forward_fused.1} parent=5 // pred_fallthru
        _
      %p494 = scmp.le.s32.totalorder 1, %s12
      %p495 = scmp.lt.s32.totalorder %s12, 3
      %p496 = pnand %p494, %p495
      %p497 = pneg %p496
      // Predicated region
      $region60: #{qrdqn_forward_fused.1} parent=5 // pred_check
        _
      $region61: #{qrdqn_forward_fused.1} parent=5 // pred_check_branch
        %499 = sbr.rel (%p496) target = $region63
      $region62: #{qrdqn_forward_fused.1} parent=5 // pred_region
        %s500 = ssub.s32 %s12, 1
        %s501 = sand.u32 %s109, 1
        %s502 = sand.u32 %s109, 1
        %s503 = smul.addr %s502, 1024
        %s504 = scalar_lea.vmem [#allocation2], %s503
        // Predicated region
        $region64: #{qrdqn_forward_fused.1} parent=62 // pred_check
          %p505 = pneg %p122
        $region65: #{qrdqn_forward_fused.1} parent=62 // pred_check_branch
          %507 = sbr.rel (%p505) target = $region67
        $region66: #{qrdqn_forward_fused.1} parent=62 // pred_region
          _
        $region67: #{qrdqn_forward_fused.1} parent=62 // pred_fallthru
          _
        %p508 = pneg %p33
        %p509 = pneg %p30
        %p510 = pneg %p54
        %p511 = pneg %p51
        %p512 = pneg %p75
        %p513 = pneg %p72
        %p514 = pneg %p96
        %p515 = pneg %p93
        %s516 = sand.u32 %s109, 1
        %s517 = sand.u32 %s109, 1
        %s518 = smul.addr %s517, 1024
        %s519 = scalar_lea.vmem [#allocation2], %s518
        %p520 = pneg %p122
        %p521 = pneg %p119
        %s522 = smul.u32 4, %s17
        %p523 = scmp.lt.s32.totalorder %s522, 7
        %s524 = scalar_select %p523, %s522, 7
        %s525 = scalar_lea.vmem %s5, %s524
        %p526 = pneg %p148
        %p527 = pneg %p145
        %p528 = pneg %p174
        %p529 = pneg %p171
        %s530 = smul.u32 4, %s17
        %p531 = scmp.lt.s32.totalorder %s530, 7
        %s532 = scalar_select %p531, %s530, 7
        %s533 = smul.addr %s532, 2
        %s534 = scalar_lea.vmem %s6, %s533
        %s535 = smul.u32 4, %s17
        %s536 = smul.u32 4, %s17
        %p537 = scmp.lt.s32.totalorder %s536, 7
        %s538 = scalar_select %p537, %s536, 7
        %s539 = scalar_lea.vmem %s5, %s538
        %s540 = smul.u32 4, %s17
        %s541 = smul.u32 4, %s17
        %p542 = scmp.lt.s32.totalorder %s541, 7
        %s543 = scalar_select %p542, %s541, 7
        %s544 = smul.addr %s543, 2
        %s545 = scalar_lea.vmem %s6, %s544
        %s546 = smul.u32 4, %s17
        %v548 = vld [vmem:[%s0] sm:$0xff]
        %v549 = vld [vmem:[%s0 + $0x8] sm:$0x1]
        %v550 = vld [vmem:[%s0 + $0x10] sm:$0xff]
        %v551 = vld [vmem:[%s0 + $0x18] sm:$0x1]
        %v552 = vld [vmem:[%s0 + $0x20] sm:$0xff]
        %v553 = vld [vmem:[%s0 + $0x28] sm:$0x1]
        %v554 = vld [vmem:[%s0 + $0x30] sm:$0xff]
        %v555 = vld [vmem:[%s0 + $0x38] sm:$0x1]
        %v556 = vld [vmem:[%s0 + $0x40] sm:$0xff]
        %v557 = vld [vmem:[%s0 + $0x48] sm:$0x1]
        %v558 = vld [vmem:[%s0 + $0x50] sm:$0xff]
        %v559 = vld [vmem:[%s0 + $0x58] sm:$0x1]
        %v560 = vld [vmem:[%s0 + $0x60] sm:$0xff]
        %v561 = vld [vmem:[%s0 + $0x68] sm:$0x1]
        %v562 = vld [vmem:[%s0 + $0x70] sm:$0xff]
        %v563 = vld [vmem:[%s0 + $0x78] sm:$0x1]
        %v564 = vld [vmem:[%s0 + $0x80] sm:$0xff]
        %v565 = vld [vmem:[%s0 + $0x88] sm:$0x1]
        %v566 = vld [vmem:[%s0 + $0x90] sm:$0xff]
        %v567 = vld [vmem:[%s0 + $0x98] sm:$0x1]
        %v568 = vld [vmem:[%s0 + $0xa0] sm:$0xff]
        %v569 = vld [vmem:[%s0 + $0xa8] sm:$0x1]
        %v570 = vld [vmem:[%s0 + $0xb0] sm:$0xff]
        %v571 = vld [vmem:[%s0 + $0xb8] sm:$0x1]
        %v572 = vld [vmem:[%s0 + $0xc0] sm:$0xff]
        %v573 = vld [vmem:[%s0 + $0xc8] sm:$0x1]
        %v574 = vld [vmem:[%s0 + $0xd0] sm:$0xff]
        %v575 = vld [vmem:[%s0 + $0xd8] sm:$0x1]
        %v576 = vld [vmem:[%s0 + $0xe0] sm:$0xff]
        %v577 = vld [vmem:[%s0 + $0xe8] sm:$0x1]
        %v578 = vld [vmem:[%s0 + $0xf0] sm:$0xff]
        %v579 = vld [vmem:[%s0 + $0xf8] sm:$0x1]
        %v580 = vld [vmem:[%s0 + $0x100] sm:$0xff]
        %v581 = vld [vmem:[%s0 + $0x108] sm:$0x1]
        %v582 = vld [vmem:[%s0 + $0x110] sm:$0xff]
        %v583 = vld [vmem:[%s0 + $0x118] sm:$0x1]
        %v584 = vld [vmem:[%s1] sm:$0xf]
        %v585 = vld [vmem:[%s1 + $0x4] sm:$0xf]
        %v586 = vld [vmem:[%s1 + $0x8] sm:$0xf]
        %v587 = vld [vmem:[%s1 + $0xc] sm:$0xf]
        %v588 = vld [vmem:[%s1 + $0x10] sm:$0xf]
        %v589 = vld [vmem:[%s1 + $0x14] sm:$0xf]
        %v590 = vld [vmem:[%s1 + $0x18] sm:$0xf]
        %v591 = vld [vmem:[%s1 + $0x1c] sm:$0xf]
        %v592 = vld [vmem:[%s1 + $0x20] sm:$0xf]
        %v593 = vld [vmem:[%s1 + $0x24] sm:$0xf]
        %v594 = vld [vmem:[%s1 + $0x28] sm:$0xf]
        %v595 = vld [vmem:[%s1 + $0x2c] sm:$0xf]
        %v596 = vld [vmem:[%s1 + $0x30] sm:$0xf]
        %v597 = vld [vmem:[%s1 + $0x34] sm:$0xf]
        %v598 = vld [vmem:[%s1 + $0x38] sm:$0xf]
        %v599 = vld [vmem:[%s1 + $0x3c] sm:$0xf]
        %v600 = vld [vmem:[%s1 + $0x40] sm:$0xf]
        %v601 = vld [vmem:[%s1 + $0x44] sm:$0xf]
        %v602 = vld [vmem:[%s1 + $0x48] sm:$0xf]
        %v603 = vld [vmem:[%s1 + $0x4c] sm:$0xf]
        %v604 = vld [vmem:[%s1 + $0x50] sm:$0xf]
        %v605 = vld [vmem:[%s1 + $0x54] sm:$0xf]
        %v606 = vld [vmem:[%s1 + $0x58] sm:$0xf]
        %v607 = vld [vmem:[%s1 + $0x5c] sm:$0xf]
        %v608 = vld [vmem:[%s1 + $0x60] sm:$0xf]
        %v609 = vld [vmem:[%s1 + $0x64] sm:$0xf]
        %v610 = vld [vmem:[%s1 + $0x68] sm:$0xf]
        %v611 = vld [vmem:[%s1 + $0x6c] sm:$0xf]
        %v612 = vld [vmem:[%s1 + $0x70] sm:$0xf]
        %v613 = vld [vmem:[%s1 + $0x74] sm:$0xf]
        %v614 = vld [vmem:[%s1 + $0x78] sm:$0xf]
        %v615 = vld [vmem:[%s1 + $0x7c] sm:$0xf]
        %v616 = vld [vmem:[%s1 + $0x80] sm:$0xf]
        %v617 = vld [vmem:[%s1 + $0x84] sm:$0xf]
        %v618 = vld [vmem:[%s1 + $0x88] sm:$0xf]
        %v619 = vld [vmem:[%s1 + $0x8c] sm:$0xf]
        %v620 = vld [vmem:[%s1 + $0x90] sm:$0xf]
        %v621 = vld [vmem:[%s1 + $0x94] sm:$0xf]
        %v622 = vld [vmem:[%s1 + $0x98] sm:$0xf]
        %v623 = vld [vmem:[%s1 + $0x9c] sm:$0xf]
        %v624 = vld [vmem:[%s1 + $0xa0] sm:$0xf]
        %v625 = vld [vmem:[%s1 + $0xa4] sm:$0xf]
        %v626 = vld [vmem:[%s1 + $0xa8] sm:$0xf]
        %v627 = vld [vmem:[%s1 + $0xac] sm:$0xf]
        %v628 = vld [vmem:[%s1 + $0xb0] sm:$0xf]
        %v629 = vld [vmem:[%s1 + $0xb4] sm:$0xf]
        %v630 = vld [vmem:[%s1 + $0xb8] sm:$0xf]
        %v631 = vld [vmem:[%s1 + $0xbc] sm:$0xf]
        %v632 = vld [vmem:[%s1 + $0xc0] sm:$0xf]
        %v633 = vld [vmem:[%s1 + $0xc4] sm:$0xf]
        %v634 = vld [vmem:[%s1 + $0xc8] sm:$0xf]
        %v635 = vld [vmem:[%s1 + $0xcc] sm:$0xf]
        %v636 = vld [vmem:[%s1 + $0xd0] sm:$0xf]
        %v637 = vld [vmem:[%s1 + $0xd4] sm:$0xf]
        %v638 = vld [vmem:[%s1 + $0xd8] sm:$0xf]
        %v639 = vld [vmem:[%s1 + $0xdc] sm:$0xf]
        %v640 = vld [vmem:[%s1 + $0xe0] sm:$0xf]
        %v641 = vld [vmem:[%s1 + $0xe4] sm:$0xf]
        %v642 = vld [vmem:[%s1 + $0xe8] sm:$0xf]
        %v643 = vld [vmem:[%s1 + $0xec] sm:$0xf]
        %v644 = vld [vmem:[%s1 + $0xf0] sm:$0xf]
        %v645 = vld [vmem:[%s1 + $0xf4] sm:$0xf]
        %v646 = vld [vmem:[%s1 + $0xf8] sm:$0xf]
        %v647 = vld [vmem:[%s1 + $0xfc] sm:$0xf]
        %v648 = vld [vmem:[%s1 + $0x100] sm:$0xf]
        %v649 = vld [vmem:[%s1 + $0x104] sm:$0xf]
        %v650 = vld [vmem:[%s1 + $0x108] sm:$0xf]
        %v651 = vld [vmem:[%s1 + $0x10c] sm:$0xf]
        %v652 = vld [vmem:[%s1 + $0x110] sm:$0xf]
        %v653 = vld [vmem:[%s1 + $0x114] sm:$0xf]
        %v654 = vld [vmem:[%s1 + $0x118] sm:$0xf]
        %v655 = vld [vmem:[%s1 + $0x11c] sm:$0xf]
        %v656 = vld [vmem:[%s1 + $0x120] sm:$0xf]
        %v657 = vld [vmem:[%s1 + $0x124] sm:$0xf]
        %v658 = vld [vmem:[%s1 + $0x128] sm:$0xf]
        %v659 = vld [vmem:[%s1 + $0x12c] sm:$0xf]
        %v660 = vld [vmem:[%s1 + $0x130] sm:$0xf]
        %v661 = vld [vmem:[%s1 + $0x134] sm:$0xf]
        %v662 = vld [vmem:[%s1 + $0x138] sm:$0xf]
        %v663 = vld [vmem:[%s1 + $0x13c] sm:$0xf]
        %v664 = vld [vmem:[%s1 + $0x140] sm:$0xf]
        %v665 = vld [vmem:[%s1 + $0x144] sm:$0xf]
        %v666 = vld [vmem:[%s1 + $0x148] sm:$0xf]
        %v667 = vld [vmem:[%s1 + $0x14c] sm:$0xf]
        %v668 = vld [vmem:[%s1 + $0x150] sm:$0xf]
        %v669 = vld [vmem:[%s1 + $0x154] sm:$0xf]
        %v670 = vld [vmem:[%s1 + $0x158] sm:$0xf]
        %v671 = vld [vmem:[%s1 + $0x15c] sm:$0xf]
        %v672 = vld [vmem:[%s1 + $0x160] sm:$0xf]
        %v673 = vld [vmem:[%s1 + $0x164] sm:$0xf]
        %v674 = vld [vmem:[%s1 + $0x168] sm:$0xf]
        %v675 = vld [vmem:[%s1 + $0x16c] sm:$0xf]
        %v676 = vld [vmem:[%s1 + $0x170] sm:$0xf]
        %v677 = vld [vmem:[%s1 + $0x174] sm:$0xf]
        %v678 = vld [vmem:[%s1 + $0x178] sm:$0xf]
        %v679 = vld [vmem:[%s1 + $0x17c] sm:$0xf]
        %v680 = vld [vmem:[%s1 + $0x180] sm:$0xf]
        %v681 = vld [vmem:[%s1 + $0x184] sm:$0xf]
        %v682 = vld [vmem:[%s1 + $0x188] sm:$0xf]
        %v683 = vld [vmem:[%s1 + $0x18c] sm:$0xf]
        %v684 = vld [vmem:[%s1 + $0x190] sm:$0xf]
        %v685 = vld [vmem:[%s1 + $0x194] sm:$0xf]
        %v686 = vld [vmem:[%s1 + $0x198] sm:$0xf]
        %v687 = vld [vmem:[%s1 + $0x19c] sm:$0xf]
        %v688 = vld [vmem:[%s1 + $0x1a0] sm:$0xf]
        %v689 = vld [vmem:[%s1 + $0x1a4] sm:$0xf]
        %v690 = vld [vmem:[%s1 + $0x1a8] sm:$0xf]
        %v691 = vld [vmem:[%s1 + $0x1ac] sm:$0xf]
        %v692 = vld [vmem:[%s1 + $0x1b0] sm:$0xf]
        %v693 = vld [vmem:[%s1 + $0x1b4] sm:$0xf]
        %v694 = vld [vmem:[%s1 + $0x1b8] sm:$0xf]
        %v695 = vld [vmem:[%s1 + $0x1bc] sm:$0xf]
        %v696 = vld [vmem:[%s1 + $0x1c0] sm:$0xf]
        %v697 = vld [vmem:[%s1 + $0x1c4] sm:$0xf]
        %v698 = vld [vmem:[%s1 + $0x1c8] sm:$0xf]
        %v699 = vld [vmem:[%s1 + $0x1cc] sm:$0xf]
        %v700 = vld [vmem:[%s1 + $0x1d0] sm:$0xf]
        %v701 = vld [vmem:[%s1 + $0x1d4] sm:$0xf]
        %v702 = vld [vmem:[%s1 + $0x1d8] sm:$0xf]
        %v703 = vld [vmem:[%s1 + $0x1dc] sm:$0xf]
        %v704 = vld [vmem:[%s1 + $0x1e0] sm:$0xf]
        %v705 = vld [vmem:[%s1 + $0x1e4] sm:$0xf]
        %v706 = vld [vmem:[%s1 + $0x1e8] sm:$0xf]
        %v707 = vld [vmem:[%s1 + $0x1ec] sm:$0xf]
        %v708 = vld [vmem:[%s1 + $0x1f0] sm:$0xf]
        %v709 = vld [vmem:[%s1 + $0x1f4] sm:$0xf]
        %v710 = vld [vmem:[%s1 + $0x1f8] sm:$0xf]
        %v711 = vld [vmem:[%s1 + $0x1fc] sm:$0xf]
        %v712 = vld [vmem:[%s1 + $0x200] sm:$0xf]
        %v713 = vld [vmem:[%s1 + $0x204] sm:$0xf]
        %v714 = vld [vmem:[%s1 + $0x208] sm:$0xf]
        %v715 = vld [vmem:[%s1 + $0x20c] sm:$0xf]
        %v716 = vld [vmem:[%s1 + $0x210] sm:$0xf]
        %v717 = vld [vmem:[%s1 + $0x214] sm:$0xf]
        %v718 = vld [vmem:[%s1 + $0x218] sm:$0xf]
        %v719 = vld [vmem:[%s1 + $0x21c] sm:$0xf]
        %v720 = vld [vmem:[%s1 + $0x220] sm:$0xf]
        %v721 = vld [vmem:[%s1 + $0x224] sm:$0xf]
        %v722 = vld [vmem:[%s1 + $0x228] sm:$0xf]
        %v723 = vld [vmem:[%s1 + $0x22c] sm:$0xf]
        %v724 = vld [vmem:[%s1 + $0x230] sm:$0xf]
        %v725 = vld [vmem:[%s1 + $0x234] sm:$0xf]
        %v726 = vld [vmem:[%s1 + $0x238] sm:$0xf]
        %v727 = vld [vmem:[%s1 + $0x23c] sm:$0xf]
        %v728 = vld [vmem:[%s1 + $0x240] sm:$0xf]
        %v729 = vld [vmem:[%s1 + $0x244] sm:$0xf]
        %v730 = vld [vmem:[%s1 + $0x248] sm:$0xf]
        %v731 = vld [vmem:[%s1 + $0x24c] sm:$0xf]
        %v732 = vld [vmem:[%s1 + $0x250] sm:$0xf]
        %v733 = vld [vmem:[%s1 + $0x254] sm:$0xf]
        %v734 = vld [vmem:[%s1 + $0x258] sm:$0xf]
        %v735 = vld [vmem:[%s1 + $0x25c] sm:$0xf]
        %v736 = vld [vmem:[%s1 + $0x260] sm:$0xf]
        %v737 = vld [vmem:[%s1 + $0x264] sm:$0xf]
        %v738 = vld [vmem:[%s1 + $0x268] sm:$0xf]
        %v739 = vld [vmem:[%s1 + $0x26c] sm:$0xf]
        %v740 = vld [vmem:[%s1 + $0x270] sm:$0xf]
        %v741 = vld [vmem:[%s1 + $0x274] sm:$0xf]
        %v742 = vld [vmem:[%s1 + $0x278] sm:$0xf]
        %v743 = vld [vmem:[%s1 + $0x27c] sm:$0xf]
        %v744 = vld [vmem:[%s1 + $0x280] sm:$0xf]
        %v745 = vld [vmem:[%s1 + $0x284] sm:$0xf]
        %v746 = vld [vmem:[%s1 + $0x288] sm:$0xf]
        %v747 = vld [vmem:[%s1 + $0x28c] sm:$0xf]
        %v748 = vld [vmem:[%s1 + $0x290] sm:$0xf]
        %v749 = vld [vmem:[%s1 + $0x294] sm:$0xf]
        %v750 = vld [vmem:[%s1 + $0x298] sm:$0xf]
        %v751 = vld [vmem:[%s1 + $0x29c] sm:$0xf]
        %v752 = vld [vmem:[%s2] sm:$0x1]
        %v753 = vld [vmem:[%s2 + $0x1] sm:$0x1]
        %v754 = vld [vmem:[%s2 + $0x2] sm:$0x1]
        %v755 = vld [vmem:[%s2 + $0x3] sm:$0xf]
        %vm788 = vcmask 1046528
        %v789 = vrot.slane %v548, 1
        %v790 = vrot.slane %v549, 1
        %v791 = vsel %vm788, %v789, %v790
        %v792 = vrot.slane %v550, 1
        %v793 = vrot.slane %v551, 1
        %v794 = vsel %vm788, %v792, %v793
        %v795 = vrot.slane %v552, 1
        %v796 = vrot.slane %v553, 1
        %v797 = vsel %vm788, %v795, %v796
        %v798 = vrot.slane %v554, 1
        %v799 = vrot.slane %v555, 1
        %v800 = vsel %vm788, %v798, %v799
        %v801 = vrot.slane %v556, 1
        %v802 = vrot.slane %v557, 1
        %v803 = vsel %vm788, %v801, %v802
        %v804 = vrot.slane %v558, 1
        %v805 = vrot.slane %v559, 1
        %v806 = vsel %vm788, %v804, %v805
        %v807 = vrot.slane %v560, 1
        %v808 = vrot.slane %v561, 1
        %v809 = vsel %vm788, %v807, %v808
        %v810 = vrot.slane %v562, 1
        %v811 = vrot.slane %v563, 1
        %v812 = vsel %vm788, %v810, %v811
        %v813 = vrot.slane %v566, 1
        %v814 = vrot.slane %v567, 1
        %v815 = vsel %vm788, %v813, %v814
        %v816 = vrot.slane %v568, 1
        %v817 = vrot.slane %v569, 1
        %v818 = vsel %vm788, %v816, %v817
        %v819 = vrot.slane %v570, 1
        %v820 = vrot.slane %v571, 1
        %v821 = vsel %vm788, %v819, %v820
        %v822 = vrot.slane %v572, 1
        %v823 = vrot.slane %v573, 1
        %v824 = vsel %vm788, %v822, %v823
        %v825 = vrot.slane %v574, 1
        %v826 = vrot.slane %v575, 1
        %v827 = vsel %vm788, %v825, %v826
        %v828 = vrot.slane %v576, 1
        %v829 = vrot.slane %v577, 1
        %v830 = vsel %vm788, %v828, %v829
        %v831 = vrot.slane %v578, 1
        %v832 = vrot.slane %v579, 1
        %v833 = vsel %vm788, %v831, %v832
        %v834 = vrot.slane %v580, 1
        %v835 = vrot.slane %v581, 1
        %v836 = vsel %vm788, %v834, %v835
        %837 = vrot.lane.b32.xlu0 %v791, 64
        %v838 = vpop.permute.xlu0 %837
        %839 = vrot.lane.b32.xlu0 %v794, 64
        %v840 = vpop.permute.xlu0 %839
        %841 = vrot.lane.b32.xlu0 %v797, 64
        %v842 = vpop.permute.xlu0 %841
        %843 = vrot.lane.b32.xlu0 %v800, 64
        %v844 = vpop.permute.xlu0 %843
        %845 = vrot.lane.b32.xlu0 %v803, 64
        %v846 = vpop.permute.xlu0 %845
        %847 = vrot.lane.b32.xlu0 %v806, 64
        %v848 = vpop.permute.xlu0 %847
        %849 = vrot.lane.b32.xlu0 %v809, 64
        %v850 = vpop.permute.xlu0 %849
        %851 = vrot.lane.b32.xlu0 %v812, 64
        %v852 = vpop.permute.xlu0 %851
        %853 = vrot.lane.b32.xlu0 %v815, 64
        %v854 = vpop.permute.xlu0 %853
        %855 = vrot.lane.b32.xlu0 %v818, 64
        %v856 = vpop.permute.xlu0 %855
        %857 = vrot.lane.b32.xlu0 %v821, 64
        %v858 = vpop.permute.xlu0 %857
        %859 = vrot.lane.b32.xlu0 %v824, 64
        %v860 = vpop.permute.xlu0 %859
        %861 = vrot.lane.b32.xlu0 %v827, 64
        %v862 = vpop.permute.xlu0 %861
        %863 = vrot.lane.b32.xlu0 %v830, 64
        %v864 = vpop.permute.xlu0 %863
        %865 = vrot.lane.b32.xlu0 %v833, 64
        %v866 = vpop.permute.xlu0 %865
        %867 = vrot.lane.b32.xlu0 %v836, 64
        %v868 = vpop.permute.xlu0 %867
        %v889 = vrot.slane %v564, 1
        %v890 = vrot.slane %v565, 1
        %v891 = vsel %vm788, %v889, %v890
        %v892 = vrot.slane %v582, 1
        %v893 = vrot.slane %v583, 1
        %v894 = vsel %vm788, %v892, %v893
        %895 = vrot.lane.b32.xlu0 %v891, 64
        %v896 = vpop.permute.xlu0 %895
        %897 = vrot.lane.b32.xlu0 %v894, 64
        %v898 = vpop.permute.xlu0 %897
        %vm901 = vcmask 523264
        %v902 = vsel %vm901, %v548, %v838
        %v903 = vsel %vm901, %v550, %v840
        %v904 = vsel %vm901, %v552, %v842
        %v905 = vsel %vm901, %v554, %v844
        %v906 = vsel %vm901, %v556, %v846
        %v907 = vsel %vm901, %v558, %v848
        %v908 = vsel %vm901, %v560, %v850
        %v909 = vsel %vm901, %v562, %v852
        %v910 = vsel %vm901, %v566, %v854
        %v911 = vsel %vm901, %v568, %v856
        %v912 = vsel %vm901, %v570, %v858
        %v913 = vsel %vm901, %v572, %v860
        %v914 = vsel %vm901, %v574, %v862
        %v915 = vsel %vm901, %v576, %v864
        %v916 = vsel %vm901, %v578, %v866
        %v917 = vsel %vm901, %v580, %v868
        %v918 = vsel %vm901, %v564, %v896
        %v919 = vsel %vm901, %v582, %v898
        %v920 = vpack.c.bf16 %v903, %v902
        %v921 = vpack.c.bf16 %v904, %v903
        %v922 = vpack.c.bf16 %v905, %v904
        %v923 = vpack.c.bf16 %v906, %v905
        %v924 = vpack.c.bf16 %v907, %v906
        %v925 = vpack.c.bf16 %v908, %v907
        %v926 = vpack.c.bf16 %v909, %v908
        %v927 = vpack.c.bf16 %v918, %v909
        %v928 = vpack.c.bf16 %v911, %v910
        %v929 = vpack.c.bf16 %v912, %v911
        %v930 = vpack.c.bf16 %v913, %v912
        %v931 = vpack.c.bf16 %v914, %v913
        %v932 = vpack.c.bf16 %v915, %v914
        %v933 = vpack.c.bf16 %v916, %v915
        %v934 = vpack.c.bf16 %v917, %v916
        %v935 = vpack.c.bf16 %v919, %v917
        %v937 = vlaneseq
        %v938 = vshrl.u32 %v937, 7
        %v939 = vsub.s32 0, %v938
        %v940 = vrot.slane %v752, %v939
        %v974 = vunpack.c.l.b16 %v584
        %v975 = vunpack.c.l.b16 %v585
        %v976 = vunpack.c.l.b16 %v586
        %v977 = vunpack.c.l.b16 %v587
        %v978 = vunpack.c.l.b16 %v588
        %v979 = vunpack.c.l.b16 %v589
        %v980 = vunpack.c.l.b16 %v590
        %v981 = vunpack.c.l.b16 %v591
        %v982 = vunpack.c.l.b16 %v592
        %v983 = vunpack.c.l.b16 %v593
        %v984 = vunpack.c.l.b16 %v594
        %v985 = vunpack.c.l.b16 %v595
        %v986 = vunpack.c.l.b16 %v596
        %v987 = vunpack.c.l.b16 %v597
        %v988 = vunpack.c.l.b16 %v598
        %v989 = vunpack.c.l.b16 %v599
        %v990 = vunpack.c.l.b16 %v600
        %v991 = vunpack.c.l.b16 %v601
        %v992 = vunpack.c.l.b16 %v602
        %v993 = vunpack.c.l.b16 %v603
        %v994 = vunpack.c.l.b16 %v604
        %v995 = vunpack.c.l.b16 %v605
        %v996 = vunpack.c.l.b16 %v606
        %v997 = vunpack.c.l.b16 %v607
        %v998 = vunpack.c.l.b16 %v608
        %v999 = vunpack.c.l.b16 %v609
        %v1000 = vunpack.c.l.b16 %v610
        %v1001 = vunpack.c.l.b16 %v611
        %v1002 = vunpack.c.l.b16 %v612
        %v1003 = vunpack.c.l.b16 %v613
        %v1004 = vunpack.c.l.b16 %v614
        %v1005 = vunpack.c.l.b16 %v615
        %v1006 = vpack.c.b16 %v975, %v974
        %v1007 = vpack.c.b16 %v977, %v976
        %v1008 = vpack.c.b16 %v979, %v978
        %v1009 = vpack.c.b16 %v981, %v980
        %v1010 = vpack.c.b16 %v983, %v982
        %v1011 = vpack.c.b16 %v985, %v984
        %v1012 = vpack.c.b16 %v987, %v986
        %v1013 = vpack.c.b16 %v989, %v988
        %v1014 = vpack.c.b16 %v991, %v990
        %v1015 = vpack.c.b16 %v993, %v992
        %v1016 = vpack.c.b16 %v995, %v994
        %v1017 = vpack.c.b16 %v997, %v996
        %v1018 = vpack.c.b16 %v999, %v998
        %v1019 = vpack.c.b16 %v1001, %v1000
        %v1020 = vpack.c.b16 %v1003, %v1002
        %v1021 = vpack.c.b16 %v1005, %v1004
        %1038 = vmatprep.subr.bf16.mxu0 0
        %1039 = vmatpush1.bf16.msra.mxu0 %v1006
        %1040 = vmatprep.subr.bf16.mxu0 0
        %1041 = vmatpush1.bf16.msra.mxu0 %v1007
        %1042 = vmatprep.subr.bf16.mxu0 0
        %1043 = vmatpush1.bf16.msra.mxu0 %v1008
        %1044 = vmatprep.subr.bf16.mxu0 0
        %1045 = vmatpush1.bf16.msra.mxu0 %v1009
        %1046 = vmatprep.subr.bf16.mxu0 0
        %1047 = vmatpush1.bf16.msra.mxu0 %v1010
        %1048 = vmatprep.subr.bf16.mxu0 0
        %1049 = vmatpush1.bf16.msra.mxu0 %v1011
        %1050 = vmatprep.subr.bf16.mxu0 0
        %1051 = vmatpush1.bf16.msra.mxu0 %v1012
        %1052 = vmatprep.subr.bf16.mxu0 0
        %1053 = vmatpush1.bf16.msra.mxu0 %v1013
        %1054 = vmatprep.subr.bf16.mxu0 0
        %1055 = vmatpush1.bf16.msra.mxu0 %v1014
        %1056 = vmatprep.subr.bf16.mxu0 0
        %1057 = vmatpush1.bf16.msra.mxu0 %v1015
        %1058 = vmatprep.subr.bf16.mxu0 0
        %1059 = vmatpush1.bf16.msra.mxu0 %v1016
        %1060 = vmatprep.subr.bf16.mxu0 0
        %1061 = vmatpush1.bf16.msra.mxu0 %v1017
        %1062 = vmatprep.subr.bf16.mxu0 0
        %1063 = vmatpush1.bf16.msra.mxu0 %v1018
        %1064 = vmatprep.subr.bf16.mxu0 0
        %1065 = vmatpush1.bf16.msra.mxu0 %v1019
        %1066 = vmatprep.subr.bf16.mxu0 0
        %1067 = vmatpush1.bf16.msra.mxu0 %v1020
        %1068 = vmatprep.subr.bf16.mxu0 0
        %1069 = vmatpush1.bf16.msra.mxu0 %v1021
        %1070 = vmatprep.mubr.bf16.mxu0 %v921
        %1071 = vmatmul.mubr.bf16.gmra.mrb[0].mxu0 %v920
        %v1072 = vpop.f32.mrb[0].mxu0
        %v1073 = vadd.f32 %v940, %v1072
        %v1074 = vpop.f32.mrb[0].mxu0
        %v1075 = vpop.f32.mrb[0].mxu0
        %v1076 = vadd.f32 %v940, %v1075
        %v1077 = vpop.f32.mrb[0].mxu0
        %1078 = vmatprep.mubr.bf16.mxu0 %v923
        %1079 = vmatmul.mubr.bf16.gmra.mrb[0].mxu0 %v922
        %v1080 = vpop.f32.mrb[0].mxu0
        %v1081 = vadd.f32 %v940, %v1080
        %v1082 = vpop.f32.mrb[0].mxu0
        %v1083 = vpop.f32.mrb[0].mxu0
        %v1084 = vadd.f32 %v940, %v1083
        %v1085 = vpop.f32.mrb[0].mxu0
        %1086 = vmatprep.mubr.bf16.mxu0 %v925
        %1087 = vmatmul.mubr.bf16.gmra.mrb[0].mxu0 %v924
        %v1088 = vpop.f32.mrb[0].mxu0
        %v1089 = vadd.f32 %v940, %v1088
        %v1090 = vpop.f32.mrb[0].mxu0
        %v1091 = vpop.f32.mrb[0].mxu0
        %v1092 = vadd.f32 %v940, %v1091
        %v1093 = vpop.f32.mrb[0].mxu0
        %1094 = vmatprep.mubr.bf16.mxu0 %v927
        %1095 = vmatmul.mubr.bf16.gmra.mrb[0].mxu0 %v926
        %v1096 = vpop.f32.mrb[0].mxu0
        %v1097 = vadd.f32 %v940, %v1096
        %v1098 = vpop.f32.mrb[0].mxu0
        %v1099 = vpop.f32.mrb[0].mxu0
        %v1100 = vadd.f32 %v940, %v1099
        %v1101 = vpop.f32.mrb[0].mxu0
        %1102 = vmatprep.mubr.bf16.mxu0 %v929
        %1103 = vmatmul.mubr.bf16.gmra.mrb[0].mxu0 %v928
        %v1104 = vpop.f32.mrb[0].mxu0
        %v1105 = vadd.f32 %v940, %v1104
        %v1106 = vpop.f32.mrb[0].mxu0
        %v1107 = vpop.f32.mrb[0].mxu0
        %v1108 = vadd.f32 %v940, %v1107
        %v1109 = vpop.f32.mrb[0].mxu0
        %1110 = vmatprep.mubr.bf16.mxu0 %v931
        %1111 = vmatmul.mubr.bf16.gmra.mrb[0].mxu0 %v930
        %v1112 = vpop.f32.mrb[0].mxu0
        %v1113 = vadd.f32 %v940, %v1112
        %v1114 = vpop.f32.mrb[0].mxu0
        %v1115 = vpop.f32.mrb[0].mxu0
        %v1116 = vadd.f32 %v940, %v1115
        %v1117 = vpop.f32.mrb[0].mxu0
        %1118 = vmatprep.mubr.bf16.mxu0 %v933
        %1119 = vmatmul.mubr.bf16.gmra.mrb[0].mxu0 %v932
        %v1120 = vpop.f32.mrb[0].mxu0
        %v1121 = vadd.f32 %v940, %v1120
        %v1122 = vpop.f32.mrb[0].mxu0
        %v1123 = vpop.f32.mrb[0].mxu0
        %v1124 = vadd.f32 %v940, %v1123
        %v1125 = vpop.f32.mrb[0].mxu0
        %1126 = vmatprep.mubr.bf16.mxu0 %v935
        %1127 = vmatmul.mubr.bf16.gmra.mrb[0].mxu0 %v934
        %v1128 = vpop.f32.mrb[0].mxu0
        %v1129 = vadd.f32 %v940, %v1128
        %v1130 = vpop.f32.mrb[0].mxu0
        %v1131 = vpop.f32.mrb[0].mxu0
        %v1132 = vadd.f32 %v940, %v1131
        %v1133 = vpop.f32.mrb[0].mxu0
        %1134 = vdwg.mxu0
        %v1135 = vmax.f32 %v1073, 0.0
        %v1136 = vmax.f32 %v1076, 0.0
        %v1137 = vmax.f32 %v1081, 0.0
        %v1138 = vmax.f32 %v1084, 0.0
        %v1139 = vmax.f32 %v1089, 0.0
        %v1140 = vmax.f32 %v1092, 0.0
        %v1141 = vmax.f32 %v1097, 0.0
        %v1142 = vmax.f32 %v1100, 0.0
        %v1143 = vmax.f32 %v1105, 0.0
        %v1144 = vmax.f32 %v1108, 0.0
        %v1145 = vmax.f32 %v1113, 0.0
        %v1146 = vmax.f32 %v1116, 0.0
        %v1147 = vmax.f32 %v1121, 0.0
        %v1148 = vmax.f32 %v1124, 0.0
        %v1149 = vmax.f32 %v1129, 0.0
        %v1150 = vmax.f32 %v1132, 0.0
        %v1167 = vcombine.high %v1135, %v1135
        %v1169 = vunpack.c.l.s4 1983009808
        %v1170 = vunpack.c.0.s8 %v1169
        %v1171 = vlaneseq
        %v1172 = vshrl.u32 %v1171, 7
        %v1173 = vsub.s32 %v1170, %v1172
        %v1174 = vrot.slane %v1135, %v1173
        %v1176 = vunpack.c.l.s4 1983009808
        %v1177 = vunpack.c.0.s8 %v1176
        %v1178 = vlaneseq
        %v1179 = vshrl.u32 %v1178, 7
        %v1180 = vsub.s32 %v1177, %v1179
        %v1181 = vrot.slane %v1167, %v1180
        %v1182 = vcombine.high %v1174, %v1174
        %v1183 = vcombine.high %v1181, %v1181
        %v1184 = vcombine.high %v1136, %v1136
        %v1186 = vunpack.c.l.s4 1983009808
        %v1187 = vunpack.c.0.s8 %v1186
        %v1188 = vlaneseq
        %v1189 = vshrl.u32 %v1188, 7
        %v1190 = vsub.s32 %v1187, %v1189
        %v1191 = vrot.slane %v1136, %v1190
        %v1193 = vunpack.c.l.s4 1983009808
        %v1194 = vunpack.c.0.s8 %v1193
        %v1195 = vlaneseq
        %v1196 = vshrl.u32 %v1195, 7
        %v1197 = vsub.s32 %v1194, %v1196
        %v1198 = vrot.slane %v1184, %v1197
        %v1199 = vcombine.high %v1191, %v1191
        %v1200 = vcombine.high %v1198, %v1198
        %v1201 = vcombine.high %v1137, %v1137
        %v1203 = vunpack.c.l.s4 1983009808
        %v1204 = vunpack.c.0.s8 %v1203
        %v1205 = vlaneseq
        %v1206 = vshrl.u32 %v1205, 7
        %v1207 = vsub.s32 %v1204, %v1206
        %v1208 = vrot.slane %v1137, %v1207
        %v1210 = vunpack.c.l.s4 1983009808
        %v1211 = vunpack.c.0.s8 %v1210
        %v1212 = vlaneseq
        %v1213 = vshrl.u32 %v1212, 7
        %v1214 = vsub.s32 %v1211, %v1213
        %v1215 = vrot.slane %v1201, %v1214
        %v1216 = vcombine.high %v1208, %v1208
        %v1217 = vcombine.high %v1215, %v1215
        %v1218 = vcombine.high %v1138, %v1138
        %v1220 = vunpack.c.l.s4 1983009808
        %v1221 = vunpack.c.0.s8 %v1220
        %v1222 = vlaneseq
        %v1223 = vshrl.u32 %v1222, 7
        %v1224 = vsub.s32 %v1221, %v1223
        %v1225 = vrot.slane %v1138, %v1224
        %v1227 = vunpack.c.l.s4 1983009808
        %v1228 = vunpack.c.0.s8 %v1227
        %v1229 = vlaneseq
        %v1230 = vshrl.u32 %v1229, 7
        %v1231 = vsub.s32 %v1228, %v1230
        %v1232 = vrot.slane %v1218, %v1231
        %v1233 = vcombine.high %v1225, %v1225
        %v1234 = vcombine.high %v1232, %v1232
        %v1235 = vcombine.high %v1139, %v1139
        %v1237 = vunpack.c.l.s4 1983009808
        %v1238 = vunpack.c.0.s8 %v1237
        %v1239 = vlaneseq
        %v1240 = vshrl.u32 %v1239, 7
        %v1241 = vsub.s32 %v1238, %v1240
        %v1242 = vrot.slane %v1139, %v1241
        %v1244 = vunpack.c.l.s4 1983009808
        %v1245 = vunpack.c.0.s8 %v1244
        %v1246 = vlaneseq
        %v1247 = vshrl.u32 %v1246, 7
        %v1248 = vsub.s32 %v1245, %v1247
        %v1249 = vrot.slane %v1235, %v1248
        %v1250 = vcombine.high %v1242, %v1242
        %v1251 = vcombine.high %v1249, %v1249
        %v1252 = vcombine.high %v1140, %v1140
        %v1254 = vunpack.c.l.s4 1983009808
        %v1255 = vunpack.c.0.s8 %v1254
        %v1256 = vlaneseq
        %v1257 = vshrl.u32 %v1256, 7
        %v1258 = vsub.s32 %v1255, %v1257
        %v1259 = vrot.slane %v1140, %v1258
        %v1261 = vunpack.c.l.s4 1983009808
        %v1262 = vunpack.c.0.s8 %v1261
        %v1263 = vlaneseq
        %v1264 = vshrl.u32 %v1263, 7
        %v1265 = vsub.s32 %v1262, %v1264
        %v1266 = vrot.slane %v1252, %v1265
        %v1267 = vcombine.high %v1259, %v1259
        %v1268 = vcombine.high %v1266, %v1266
        %v1269 = vcombine.high %v1141, %v1141
        %v1271 = vunpack.c.l.s4 1983009808
        %v1272 = vunpack.c.0.s8 %v1271
        %v1273 = vlaneseq
        %v1274 = vshrl.u32 %v1273, 7
        %v1275 = vsub.s32 %v1272, %v1274
        %v1276 = vrot.slane %v1141, %v1275
        %v1278 = vunpack.c.l.s4 1983009808
        %v1279 = vunpack.c.0.s8 %v1278
        %v1280 = vlaneseq
        %v1281 = vshrl.u32 %v1280, 7
        %v1282 = vsub.s32 %v1279, %v1281
        %v1283 = vrot.slane %v1269, %v1282
        %v1284 = vcombine.high %v1276, %v1276
        %v1285 = vcombine.high %v1283, %v1283
        %v1286 = vcombine.high %v1142, %v1142
        %v1288 = vunpack.c.l.s4 1983009808
        %v1289 = vunpack.c.0.s8 %v1288
        %v1290 = vlaneseq
        %v1291 = vshrl.u32 %v1290, 7
        %v1292 = vsub.s32 %v1289, %v1291
        %v1293 = vrot.slane %v1142, %v1292
        %v1295 = vunpack.c.l.s4 1983009808
        %v1296 = vunpack.c.0.s8 %v1295
        %v1297 = vlaneseq
        %v1298 = vshrl.u32 %v1297, 7
        %v1299 = vsub.s32 %v1296, %v1298
        %v1300 = vrot.slane %v1286, %v1299
        %v1301 = vcombine.high %v1293, %v1293
        %v1302 = vcombine.high %v1300, %v1300
        %v1303 = vcombine.high %v1143, %v1143
        %v1305 = vunpack.c.l.s4 1983009808
        %v1306 = vunpack.c.0.s8 %v1305
        %v1307 = vlaneseq
        %v1308 = vshrl.u32 %v1307, 7
        %v1309 = vsub.s32 %v1306, %v1308
        %v1310 = vrot.slane %v1143, %v1309
        %v1312 = vunpack.c.l.s4 1983009808
        %v1313 = vunpack.c.0.s8 %v1312
        %v1314 = vlaneseq
        %v1315 = vshrl.u32 %v1314, 7
        %v1316 = vsub.s32 %v1313, %v1315
        %v1317 = vrot.slane %v1303, %v1316
        %v1318 = vcombine.high %v1310, %v1310
        %v1319 = vcombine.high %v1317, %v1317
        %v1320 = vcombine.high %v1144, %v1144
        %v1322 = vunpack.c.l.s4 1983009808
        %v1323 = vunpack.c.0.s8 %v1322
        %v1324 = vlaneseq
        %v1325 = vshrl.u32 %v1324, 7
        %v1326 = vsub.s32 %v1323, %v1325
        %v1327 = vrot.slane %v1144, %v1326
        %v1329 = vunpack.c.l.s4 1983009808
        %v1330 = vunpack.c.0.s8 %v1329
        %v1331 = vlaneseq
        %v1332 = vshrl.u32 %v1331, 7
        %v1333 = vsub.s32 %v1330, %v1332
        %v1334 = vrot.slane %v1320, %v1333
        %v1335 = vcombine.high %v1327, %v1327
        %v1336 = vcombine.high %v1334, %v1334
        %v1337 = vcombine.high %v1145, %v1145
        %v1339 = vunpack.c.l.s4 1983009808
        %v1340 = vunpack.c.0.s8 %v1339
        %v1341 = vlaneseq
        %v1342 = vshrl.u32 %v1341, 7
        %v1343 = vsub.s32 %v1340, %v1342
        %v1344 = vrot.slane %v1145, %v1343
        %v1346 = vunpack.c.l.s4 1983009808
        %v1347 = vunpack.c.0.s8 %v1346
        %v1348 = vlaneseq
        %v1349 = vshrl.u32 %v1348, 7
        %v1350 = vsub.s32 %v1347, %v1349
        %v1351 = vrot.slane %v1337, %v1350
        %v1352 = vcombine.high %v1344, %v1344
        %v1353 = vcombine.high %v1351, %v1351
        %v1354 = vcombine.high %v1146, %v1146
        %v1356 = vunpack.c.l.s4 1983009808
        %v1357 = vunpack.c.0.s8 %v1356
        %v1358 = vlaneseq
        %v1359 = vshrl.u32 %v1358, 7
        %v1360 = vsub.s32 %v1357, %v1359
        %v1361 = vrot.slane %v1146, %v1360
        %v1363 = vunpack.c.l.s4 1983009808
        %v1364 = vunpack.c.0.s8 %v1363
        %v1365 = vlaneseq
        %v1366 = vshrl.u32 %v1365, 7
        %v1367 = vsub.s32 %v1364, %v1366
        %v1368 = vrot.slane %v1354, %v1367
        %v1369 = vcombine.high %v1361, %v1361
        %v1370 = vcombine.high %v1368, %v1368
        %v1371 = vcombine.high %v1147, %v1147
        %v1373 = vunpack.c.l.s4 1983009808
        %v1374 = vunpack.c.0.s8 %v1373
        %v1375 = vlaneseq
        %v1376 = vshrl.u32 %v1375, 7
        %v1377 = vsub.s32 %v1374, %v1376
        %v1378 = vrot.slane %v1147, %v1377
        %v1380 = vunpack.c.l.s4 1983009808
        %v1381 = vunpack.c.0.s8 %v1380
        %v1382 = vlaneseq
        %v1383 = vshrl.u32 %v1382, 7
        %v1384 = vsub.s32 %v1381, %v1383
        %v1385 = vrot.slane %v1371, %v1384
        %v1386 = vcombine.high %v1378, %v1378
        %v1387 = vcombine.high %v1385, %v1385
        %v1388 = vcombine.high %v1148, %v1148
        %v1390 = vunpack.c.l.s4 1983009808
        %v1391 = vunpack.c.0.s8 %v1390
        %v1392 = vlaneseq
        %v1393 = vshrl.u32 %v1392, 7
        %v1394 = vsub.s32 %v1391, %v1393
        %v1395 = vrot.slane %v1148, %v1394
        %v1397 = vunpack.c.l.s4 1983009808
        %v1398 = vunpack.c.0.s8 %v1397
        %v1399 = vlaneseq
        %v1400 = vshrl.u32 %v1399, 7
        %v1401 = vsub.s32 %v1398, %v1400
        %v1402 = vrot.slane %v1388, %v1401
        %v1403 = vcombine.high %v1395, %v1395
        %v1404 = vcombine.high %v1402, %v1402
        %v1405 = vcombine.high %v1149, %v1149
        %v1407 = vunpack.c.l.s4 1983009808
        %v1408 = vunpack.c.0.s8 %v1407
        %v1409 = vlaneseq
        %v1410 = vshrl.u32 %v1409, 7
        %v1411 = vsub.s32 %v1408, %v1410
        %v1412 = vrot.slane %v1149, %v1411
        %v1414 = vunpack.c.l.s4 1983009808
        %v1415 = vunpack.c.0.s8 %v1414
        %v1416 = vlaneseq
        %v1417 = vshrl.u32 %v1416, 7
        %v1418 = vsub.s32 %v1415, %v1417
        %v1419 = vrot.slane %v1405, %v1418
        %v1420 = vcombine.high %v1412, %v1412
        %v1421 = vcombine.high %v1419, %v1419
        %v1422 = vcombine.high %v1150, %v1150
        %v1424 = vunpack.c.l.s4 1983009808
        %v1425 = vunpack.c.0.s8 %v1424
        %v1426 = vlaneseq
        %v1427 = vshrl.u32 %v1426, 7
        %v1428 = vsub.s32 %v1425, %v1427
        %v1429 = vrot.slane %v1150, %v1428
        %v1431 = vunpack.c.l.s4 1983009808
        %v1432 = vunpack.c.0.s8 %v1431
        %v1433 = vlaneseq
        %v1434 = vshrl.u32 %v1433, 7
        %v1435 = vsub.s32 %v1432, %v1434
        %v1436 = vrot.slane %v1422, %v1435
        %v1437 = vcombine.high %v1429, %v1429
        %v1438 = vcombine.high %v1436, %v1436
        %v1439 = vlaneseq
        %v1440 = vshrl.u32 %v1439, 7
        %v1441 = vsub.s32 0, %v1440
        %v1442 = vrot.slane %v1174, %v1441
        %v1443 = vlaneseq
        %v1444 = vshrl.u32 %v1443, 7
        %v1445 = vsub.s32 0, %v1444
        %v1446 = vrot.slane %v1182, %v1445
        %v1447 = vlaneseq
        %v1448 = vshrl.u32 %v1447, 7
        %v1449 = vsub.s32 0, %v1448
        %v1450 = vrot.slane %v1181, %v1449
        %v1451 = vlaneseq
        %v1452 = vshrl.u32 %v1451, 7
        %v1453 = vsub.s32 0, %v1452
        %v1454 = vrot.slane %v1208, %v1453
        %v1455 = vlaneseq
        %v1456 = vshrl.u32 %v1455, 7
        %v1457 = vsub.s32 0, %v1456
        %v1458 = vrot.slane %v1216, %v1457
        %v1459 = vlaneseq
        %v1460 = vshrl.u32 %v1459, 7
        %v1461 = vsub.s32 0, %v1460
        %v1462 = vrot.slane %v1215, %v1461
        %v1463 = vlaneseq
        %v1464 = vshrl.u32 %v1463, 7
        %v1465 = vsub.s32 0, %v1464
        %v1466 = vrot.slane %v1242, %v1465
        %v1467 = vlaneseq
        %v1468 = vshrl.u32 %v1467, 7
        %v1469 = vsub.s32 0, %v1468
        %v1470 = vrot.slane %v1250, %v1469
        %v1471 = vlaneseq
        %v1472 = vshrl.u32 %v1471, 7
        %v1473 = vsub.s32 0, %v1472
        %v1474 = vrot.slane %v1249, %v1473
        %v1475 = vlaneseq
        %v1476 = vshrl.u32 %v1475, 7
        %v1477 = vsub.s32 0, %v1476
        %v1478 = vrot.slane %v1310, %v1477
        %v1479 = vlaneseq
        %v1480 = vshrl.u32 %v1479, 7
        %v1481 = vsub.s32 0, %v1480
        %v1482 = vrot.slane %v1318, %v1481
        %v1483 = vlaneseq
        %v1484 = vshrl.u32 %v1483, 7
        %v1485 = vsub.s32 0, %v1484
        %v1486 = vrot.slane %v1317, %v1485
        %v1487 = vlaneseq
        %v1488 = vshrl.u32 %v1487, 7
        %v1489 = vsub.s32 0, %v1488
        %v1490 = vrot.slane %v1344, %v1489
        %v1491 = vlaneseq
        %v1492 = vshrl.u32 %v1491, 7
        %v1493 = vsub.s32 0, %v1492
        %v1494 = vrot.slane %v1352, %v1493
        %v1495 = vlaneseq
        %v1496 = vshrl.u32 %v1495, 7
        %v1497 = vsub.s32 0, %v1496
        %v1498 = vrot.slane %v1351, %v1497
        %v1499 = vlaneseq
        %v1500 = vshrl.u32 %v1499, 7
        %v1501 = vsub.s32 0, %v1500
        %v1502 = vrot.slane %v1378, %v1501
        %v1503 = vlaneseq
        %v1504 = vshrl.u32 %v1503, 7
        %v1505 = vsub.s32 0, %v1504
        %v1506 = vrot.slane %v1386, %v1505
        %v1507 = vlaneseq
        %v1508 = vshrl.u32 %v1507, 7
        %v1509 = vsub.s32 0, %v1508
        %v1510 = vrot.slane %v1385, %v1509
        %vm1511 = vcmask 1041409
        %v1512 = vsel %vm1511, %v1446, %v1442
        %vm1513 = vcmask 1042434
        %v1514 = vsel %vm1513, %v1450, %v1512
        %v1515 = vsel %vm1511, %v1458, %v1454
        %v1516 = vsel %vm1513, %v1462, %v1515
        %v1517 = vsel %vm1511, %v1470, %v1466
        %v1518 = vsel %vm1513, %v1474, %v1517
        %v1519 = vsel %vm1511, %v1482, %v1478
        %v1520 = vsel %vm1513, %v1486, %v1519
        %v1521 = vsel %vm1511, %v1494, %v1490
        %v1522 = vsel %vm1513, %v1498, %v1521
        %v1523 = vsel %vm1511, %v1506, %v1502
        %v1524 = vsel %vm1513, %v1510, %v1523
        %v1531 = vlaneseq
        %v1532 = vshrl.u32 %v1531, 7
        %v1533 = vsub.s32 1, %v1532
        %v1534 = vrot.slane %v1174, %v1533
        %v1535 = vlaneseq
        %v1536 = vshrl.u32 %v1535, 7
        %v1537 = vsub.s32 1, %v1536
        %v1538 = vrot.slane %v1182, %v1537
        %v1539 = vlaneseq
        %v1540 = vshrl.u32 %v1539, 7
        %v1541 = vsub.s32 1, %v1540
        %v1542 = vrot.slane %v1181, %v1541
        %v1543 = vlaneseq
        %v1544 = vshrl.u32 %v1543, 7
        %v1545 = vsub.s32 1, %v1544
        %v1546 = vrot.slane %v1208, %v1545
        %v1547 = vlaneseq
        %v1548 = vshrl.u32 %v1547, 7
        %v1549 = vsub.s32 1, %v1548
        %v1550 = vrot.slane %v1216, %v1549
        %v1551 = vlaneseq
        %v1552 = vshrl.u32 %v1551, 7
        %v1553 = vsub.s32 1, %v1552
        %v1554 = vrot.slane %v1215, %v1553
        %v1555 = vlaneseq
        %v1556 = vshrl.u32 %v1555, 7
        %v1557 = vsub.s32 1, %v1556
        %v1558 = vrot.slane %v1242, %v1557
        %v1559 = vlaneseq
        %v1560 = vshrl.u32 %v1559, 7
        %v1561 = vsub.s32 1, %v1560
        %v1562 = vrot.slane %v1250, %v1561
        %v1563 = vlaneseq
        %v1564 = vshrl.u32 %v1563, 7
        %v1565 = vsub.s32 1, %v1564
        %v1566 = vrot.slane %v1249, %v1565
        %v1567 = vlaneseq
        %v1568 = vshrl.u32 %v1567, 7
        %v1569 = vsub.s32 1, %v1568
        %v1570 = vrot.slane %v1310, %v1569
        %v1571 = vlaneseq
        %v1572 = vshrl.u32 %v1571, 7
        %v1573 = vsub.s32 1, %v1572
        %v1574 = vrot.slane %v1318, %v1573
        %v1575 = vlaneseq
        %v1576 = vshrl.u32 %v1575, 7
        %v1577 = vsub.s32 1, %v1576
        %v1578 = vrot.slane %v1317, %v1577
        %v1579 = vlaneseq
        %v1580 = vshrl.u32 %v1579, 7
        %v1581 = vsub.s32 1, %v1580
        %v1582 = vrot.slane %v1344, %v1581
        %v1583 = vlaneseq
        %v1584 = vshrl.u32 %v1583, 7
        %v1585 = vsub.s32 1, %v1584
        %v1586 = vrot.slane %v1352, %v1585
        %v1587 = vlaneseq
        %v1588 = vshrl.u32 %v1587, 7
        %v1589 = vsub.s32 1, %v1588
        %v1590 = vrot.slane %v1351, %v1589
        %v1591 = vlaneseq
        %v1592 = vshrl.u32 %v1591, 7
        %v1593 = vsub.s32 1, %v1592
        %v1594 = vrot.slane %v1378, %v1593
        %v1595 = vlaneseq
        %v1596 = vshrl.u32 %v1595, 7
        %v1597 = vsub.s32 1, %v1596
        %v1598 = vrot.slane %v1386, %v1597
        %v1599 = vlaneseq
        %v1600 = vshrl.u32 %v1599, 7
        %v1601 = vsub.s32 1, %v1600
        %v1602 = vrot.slane %v1385, %v1601
        %v1603 = vsel %vm1511, %v1538, %v1534
        %v1604 = vsel %vm1513, %v1542, %v1603
        %v1605 = vsel %vm1511, %v1550, %v1546
        %v1606 = vsel %vm1513, %v1554, %v1605
        %v1607 = vsel %vm1511, %v1562, %v1558
        %v1608 = vsel %vm1513, %v1566, %v1607
        %v1609 = vsel %vm1511, %v1574, %v1570
        %v1610 = vsel %vm1513, %v1578, %v1609
        %v1611 = vsel %vm1511, %v1586, %v1582
        %v1612 = vsel %vm1513, %v1590, %v1611
        %v1613 = vsel %vm1511, %v1598, %v1594
        %v1614 = vsel %vm1513, %v1602, %v1613
        %1615 = vrot.lane.b32.xlu0 %v1604, 32
        %v1616 = vpop.permute.xlu0 %1615
        %1617 = vrot.lane.b32.xlu0 %v1606, 32
        %v1618 = vpop.permute.xlu0 %1617
        %1619 = vrot.lane.b32.xlu0 %v1608, 32
        %v1620 = vpop.permute.xlu0 %1619
        %1621 = vrot.lane.b32.xlu0 %v1610, 32
        %v1622 = vpop.permute.xlu0 %1621
        %1623 = vrot.lane.b32.xlu0 %v1612, 32
        %v1624 = vpop.permute.xlu0 %1623
        %1625 = vrot.lane.b32.xlu0 %v1614, 32
        %v1626 = vpop.permute.xlu0 %1625
        %v1633 = vlaneseq
        %v1634 = vshrl.u32 %v1633, 7
        %v1635 = vsub.s32 0, %v1634
        %v1636 = vrot.slane %v1183, %v1635
        %v1637 = vlaneseq
        %v1638 = vshrl.u32 %v1637, 7
        %v1639 = vsub.s32 0, %v1638
        %v1640 = vrot.slane %v1217, %v1639
        %v1641 = vlaneseq
        %v1642 = vshrl.u32 %v1641, 7
        %v1643 = vsub.s32 0, %v1642
        %v1644 = vrot.slane %v1251, %v1643
        %v1645 = vlaneseq
        %v1646 = vshrl.u32 %v1645, 7
        %v1647 = vsub.s32 0, %v1646
        %v1648 = vrot.slane %v1319, %v1647
        %v1649 = vlaneseq
        %v1650 = vshrl.u32 %v1649, 7
        %v1651 = vsub.s32 0, %v1650
        %v1652 = vrot.slane %v1353, %v1651
        %v1653 = vlaneseq
        %v1654 = vshrl.u32 %v1653, 7
        %v1655 = vsub.s32 0, %v1654
        %v1656 = vrot.slane %v1387, %v1655
        %v1657 = vsel %vm1511, %v1450, %v1446
        %v1658 = vsel %vm1513, %v1636, %v1657
        %v1659 = vsel %vm1511, %v1462, %v1458
        %v1660 = vsel %vm1513, %v1640, %v1659
        %v1661 = vsel %vm1511, %v1474, %v1470
        %v1662 = vsel %vm1513, %v1644, %v1661
        %v1663 = vsel %vm1511, %v1486, %v1482
        %v1664 = vsel %vm1513, %v1648, %v1663
        %v1665 = vsel %vm1511, %v1498, %v1494
        %v1666 = vsel %vm1513, %v1652, %v1665
        %v1667 = vsel %vm1511, %v1510, %v1506
        %v1668 = vsel %vm1513, %v1656, %v1667
        %1669 = vrot.lane.b32.xlu0 %v1658, 64
        %v1670 = vpop.permute.xlu0 %1669
        %1671 = vrot.lane.b32.xlu0 %v1660, 64
        %v1672 = vpop.permute.xlu0 %1671
        %1673 = vrot.lane.b32.xlu0 %v1662, 64
        %v1674 = vpop.permute.xlu0 %1673
        %1675 = vrot.lane.b32.xlu0 %v1664, 64
        %v1676 = vpop.permute.xlu0 %1675
        %1677 = vrot.lane.b32.xlu0 %v1666, 64
        %v1678 = vpop.permute.xlu0 %1677
        %1679 = vrot.lane.b32.xlu0 %v1668, 64
        %v1680 = vpop.permute.xlu0 %1679
        %v1687 = vlaneseq
        %v1688 = vshrl.u32 %v1687, 7
        %v1689 = vsub.s32 1, %v1688
        %v1690 = vrot.slane %v1183, %v1689
        %v1691 = vlaneseq
        %v1692 = vshrl.u32 %v1691, 7
        %v1693 = vsub.s32 1, %v1692
        %v1694 = vrot.slane %v1217, %v1693
        %v1695 = vlaneseq
        %v1696 = vshrl.u32 %v1695, 7
        %v1697 = vsub.s32 1, %v1696
        %v1698 = vrot.slane %v1251, %v1697
        %v1699 = vlaneseq
        %v1700 = vshrl.u32 %v1699, 7
        %v1701 = vsub.s32 1, %v1700
        %v1702 = vrot.slane %v1319, %v1701
        %v1703 = vlaneseq
        %v1704 = vshrl.u32 %v1703, 7
        %v1705 = vsub.s32 1, %v1704
        %v1706 = vrot.slane %v1353, %v1705
        %v1707 = vlaneseq
        %v1708 = vshrl.u32 %v1707, 7
        %v1709 = vsub.s32 1, %v1708
        %v1710 = vrot.slane %v1387, %v1709
        %v1711 = vsel %vm1511, %v1542, %v1538
        %v1712 = vsel %vm1513, %v1690, %v1711
        %v1713 = vsel %vm1511, %v1554, %v1550
        %v1714 = vsel %vm1513, %v1694, %v1713
        %v1715 = vsel %vm1511, %v1566, %v1562
        %v1716 = vsel %vm1513, %v1698, %v1715
        %v1717 = vsel %vm1511, %v1578, %v1574
        %v1718 = vsel %vm1513, %v1702, %v1717
        %v1719 = vsel %vm1511, %v1590, %v1586
        %v1720 = vsel %vm1513, %v1706, %v1719
        %v1721 = vsel %vm1511, %v1602, %v1598
        %v1722 = vsel %vm1513, %v1710, %v1721
        %1723 = vrot.lane.b32.xlu0 %v1712, 96
        %v1724 = vpop.permute.xlu0 %1723
        %1725 = vrot.lane.b32.xlu0 %v1714, 96
        %v1726 = vpop.permute.xlu0 %1725
        %1727 = vrot.lane.b32.xlu0 %v1716, 96
        %v1728 = vpop.permute.xlu0 %1727
        %1729 = vrot.lane.b32.xlu0 %v1718, 96
        %v1730 = vpop.permute.xlu0 %1729
        %1731 = vrot.lane.b32.xlu0 %v1720, 96
        %v1732 = vpop.permute.xlu0 %1731
        %1733 = vrot.lane.b32.xlu0 %v1722, 96
        %v1734 = vpop.permute.xlu0 %1733
        %v1741 = vlaneseq
        %v1742 = vshrl.u32 %v1741, 7
        %v1743 = vsub.s32 0, %v1742
        %v1744 = vrot.slane %v1191, %v1743
        %v1745 = vlaneseq
        %v1746 = vshrl.u32 %v1745, 7
        %v1747 = vsub.s32 0, %v1746
        %v1748 = vrot.slane %v1199, %v1747
        %v1749 = vlaneseq
        %v1750 = vshrl.u32 %v1749, 7
        %v1751 = vsub.s32 0, %v1750
        %v1752 = vrot.slane %v1198, %v1751
        %v1753 = vlaneseq
        %v1754 = vshrl.u32 %v1753, 7
        %v1755 = vsub.s32 0, %v1754
        %v1756 = vrot.slane %v1225, %v1755
        %v1757 = vlaneseq
        %v1758 = vshrl.u32 %v1757, 7
        %v1759 = vsub.s32 0, %v1758
        %v1760 = vrot.slane %v1233, %v1759
        %v1761 = vlaneseq
        %v1762 = vshrl.u32 %v1761, 7
        %v1763 = vsub.s32 0, %v1762
        %v1764 = vrot.slane %v1232, %v1763
        %v1765 = vlaneseq
        %v1766 = vshrl.u32 %v1765, 7
        %v1767 = vsub.s32 0, %v1766
        %v1768 = vrot.slane %v1259, %v1767
        %v1769 = vlaneseq
        %v1770 = vshrl.u32 %v1769, 7
        %v1771 = vsub.s32 0, %v1770
        %v1772 = vrot.slane %v1267, %v1771
        %v1773 = vlaneseq
        %v1774 = vshrl.u32 %v1773, 7
        %v1775 = vsub.s32 0, %v1774
        %v1776 = vrot.slane %v1266, %v1775
        %v1777 = vlaneseq
        %v1778 = vshrl.u32 %v1777, 7
        %v1779 = vsub.s32 0, %v1778
        %v1780 = vrot.slane %v1327, %v1779
        %v1781 = vlaneseq
        %v1782 = vshrl.u32 %v1781, 7
        %v1783 = vsub.s32 0, %v1782
        %v1784 = vrot.slane %v1335, %v1783
        %v1785 = vlaneseq
        %v1786 = vshrl.u32 %v1785, 7
        %v1787 = vsub.s32 0, %v1786
        %v1788 = vrot.slane %v1334, %v1787
        %v1789 = vlaneseq
        %v1790 = vshrl.u32 %v1789, 7
        %v1791 = vsub.s32 0, %v1790
        %v1792 = vrot.slane %v1361, %v1791
        %v1793 = vlaneseq
        %v1794 = vshrl.u32 %v1793, 7
        %v1795 = vsub.s32 0, %v1794
        %v1796 = vrot.slane %v1369, %v1795
        %v1797 = vlaneseq
        %v1798 = vshrl.u32 %v1797, 7
        %v1799 = vsub.s32 0, %v1798
        %v1800 = vrot.slane %v1368, %v1799
        %v1801 = vlaneseq
        %v1802 = vshrl.u32 %v1801, 7
        %v1803 = vsub.s32 0, %v1802
        %v1804 = vrot.slane %v1395, %v1803
        %v1805 = vlaneseq
        %v1806 = vshrl.u32 %v1805, 7
        %v1807 = vsub.s32 0, %v1806
        %v1808 = vrot.slane %v1403, %v1807
        %v1809 = vlaneseq
        %v1810 = vshrl.u32 %v1809, 7
        %v1811 = vsub.s32 0, %v1810
        %v1812 = vrot.slane %v1402, %v1811
        %v1813 = vsel %vm1511, %v1748, %v1744
        %v1814 = vsel %vm1513, %v1752, %v1813
        %v1815 = vsel %vm1511, %v1760, %v1756
        %v1816 = vsel %vm1513, %v1764, %v1815
        %v1817 = vsel %vm1511, %v1772, %v1768
        %v1818 = vsel %vm1513, %v1776, %v1817
        %v1819 = vsel %vm1511, %v1784, %v1780
        %v1820 = vsel %vm1513, %v1788, %v1819
        %v1821 = vsel %vm1511, %v1796, %v1792
        %v1822 = vsel %vm1513, %v1800, %v1821
        %v1823 = vsel %vm1511, %v1808, %v1804
        %v1824 = vsel %vm1513, %v1812, %v1823
        %v1831 = vlaneseq
        %v1832 = vshrl.u32 %v1831, 7
        %v1833 = vsub.s32 1, %v1832
        %v1834 = vrot.slane %v1191, %v1833
        %v1835 = vlaneseq
        %v1836 = vshrl.u32 %v1835, 7
        %v1837 = vsub.s32 1, %v1836
        %v1838 = vrot.slane %v1199, %v1837
        %v1839 = vlaneseq
        %v1840 = vshrl.u32 %v1839, 7
        %v1841 = vsub.s32 1, %v1840
        %v1842 = vrot.slane %v1198, %v1841
        %v1843 = vlaneseq
        %v1844 = vshrl.u32 %v1843, 7
        %v1845 = vsub.s32 1, %v1844
        %v1846 = vrot.slane %v1225, %v1845
        %v1847 = vlaneseq
        %v1848 = vshrl.u32 %v1847, 7
        %v1849 = vsub.s32 1, %v1848
        %v1850 = vrot.slane %v1233, %v1849
        %v1851 = vlaneseq
        %v1852 = vshrl.u32 %v1851, 7
        %v1853 = vsub.s32 1, %v1852
        %v1854 = vrot.slane %v1232, %v1853
        %v1855 = vlaneseq
        %v1856 = vshrl.u32 %v1855, 7
        %v1857 = vsub.s32 1, %v1856
        %v1858 = vrot.slane %v1259, %v1857
        %v1859 = vlaneseq
        %v1860 = vshrl.u32 %v1859, 7
        %v1861 = vsub.s32 1, %v1860
        %v1862 = vrot.slane %v1267, %v1861
        %v1863 = vlaneseq
        %v1864 = vshrl.u32 %v1863, 7
        %v1865 = vsub.s32 1, %v1864
        %v1866 = vrot.slane %v1266, %v1865
        %v1867 = vlaneseq
        %v1868 = vshrl.u32 %v1867, 7
        %v1869 = vsub.s32 1, %v1868
        %v1870 = vrot.slane %v1327, %v1869
        %v1871 = vlaneseq
        %v1872 = vshrl.u32 %v1871, 7
        %v1873 = vsub.s32 1, %v1872
        %v1874 = vrot.slane %v1335, %v1873
        %v1875 = vlaneseq
        %v1876 = vshrl.u32 %v1875, 7
        %v1877 = vsub.s32 1, %v1876
        %v1878 = vrot.slane %v1334, %v1877
        %v1879 = vlaneseq
        %v1880 = vshrl.u32 %v1879, 7
        %v1881 = vsub.s32 1, %v1880
        %v1882 = vrot.slane %v1361, %v1881
        %v1883 = vlaneseq
        %v1884 = vshrl.u32 %v1883, 7
        %v1885 = vsub.s32 1, %v1884
        %v1886 = vrot.slane %v1369, %v1885
        %v1887 = vlaneseq
        %v1888 = vshrl.u32 %v1887, 7
        %v1889 = vsub.s32 1, %v1888
        %v1890 = vrot.slane %v1368, %v1889
        %v1891 = vlaneseq
        %v1892 = vshrl.u32 %v1891, 7
        %v1893 = vsub.s32 1, %v1892
        %v1894 = vrot.slane %v1395, %v1893
        %v1895 = vlaneseq
        %v1896 = vshrl.u32 %v1895, 7
        %v1897 = vsub.s32 1, %v1896
        %v1898 = vrot.slane %v1403, %v1897
        %v1899 = vlaneseq
        %v1900 = vshrl.u32 %v1899, 7
        %v1901 = vsub.s32 1, %v1900
        %v1902 = vrot.slane %v1402, %v1901
        %v1903 = vsel %vm1511, %v1838, %v1834
        %v1904 = vsel %vm1513, %v1842, %v1903
        %v1905 = vsel %vm1511, %v1850, %v1846
        %v1906 = vsel %vm1513, %v1854, %v1905
        %v1907 = vsel %vm1511, %v1862, %v1858
        %v1908 = vsel %vm1513, %v1866, %v1907
        %v1909 = vsel %vm1511, %v1874, %v1870
        %v1910 = vsel %vm1513, %v1878, %v1909
        %v1911 = vsel %vm1511, %v1886, %v1882
        %v1912 = vsel %vm1513, %v1890, %v1911
        %v1913 = vsel %vm1511, %v1898, %v1894
        %v1914 = vsel %vm1513, %v1902, %v1913
        %1915 = vrot.lane.b32.xlu0 %v1904, 32
        %v1916 = vpop.permute.xlu0 %1915
        %1917 = vrot.lane.b32.xlu0 %v1906, 32
        %v1918 = vpop.permute.xlu0 %1917
        %1919 = vrot.lane.b32.xlu0 %v1908, 32
        %v1920 = vpop.permute.xlu0 %1919
        %1921 = vrot.lane.b32.xlu0 %v1910, 32
        %v1922 = vpop.permute.xlu0 %1921
        %1923 = vrot.lane.b32.xlu0 %v1912, 32
        %v1924 = vpop.permute.xlu0 %1923
        %1925 = vrot.lane.b32.xlu0 %v1914, 32
        %v1926 = vpop.permute.xlu0 %1925
        %v1933 = vlaneseq
        %v1934 = vshrl.u32 %v1933, 7
        %v1935 = vsub.s32 0, %v1934
        %v1936 = vrot.slane %v1200, %v1935
        %v1937 = vlaneseq
        %v1938 = vshrl.u32 %v1937, 7
        %v1939 = vsub.s32 0, %v1938
        %v1940 = vrot.slane %v1234, %v1939
        %v1941 = vlaneseq
        %v1942 = vshrl.u32 %v1941, 7
        %v1943 = vsub.s32 0, %v1942
        %v1944 = vrot.slane %v1268, %v1943
        %v1945 = vlaneseq
        %v1946 = vshrl.u32 %v1945, 7
        %v1947 = vsub.s32 0, %v1946
        %v1948 = vrot.slane %v1336, %v1947
        %v1949 = vlaneseq
        %v1950 = vshrl.u32 %v1949, 7
        %v1951 = vsub.s32 0, %v1950
        %v1952 = vrot.slane %v1370, %v1951
        %v1953 = vlaneseq
        %v1954 = vshrl.u32 %v1953, 7
        %v1955 = vsub.s32 0, %v1954
        %v1956 = vrot.slane %v1404, %v1955
        %v1957 = vsel %vm1511, %v1752, %v1748
        %v1958 = vsel %vm1513, %v1936, %v1957
        %v1959 = vsel %vm1511, %v1764, %v1760
        %v1960 = vsel %vm1513, %v1940, %v1959
        %v1961 = vsel %vm1511, %v1776, %v1772
        %v1962 = vsel %vm1513, %v1944, %v1961
        %v1963 = vsel %vm1511, %v1788, %v1784
        %v1964 = vsel %vm1513, %v1948, %v1963
        %v1965 = vsel %vm1511, %v1800, %v1796
        %v1966 = vsel %vm1513, %v1952, %v1965
        %v1967 = vsel %vm1511, %v1812, %v1808
        %v1968 = vsel %vm1513, %v1956, %v1967
        %1969 = vrot.lane.b32.xlu0 %v1958, 64
        %v1970 = vpop.permute.xlu0 %1969
        %1971 = vrot.lane.b32.xlu0 %v1960, 64
        %v1972 = vpop.permute.xlu0 %1971
        %1973 = vrot.lane.b32.xlu0 %v1962, 64
        %v1974 = vpop.permute.xlu0 %1973
        %1975 = vrot.lane.b32.xlu0 %v1964, 64
        %v1976 = vpop.permute.xlu0 %1975
        %1977 = vrot.lane.b32.xlu0 %v1966, 64
        %v1978 = vpop.permute.xlu0 %1977
        %1979 = vrot.lane.b32.xlu0 %v1968, 64
        %v1980 = vpop.permute.xlu0 %1979
        %v1987 = vlaneseq
        %v1988 = vshrl.u32 %v1987, 7
        %v1989 = vsub.s32 1, %v1988
        %v1990 = vrot.slane %v1200, %v1989
        %v1991 = vlaneseq
        %v1992 = vshrl.u32 %v1991, 7
        %v1993 = vsub.s32 1, %v1992
        %v1994 = vrot.slane %v1234, %v1993
        %v1995 = vlaneseq
        %v1996 = vshrl.u32 %v1995, 7
        %v1997 = vsub.s32 1, %v1996
        %v1998 = vrot.slane %v1268, %v1997
        %v1999 = vlaneseq
        %v2000 = vshrl.u32 %v1999, 7
        %v2001 = vsub.s32 1, %v2000
        %v2002 = vrot.slane %v1336, %v2001
        %v2003 = vlaneseq
        %v2004 = vshrl.u32 %v2003, 7
        %v2005 = vsub.s32 1, %v2004
        %v2006 = vrot.slane %v1370, %v2005
        %v2007 = vlaneseq
        %v2008 = vshrl.u32 %v2007, 7
        %v2009 = vsub.s32 1, %v2008
        %v2010 = vrot.slane %v1404, %v2009
        %v2011 = vsel %vm1511, %v1842, %v1838
        %v2012 = vsel %vm1513, %v1990, %v2011
        %v2013 = vsel %vm1511, %v1854, %v1850
        %v2014 = vsel %vm1513, %v1994, %v2013
        %v2015 = vsel %vm1511, %v1866, %v1862
        %v2016 = vsel %vm1513, %v1998, %v2015
        %v2017 = vsel %vm1511, %v1878, %v1874
        %v2018 = vsel %vm1513, %v2002, %v2017
        %v2019 = vsel %vm1511, %v1890, %v1886
        %v2020 = vsel %vm1513, %v2006, %v2019
        %v2021 = vsel %vm1511, %v1902, %v1898
        %v2022 = vsel %vm1513, %v2010, %v2021
        %2023 = vrot.lane.b32.xlu0 %v2012, 96
        %v2024 = vpop.permute.xlu0 %2023
        %2025 = vrot.lane.b32.xlu0 %v2014, 96
        %v2026 = vpop.permute.xlu0 %2025
        %2027 = vrot.lane.b32.xlu0 %v2016, 96
        %v2028 = vpop.permute.xlu0 %2027
        %2029 = vrot.lane.b32.xlu0 %v2018, 96
        %v2030 = vpop.permute.xlu0 %2029
        %2031 = vrot.lane.b32.xlu0 %v2020, 96
        %v2032 = vpop.permute.xlu0 %2031
        %2033 = vrot.lane.b32.xlu0 %v2022, 96
        %v2034 = vpop.permute.xlu0 %2033
        %v2041 = vlaneseq
        %v2042 = vshrl.u32 %v2041, 7
        %v2043 = vsub.s32 0, %v2042
        %v2044 = vrot.slane %v1276, %v2043
        %v2045 = vlaneseq
        %v2046 = vshrl.u32 %v2045, 7
        %v2047 = vsub.s32 0, %v2046
        %v2048 = vrot.slane %v1284, %v2047
        %v2049 = vlaneseq
        %v2050 = vshrl.u32 %v2049, 7
        %v2051 = vsub.s32 0, %v2050
        %v2052 = vrot.slane %v1283, %v2051
        %v2053 = vlaneseq
        %v2054 = vshrl.u32 %v2053, 7
        %v2055 = vsub.s32 0, %v2054
        %v2056 = vrot.slane %v1412, %v2055
        %v2057 = vlaneseq
        %v2058 = vshrl.u32 %v2057, 7
        %v2059 = vsub.s32 0, %v2058
        %v2060 = vrot.slane %v1420, %v2059
        %v2061 = vlaneseq
        %v2062 = vshrl.u32 %v2061, 7
        %v2063 = vsub.s32 0, %v2062
        %v2064 = vrot.slane %v1419, %v2063
        %v2065 = vsel %vm1511, %v2048, %v2044
        %v2066 = vsel %vm1513, %v2052, %v2065
        %v2067 = vsel %vm1511, %v2060, %v2056
        %v2068 = vsel %vm1513, %v2064, %v2067
        %v2071 = vlaneseq
        %v2072 = vshrl.u32 %v2071, 7
        %v2073 = vsub.s32 1, %v2072
        %v2074 = vrot.slane %v1276, %v2073
        %v2075 = vlaneseq
        %v2076 = vshrl.u32 %v2075, 7
        %v2077 = vsub.s32 1, %v2076
        %v2078 = vrot.slane %v1284, %v2077
        %v2079 = vlaneseq
        %v2080 = vshrl.u32 %v2079, 7
        %v2081 = vsub.s32 1, %v2080
        %v2082 = vrot.slane %v1283, %v2081
        %v2083 = vlaneseq
        %v2084 = vshrl.u32 %v2083, 7
        %v2085 = vsub.s32 1, %v2084
        %v2086 = vrot.slane %v1412, %v2085
        %v2087 = vlaneseq
        %v2088 = vshrl.u32 %v2087, 7
        %v2089 = vsub.s32 1, %v2088
        %v2090 = vrot.slane %v1420, %v2089
        %v2091 = vlaneseq
        %v2092 = vshrl.u32 %v2091, 7
        %v2093 = vsub.s32 1, %v2092
        %v2094 = vrot.slane %v1419, %v2093
        %v2095 = vsel %vm1511, %v2078, %v2074
        %v2096 = vsel %vm1513, %v2082, %v2095
        %v2097 = vsel %vm1511, %v2090, %v2086
        %v2098 = vsel %vm1513, %v2094, %v2097
        %2099 = vrot.lane.b32.xlu0 %v2096, 32
        %v2100 = vpop.permute.xlu0 %2099
        %2101 = vrot.lane.b32.xlu0 %v2098, 32
        %v2102 = vpop.permute.xlu0 %2101
        %v2105 = vlaneseq
        %v2106 = vshrl.u32 %v2105, 7
        %v2107 = vsub.s32 0, %v2106
        %v2108 = vrot.slane %v1285, %v2107
        %v2109 = vlaneseq
        %v2110 = vshrl.u32 %v2109, 7
        %v2111 = vsub.s32 0, %v2110
        %v2112 = vrot.slane %v1421, %v2111
        %v2113 = vsel %vm1511, %v2052, %v2048
        %v2114 = vsel %vm1513, %v2108, %v2113
        %v2115 = vsel %vm1511, %v2064, %v2060
        %v2116 = vsel %vm1513, %v2112, %v2115
        %2117 = vrot.lane.b32.xlu0 %v2114, 64
        %v2118 = vpop.permute.xlu0 %2117
        %2119 = vrot.lane.b32.xlu0 %v2116, 64
        %v2120 = vpop.permute.xlu0 %2119
        %v2123 = vlaneseq
        %v2124 = vshrl.u32 %v2123, 7
        %v2125 = vsub.s32 1, %v2124
        %v2126 = vrot.slane %v1285, %v2125
        %v2127 = vlaneseq
        %v2128 = vshrl.u32 %v2127, 7
        %v2129 = vsub.s32 1, %v2128
        %v2130 = vrot.slane %v1421, %v2129
        %v2131 = vsel %vm1511, %v2082, %v2078
        %v2132 = vsel %vm1513, %v2126, %v2131
        %v2133 = vsel %vm1511, %v2094, %v2090
        %v2134 = vsel %vm1513, %v2130, %v2133
        %2135 = vrot.lane.b32.xlu0 %v2132, 96
        %v2136 = vpop.permute.xlu0 %2135
        %2137 = vrot.lane.b32.xlu0 %v2134, 96
        %v2138 = vpop.permute.xlu0 %2137
        %v2141 = vlaneseq
        %v2142 = vshrl.u32 %v2141, 7
        %v2143 = vsub.s32 0, %v2142
        %v2144 = vrot.slane %v1293, %v2143
        %v2145 = vlaneseq
        %v2146 = vshrl.u32 %v2145, 7
        %v2147 = vsub.s32 0, %v2146
        %v2148 = vrot.slane %v1301, %v2147
        %v2149 = vlaneseq
        %v2150 = vshrl.u32 %v2149, 7
        %v2151 = vsub.s32 0, %v2150
        %v2152 = vrot.slane %v1300, %v2151
        %v2153 = vlaneseq
        %v2154 = vshrl.u32 %v2153, 7
        %v2155 = vsub.s32 0, %v2154
        %v2156 = vrot.slane %v1429, %v2155
        %v2157 = vlaneseq
        %v2158 = vshrl.u32 %v2157, 7
        %v2159 = vsub.s32 0, %v2158
        %v2160 = vrot.slane %v1437, %v2159
        %v2161 = vlaneseq
        %v2162 = vshrl.u32 %v2161, 7
        %v2163 = vsub.s32 0, %v2162
        %v2164 = vrot.slane %v1436, %v2163
        %v2165 = vsel %vm1511, %v2148, %v2144
        %v2166 = vsel %vm1513, %v2152, %v2165
        %v2167 = vsel %vm1511, %v2160, %v2156
        %v2168 = vsel %vm1513, %v2164, %v2167
        %v2171 = vlaneseq
        %v2172 = vshrl.u32 %v2171, 7
        %v2173 = vsub.s32 1, %v2172
        %v2174 = vrot.slane %v1293, %v2173
        %v2175 = vlaneseq
        %v2176 = vshrl.u32 %v2175, 7
        %v2177 = vsub.s32 1, %v2176
        %v2178 = vrot.slane %v1301, %v2177
        %v2179 = vlaneseq
        %v2180 = vshrl.u32 %v2179, 7
        %v2181 = vsub.s32 1, %v2180
        %v2182 = vrot.slane %v1300, %v2181
        %v2183 = vlaneseq
        %v2184 = vshrl.u32 %v2183, 7
        %v2185 = vsub.s32 1, %v2184
        %v2186 = vrot.slane %v1429, %v2185
        %v2187 = vlaneseq
        %v2188 = vshrl.u32 %v2187, 7
        %v2189 = vsub.s32 1, %v2188
        %v2190 = vrot.slane %v1437, %v2189
        %v2191 = vlaneseq
        %v2192 = vshrl.u32 %v2191, 7
        %v2193 = vsub.s32 1, %v2192
        %v2194 = vrot.slane %v1436, %v2193
        %v2195 = vsel %vm1511, %v2178, %v2174
        %v2196 = vsel %vm1513, %v2182, %v2195
        %v2197 = vsel %vm1511, %v2190, %v2186
        %v2198 = vsel %vm1513, %v2194, %v2197
        %2199 = vrot.lane.b32.xlu0 %v2196, 32
        %v2200 = vpop.permute.xlu0 %2199
        %2201 = vrot.lane.b32.xlu0 %v2198, 32
        %v2202 = vpop.permute.xlu0 %2201
        %v2205 = vlaneseq
        %v2206 = vshrl.u32 %v2205, 7
        %v2207 = vsub.s32 0, %v2206
        %v2208 = vrot.slane %v1302, %v2207
        %v2209 = vlaneseq
        %v2210 = vshrl.u32 %v2209, 7
        %v2211 = vsub.s32 0, %v2210
        %v2212 = vrot.slane %v1438, %v2211
        %v2213 = vsel %vm1511, %v2152, %v2148
        %v2214 = vsel %vm1513, %v2208, %v2213
        %v2215 = vsel %vm1511, %v2164, %v2160
        %v2216 = vsel %vm1513, %v2212, %v2215
        %2217 = vrot.lane.b32.xlu0 %v2214, 64
        %v2218 = vpop.permute.xlu0 %2217
        %2219 = vrot.lane.b32.xlu0 %v2216, 64
        %v2220 = vpop.permute.xlu0 %2219
        %v2223 = vlaneseq
        %v2224 = vshrl.u32 %v2223, 7
        %v2225 = vsub.s32 1, %v2224
        %v2226 = vrot.slane %v1302, %v2225
        %v2227 = vlaneseq
        %v2228 = vshrl.u32 %v2227, 7
        %v2229 = vsub.s32 1, %v2228
        %v2230 = vrot.slane %v1438, %v2229
        %v2231 = vsel %vm1511, %v2182, %v2178
        %v2232 = vsel %vm1513, %v2226, %v2231
        %v2233 = vsel %vm1511, %v2194, %v2190
        %v2234 = vsel %vm1513, %v2230, %v2233
        %2235 = vrot.lane.b32.xlu0 %v2232, 96
        %v2236 = vpop.permute.xlu0 %2235
        %2237 = vrot.lane.b32.xlu0 %v2234, 96
        %v2238 = vpop.permute.xlu0 %2237
        %vm2241 = vcmask 261120
        %v2242 = vsel %vm2241, %v1514, %v1616
        %v2243 = vsel %vm2241, %v1516, %v1618
        %v2244 = vsel %vm2241, %v1518, %v1620
        %v2245 = vsel %vm2241, %v1520, %v1622
        %v2246 = vsel %vm2241, %v1522, %v1624
        %v2247 = vsel %vm2241, %v1524, %v1626
        %v2248 = vsel %vm901, %v2242, %v1670
        %v2249 = vsel %vm901, %v2243, %v1672
        %v2250 = vsel %vm901, %v2244, %v1674
        %v2251 = vsel %vm901, %v2245, %v1676
        %v2252 = vsel %vm901, %v2246, %v1678
        %v2253 = vsel %vm901, %v2247, %v1680
        %vm2254 = vcmask 785408
        %v2255 = vsel %vm2254, %v2248, %v1724
        %v2256 = vsel %vm2254, %v2249, %v1726
        %v2257 = vsel %vm2254, %v2250, %v1728
        %v2258 = vsel %vm2254, %v2251, %v1730
        %v2259 = vsel %vm2254, %v2252, %v1732
        %v2260 = vsel %vm2254, %v2253, %v1734
        %v2261 = vsel %vm2241, %v1814, %v1916
        %v2262 = vsel %vm2241, %v1816, %v1918
        %v2263 = vsel %vm2241, %v1818, %v1920
        %v2264 = vsel %vm2241, %v1820, %v1922
        %v2265 = vsel %vm2241, %v1822, %v1924
        %v2266 = vsel %vm2241, %v1824, %v1926
        %v2267 = vsel %vm901, %v2261, %v1970
        %v2268 = vsel %vm901, %v2262, %v1972
        %v2269 = vsel %vm901, %v2263, %v1974
        %v2270 = vsel %vm901, %v2264, %v1976
        %v2271 = vsel %vm901, %v2265, %v1978
        %v2272 = vsel %vm901, %v2266, %v1980
        %v2273 = vsel %vm2254, %v2267, %v2024
        %v2274 = vsel %vm2254, %v2268, %v2026
        %v2275 = vsel %vm2254, %v2269, %v2028
        %v2276 = vsel %vm2254, %v2270, %v2030
        %v2277 = vsel %vm2254, %v2271, %v2032
        %v2278 = vsel %vm2254, %v2272, %v2034
        %v2279 = vsel %vm2241, %v2066, %v2100
        %v2280 = vsel %vm2241, %v2068, %v2102
        %v2281 = vsel %vm901, %v2279, %v2118
        %v2282 = vsel %vm901, %v2280, %v2120
        %v2283 = vsel %vm2254, %v2281, %v2136
        %v2284 = vsel %vm2254, %v2282, %v2138
        %v2285 = vsel %vm2241, %v2166, %v2200
        %v2286 = vsel %vm2241, %v2168, %v2202
        %v2287 = vsel %vm901, %v2285, %v2218
        %v2288 = vsel %vm901, %v2286, %v2220
        %v2289 = vsel %vm2254, %v2287, %v2236
        %v2290 = vsel %vm2254, %v2288, %v2238
        %v2307 = vcombine.low %v2255, %v2273
        %v2308 = vcombine.low %v2256, %v2274
        %v2310 = vunpack.c.l.s4 1966171168
        %v2311 = vunpack.c.0.s8 %v2310
        %v2312 = vlaneseq
        %v2313 = vshrl.u32 %v2312, 7
        %v2314 = vsub.s32 %v2311, %v2313
        %v2315 = vrot.slane %v2307, %v2314
        %v2317 = vunpack.c.l.s4 1966171168
        %v2318 = vunpack.c.0.s8 %v2317
        %v2319 = vlaneseq
        %v2320 = vshrl.u32 %v2319, 7
        %v2321 = vsub.s32 %v2318, %v2320
        %v2322 = vrot.slane %v2308, %v2321
        %v2323 = vcombine.low %v2315, %v2322
        %v2324 = vcombine.high %v2315, %v2322
        %v2326 = vunpack.c.l.s4 1966171168
        %v2327 = vunpack.c.0.s8 %v2326
        %v2328 = vlaneseq
        %v2329 = vshrl.u32 %v2328, 7
        %v2330 = vsub.s32 %v2327, %v2329
        %v2331 = vrot.slane %v2323, %v2330
        %v2333 = vunpack.c.l.s4 1966171168
        %v2334 = vunpack.c.0.s8 %v2333
        %v2335 = vlaneseq
        %v2336 = vshrl.u32 %v2335, 7
        %v2337 = vsub.s32 %v2334, %v2336
        %v2338 = vrot.slane %v2324, %v2337
        %v2339 = vcombine.high %v2331, %v2331
        %v2340 = vcombine.low %v2257, %v2275
        %v2342 = vunpack.c.l.s4 1966171168
        %v2343 = vunpack.c.0.s8 %v2342
        %v2344 = vlaneseq
        %v2345 = vshrl.u32 %v2344, 7
        %v2346 = vsub.s32 %v2343, %v2345
        %v2347 = vrot.slane %v2340, %v2346
        %v2348 = vcombine.low %v2322, %v2347
        %v2349 = vcombine.high %v2322, %v2347
        %v2351 = vunpack.c.l.s4 1966171168
        %v2352 = vunpack.c.0.s8 %v2351
        %v2353 = vlaneseq
        %v2354 = vshrl.u32 %v2353, 7
        %v2355 = vsub.s32 %v2352, %v2354
        %v2356 = vrot.slane %v2348, %v2355
        %v2358 = vunpack.c.l.s4 1966171168
        %v2359 = vunpack.c.0.s8 %v2358
        %v2360 = vlaneseq
        %v2361 = vshrl.u32 %v2360, 7
        %v2362 = vsub.s32 %v2359, %v2361
        %v2363 = vrot.slane %v2349, %v2362
        %v2364 = vcombine.high %v2356, %v2356
        %v2365 = vcombine.low %v2283, %v2289
        %v2367 = vunpack.c.l.s4 1966171168
        %v2368 = vunpack.c.0.s8 %v2367
        %v2369 = vlaneseq
        %v2370 = vshrl.u32 %v2369, 7
        %v2371 = vsub.s32 %v2368, %v2370
        %v2372 = vrot.slane %v2365, %v2371
        %v2373 = vcombine.low %v2347, %v2372
        %v2374 = vcombine.high %v2347, %v2372
        %v2376 = vunpack.c.l.s4 1966171168
        %v2377 = vunpack.c.0.s8 %v2376
        %v2378 = vlaneseq
        %v2379 = vshrl.u32 %v2378, 7
        %v2380 = vsub.s32 %v2377, %v2379
        %v2381 = vrot.slane %v2373, %v2380
        %v2383 = vunpack.c.l.s4 1966171168
        %v2384 = vunpack.c.0.s8 %v2383
        %v2385 = vlaneseq
        %v2386 = vshrl.u32 %v2385, 7
        %v2387 = vsub.s32 %v2384, %v2386
        %v2388 = vrot.slane %v2374, %v2387
        %v2389 = vcombine.high %v2381, %v2381
        %v2390 = vcombine.low %v2258, %v2276
        %v2391 = vcombine.low %v2259, %v2277
        %v2393 = vunpack.c.l.s4 1966171168
        %v2394 = vunpack.c.0.s8 %v2393
        %v2395 = vlaneseq
        %v2396 = vshrl.u32 %v2395, 7
        %v2397 = vsub.s32 %v2394, %v2396
        %v2398 = vrot.slane %v2390, %v2397
        %v2400 = vunpack.c.l.s4 1966171168
        %v2401 = vunpack.c.0.s8 %v2400
        %v2402 = vlaneseq
        %v2403 = vshrl.u32 %v2402, 7
        %v2404 = vsub.s32 %v2401, %v2403
        %v2405 = vrot.slane %v2391, %v2404
        %v2406 = vcombine.low %v2398, %v2405
        %v2407 = vcombine.high %v2398, %v2405
        %v2409 = vunpack.c.l.s4 1966171168
        %v2410 = vunpack.c.0.s8 %v2409
        %v2411 = vlaneseq
        %v2412 = vshrl.u32 %v2411, 7
        %v2413 = vsub.s32 %v2410, %v2412
        %v2414 = vrot.slane %v2406, %v2413
        %v2416 = vunpack.c.l.s4 1966171168
        %v2417 = vunpack.c.0.s8 %v2416
        %v2418 = vlaneseq
        %v2419 = vshrl.u32 %v2418, 7
        %v2420 = vsub.s32 %v2417, %v2419
        %v2421 = vrot.slane %v2407, %v2420
        %v2422 = vcombine.high %v2414, %v2414
        %v2423 = vcombine.low %v2260, %v2278
        %v2425 = vunpack.c.l.s4 1966171168
        %v2426 = vunpack.c.0.s8 %v2425
        %v2427 = vlaneseq
        %v2428 = vshrl.u32 %v2427, 7
        %v2429 = vsub.s32 %v2426, %v2428
        %v2430 = vrot.slane %v2423, %v2429
        %v2431 = vcombine.low %v2405, %v2430
        %v2432 = vcombine.high %v2405, %v2430
        %v2434 = vunpack.c.l.s4 1966171168
        %v2435 = vunpack.c.0.s8 %v2434
        %v2436 = vlaneseq
        %v2437 = vshrl.u32 %v2436, 7
        %v2438 = vsub.s32 %v2435, %v2437
        %v2439 = vrot.slane %v2431, %v2438
        %v2441 = vunpack.c.l.s4 1966171168
        %v2442 = vunpack.c.0.s8 %v2441
        %v2443 = vlaneseq
        %v2444 = vshrl.u32 %v2443, 7
        %v2445 = vsub.s32 %v2442, %v2444
        %v2446 = vrot.slane %v2432, %v2445
        %v2447 = vcombine.high %v2439, %v2439
        %v2448 = vcombine.low %v2284, %v2290
        %v2450 = vunpack.c.l.s4 1966171168
        %v2451 = vunpack.c.0.s8 %v2450
        %v2452 = vlaneseq
        %v2453 = vshrl.u32 %v2452, 7
        %v2454 = vsub.s32 %v2451, %v2453
        %v2455 = vrot.slane %v2448, %v2454
        %v2456 = vcombine.low %v2430, %v2455
        %v2457 = vcombine.high %v2430, %v2455
        %v2459 = vunpack.c.l.s4 1966171168
        %v2460 = vunpack.c.0.s8 %v2459
        %v2461 = vlaneseq
        %v2462 = vshrl.u32 %v2461, 7
        %v2463 = vsub.s32 %v2460, %v2462
        %v2464 = vrot.slane %v2456, %v2463
        %v2466 = vunpack.c.l.s4 1966171168
        %v2467 = vunpack.c.0.s8 %v2466
        %v2468 = vlaneseq
        %v2469 = vshrl.u32 %v2468, 7
        %v2470 = vsub.s32 %v2467, %v2469
        %v2471 = vrot.slane %v2457, %v2470
        %v2472 = vcombine.high %v2464, %v2464
        %v2473 = vcombine.low %v2331, %v2338
        %v2474 = vcombine.low %v2339, %v2356
        %v2475 = vcombine.low %v2363, %v2364
        %v2476 = vcombine.low %v2381, %v2388
        %v2478 = vunpack.c.l.s4 1966171168
        %v2479 = vunpack.c.0.s8 %v2478
        %v2480 = vlaneseq
        %v2481 = vshrl.u32 %v2480, 7
        %v2482 = vsub.s32 %v2479, %v2481
        %v2483 = vrot.slane %v2473, %v2482
        %v2485 = vunpack.c.l.s4 1966171168
        %v2486 = vunpack.c.0.s8 %v2485
        %v2487 = vlaneseq
        %v2488 = vshrl.u32 %v2487, 7
        %v2489 = vsub.s32 %v2486, %v2488
        %v2490 = vrot.slane %v2474, %v2489
        %v2492 = vunpack.c.l.s4 1966171168
        %v2493 = vunpack.c.0.s8 %v2492
        %v2494 = vlaneseq
        %v2495 = vshrl.u32 %v2494, 7
        %v2496 = vsub.s32 %v2493, %v2495
        %v2497 = vrot.slane %v2475, %v2496
        %v2499 = vunpack.c.l.s4 1966171168
        %v2500 = vunpack.c.0.s8 %v2499
        %v2501 = vlaneseq
        %v2502 = vshrl.u32 %v2501, 7
        %v2503 = vsub.s32 %v2500, %v2502
        %v2504 = vrot.slane %v2476, %v2503
        %v2505 = vcombine.low %v2483, %v2490
        %v2506 = vcombine.high %v2483, %v2490
        %v2507 = vcombine.low %v2497, %v2504
        %v2508 = vcombine.high %v2497, %v2504
        %v2510 = vunpack.c.l.s4 1966171168
        %v2511 = vunpack.c.0.s8 %v2510
        %v2512 = vlaneseq
        %v2513 = vshrl.u32 %v2512, 7
        %v2514 = vsub.s32 %v2511, %v2513
        %v2515 = vrot.slane %v2505, %v2514
        %v2517 = vunpack.c.l.s4 1966171168
        %v2518 = vunpack.c.0.s8 %v2517
        %v2519 = vlaneseq
        %v2520 = vshrl.u32 %v2519, 7
        %v2521 = vsub.s32 %v2518, %v2520
        %v2522 = vrot.slane %v2506, %v2521
        %v2524 = vunpack.c.l.s4 1966171168
        %v2525 = vunpack.c.0.s8 %v2524
        %v2526 = vlaneseq
        %v2527 = vshrl.u32 %v2526, 7
        %v2528 = vsub.s32 %v2525, %v2527
        %v2529 = vrot.slane %v2507, %v2528
        %v2531 = vunpack.c.l.s4 1966171168
        %v2532 = vunpack.c.0.s8 %v2531
        %v2533 = vlaneseq
        %v2534 = vshrl.u32 %v2533, 7
        %v2535 = vsub.s32 %v2532, %v2534
        %v2536 = vrot.slane %v2508, %v2535
        %v2537 = vcombine.low %v2515, %v2529
        %v2538 = vcombine.high %v2515, %v2529
        %v2539 = vcombine.low %v2522, %v2536
        %v2540 = vcombine.high %v2522, %v2536
        %v2541 = vcombine.low %v2389, %v2414
        %v2542 = vcombine.low %v2421, %v2422
        %v2543 = vcombine.low %v2439, %v2446
        %v2544 = vcombine.low %v2447, %v2464
        %v2546 = vunpack.c.l.s4 1966171168
        %v2547 = vunpack.c.0.s8 %v2546
        %v2548 = vlaneseq
        %v2549 = vshrl.u32 %v2548, 7
        %v2550 = vsub.s32 %v2547, %v2549
        %v2551 = vrot.slane %v2541, %v2550
        %v2553 = vunpack.c.l.s4 1966171168
        %v2554 = vunpack.c.0.s8 %v2553
        %v2555 = vlaneseq
        %v2556 = vshrl.u32 %v2555, 7
        %v2557 = vsub.s32 %v2554, %v2556
        %v2558 = vrot.slane %v2542, %v2557
        %v2560 = vunpack.c.l.s4 1966171168
        %v2561 = vunpack.c.0.s8 %v2560
        %v2562 = vlaneseq
        %v2563 = vshrl.u32 %v2562, 7
        %v2564 = vsub.s32 %v2561, %v2563
        %v2565 = vrot.slane %v2543, %v2564
        %v2567 = vunpack.c.l.s4 1966171168
        %v2568 = vunpack.c.0.s8 %v2567
        %v2569 = vlaneseq
        %v2570 = vshrl.u32 %v2569, 7
        %v2571 = vsub.s32 %v2568, %v2570
        %v2572 = vrot.slane %v2544, %v2571
        %v2573 = vcombine.low %v2551, %v2558
        %v2574 = vcombine.high %v2551, %v2558
        %v2575 = vcombine.low %v2565, %v2572
        %v2576 = vcombine.high %v2565, %v2572
        %v2578 = vunpack.c.l.s4 1966171168
        %v2579 = vunpack.c.0.s8 %v2578
        %v2580 = vlaneseq
        %v2581 = vshrl.u32 %v2580, 7
        %v2582 = vsub.s32 %v2579, %v2581
        %v2583 = vrot.slane %v2573, %v2582
        %v2585 = vunpack.c.l.s4 1966171168
        %v2586 = vunpack.c.0.s8 %v2585
        %v2587 = vlaneseq
        %v2588 = vshrl.u32 %v2587, 7
        %v2589 = vsub.s32 %v2586, %v2588
        %v2590 = vrot.slane %v2574, %v2589
        %v2592 = vunpack.c.l.s4 1966171168
        %v2593 = vunpack.c.0.s8 %v2592
        %v2594 = vlaneseq
        %v2595 = vshrl.u32 %v2594, 7
        %v2596 = vsub.s32 %v2593, %v2595
        %v2597 = vrot.slane %v2575, %v2596
        %v2599 = vunpack.c.l.s4 1966171168
        %v2600 = vunpack.c.0.s8 %v2599
        %v2601 = vlaneseq
        %v2602 = vshrl.u32 %v2601, 7
        %v2603 = vsub.s32 %v2600, %v2602
        %v2604 = vrot.slane %v2576, %v2603
        %v2605 = vcombine.low %v2583, %v2597
        %v2606 = vcombine.high %v2583, %v2597
        %v2607 = vcombine.low %v2590, %v2604
        %v2608 = vcombine.high %v2590, %v2604
        %v2609 = vcombine.low %v2471, %v2472
        %v2611 = vunpack.c.l.s4 1966171168
        %v2612 = vunpack.c.0.s8 %v2611
        %v2613 = vlaneseq
        %v2614 = vshrl.u32 %v2613, 7
        %v2615 = vsub.s32 %v2612, %v2614
        %v2616 = vrot.slane %v2609, %v2615
        %v2617 = vcombine.high %v2616, %v2616
        %v2619 = vunpack.c.l.s4 1966171168
        %v2620 = vunpack.c.0.s8 %v2619
        %v2621 = vlaneseq
        %v2622 = vshrl.u32 %v2621, 7
        %v2623 = vsub.s32 %v2620, %v2622
        %v2624 = vrot.slane %v2616, %v2623
        %v2626 = vunpack.c.l.s4 1966171168
        %v2627 = vunpack.c.0.s8 %v2626
        %v2628 = vlaneseq
        %v2629 = vshrl.u32 %v2628, 7
        %v2630 = vsub.s32 %v2627, %v2629
        %v2631 = vrot.slane %v2617, %v2630
        %v2632 = vcombine.high %v2624, %v2624
        %v2633 = vcombine.high %v2631, %v2631
        %v2646 = vpack.c.bf16 %v2605, %v2537
        %v2647 = vpack.c.bf16 %v2607, %v2539
        %v2648 = vpack.c.bf16 %v2606, %v2538
        %v2649 = vpack.c.bf16 %v2608, %v2540
        %v2650 = vpack.c.bf16 %v2624, %v2624
        %v2651 = vpack.c.bf16 %v2631, %v2631
        %v2652 = vpack.c.bf16 %v2632, %v2632
        %v2653 = vpack.c.bf16 %v2633, %v2633
        %v2655 = vlaneseq
        %v2656 = vshrl.u32 %v2655, 7
        %v2657 = vsub.s32 0, %v2656
        %v2658 = vrot.slane %v753, %v2657
        %v2724 = vunpack.c.l.b16 %v616
        %v2725 = vunpack.c.l.b16 %v617
        %v2726 = vunpack.c.l.b16 %v618
        %v2727 = vunpack.c.l.b16 %v619
        %v2728 = vunpack.c.l.b16 %v620
        %v2729 = vunpack.c.l.b16 %v621
        %v2730 = vunpack.c.l.b16 %v622
        %v2731 = vunpack.c.l.b16 %v623
        %v2732 = vunpack.c.l.b16 %v624
        %v2733 = vunpack.c.l.b16 %v625
        %v2734 = vunpack.c.l.b16 %v626
        %v2735 = vunpack.c.l.b16 %v627
        %v2736 = vunpack.c.l.b16 %v628
        %v2737 = vunpack.c.l.b16 %v629
        %v2738 = vunpack.c.l.b16 %v630
        %v2739 = vunpack.c.l.b16 %v631
        %v2740 = vunpack.c.l.b16 %v632
        %v2741 = vunpack.c.l.b16 %v633
        %v2742 = vunpack.c.l.b16 %v634
        %v2743 = vunpack.c.l.b16 %v635
        %v2744 = vunpack.c.l.b16 %v636
        %v2745 = vunpack.c.l.b16 %v637
        %v2746 = vunpack.c.l.b16 %v638
        %v2747 = vunpack.c.l.b16 %v639
        %v2748 = vunpack.c.l.b16 %v640
        %v2749 = vunpack.c.l.b16 %v641
        %v2750 = vunpack.c.l.b16 %v642
        %v2751 = vunpack.c.l.b16 %v643
        %v2752 = vunpack.c.l.b16 %v644
        %v2753 = vunpack.c.l.b16 %v645
        %v2754 = vunpack.c.l.b16 %v646
        %v2755 = vunpack.c.l.b16 %v647
        %v2756 = vunpack.c.l.b16 %v648
        %v2757 = vunpack.c.l.b16 %v649
        %v2758 = vunpack.c.l.b16 %v650
        %v2759 = vunpack.c.l.b16 %v651
        %v2760 = vunpack.c.l.b16 %v652
        %v2761 = vunpack.c.l.b16 %v653
        %v2762 = vunpack.c.l.b16 %v654
        %v2763 = vunpack.c.l.b16 %v655
        %v2764 = vunpack.c.l.b16 %v656
        %v2765 = vunpack.c.l.b16 %v657
        %v2766 = vunpack.c.l.b16 %v658
        %v2767 = vunpack.c.l.b16 %v659
        %v2768 = vunpack.c.l.b16 %v660
        %v2769 = vunpack.c.l.b16 %v661
        %v2770 = vunpack.c.l.b16 %v662
        %v2771 = vunpack.c.l.b16 %v663
        %v2772 = vunpack.c.l.b16 %v664
        %v2773 = vunpack.c.l.b16 %v665
        %v2774 = vunpack.c.l.b16 %v666
        %v2775 = vunpack.c.l.b16 %v667
        %v2776 = vunpack.c.l.b16 %v668
        %v2777 = vunpack.c.l.b16 %v669
        %v2778 = vunpack.c.l.b16 %v670
        %v2779 = vunpack.c.l.b16 %v671
        %v2780 = vunpack.c.l.b16 %v672
        %v2781 = vunpack.c.l.b16 %v673
        %v2782 = vunpack.c.l.b16 %v674
        %v2783 = vunpack.c.l.b16 %v675
        %v2784 = vunpack.c.l.b16 %v676
        %v2785 = vunpack.c.l.b16 %v677
        %v2786 = vunpack.c.l.b16 %v678
        %v2787 = vunpack.c.l.b16 %v679
        %v2788 = vpack.c.b16 %v2725, %v2724
        %v2789 = vpack.c.b16 %v2727, %v2726
        %v2790 = vpack.c.b16 %v2729, %v2728
        %v2791 = vpack.c.b16 %v2731, %v2730
        %v2792 = vpack.c.b16 %v2733, %v2732
        %v2793 = vpack.c.b16 %v2735, %v2734
        %v2794 = vpack.c.b16 %v2737, %v2736
        %v2795 = vpack.c.b16 %v2739, %v2738
        %v2796 = vpack.c.b16 %v2741, %v2740
        %v2797 = vpack.c.b16 %v2743, %v2742
        %v2798 = vpack.c.b16 %v2745, %v2744
        %v2799 = vpack.c.b16 %v2747, %v2746
        %v2800 = vpack.c.b16 %v2749, %v2748
        %v2801 = vpack.c.b16 %v2751, %v2750
        %v2802 = vpack.c.b16 %v2753, %v2752
        %v2803 = vpack.c.b16 %v2755, %v2754
        %v2804 = vpack.c.b16 %v2757, %v2756
        %v2805 = vpack.c.b16 %v2759, %v2758
        %v2806 = vpack.c.b16 %v2761, %v2760
        %v2807 = vpack.c.b16 %v2763, %v2762
        %v2808 = vpack.c.b16 %v2765, %v2764
        %v2809 = vpack.c.b16 %v2767, %v2766
        %v2810 = vpack.c.b16 %v2769, %v2768
        %v2811 = vpack.c.b16 %v2771, %v2770
        %v2812 = vpack.c.b16 %v2773, %v2772
        %v2813 = vpack.c.b16 %v2775, %v2774
        %v2814 = vpack.c.b16 %v2777, %v2776
        %v2815 = vpack.c.b16 %v2779, %v2778
        %v2816 = vpack.c.b16 %v2781, %v2780
        %v2817 = vpack.c.b16 %v2783, %v2782
        %v2818 = vpack.c.b16 %v2785, %v2784
        %v2819 = vpack.c.b16 %v2787, %v2786
        %2852 = vmatprep.subr.bf16.mxu0 0
        %2853 = vmatpush1.bf16.msra.mxu0 %v2788
        %2854 = vmatprep.subr.bf16.mxu0 0
        %2855 = vmatpush1.bf16.msra.mxu0 %v2789
        %2856 = vmatprep.subr.bf16.mxu0 0
        %2857 = vmatpush1.bf16.msra.mxu0 %v2790
        %2858 = vmatprep.subr.bf16.mxu0 0
        %2859 = vmatpush1.bf16.msra.mxu0 %v2791
        %2860 = vmatprep.subr.bf16.mxu0 0
        %2861 = vmatpush1.bf16.msra.mxu0 %v2792
        %2862 = vmatprep.subr.bf16.mxu0 0
        %2863 = vmatpush1.bf16.msra.mxu0 %v2793
        %2864 = vmatprep.subr.bf16.mxu0 0
        %2865 = vmatpush1.bf16.msra.mxu0 %v2794
        %2866 = vmatprep.subr.bf16.mxu0 0
        %2867 = vmatpush1.bf16.msra.mxu0 %v2795
        %2868 = vmatprep.subr.bf16.mxu0 0
        %2869 = vmatpush1.bf16.msra.mxu0 %v2796
        %2870 = vmatprep.subr.bf16.mxu0 0
        %2871 = vmatpush1.bf16.msra.mxu0 %v2797
        %2872 = vmatprep.subr.bf16.mxu0 0
        %2873 = vmatpush1.bf16.msra.mxu0 %v2798
        %2874 = vmatprep.subr.bf16.mxu0 0
        %2875 = vmatpush1.bf16.msra.mxu0 %v2799
        %2876 = vmatprep.subr.bf16.mxu0 0
        %2877 = vmatpush1.bf16.msra.mxu0 %v2800
        %2878 = vmatprep.subr.bf16.mxu0 0
        %2879 = vmatpush1.bf16.msra.mxu0 %v2801
        %2880 = vmatprep.subr.bf16.mxu0 0
        %2881 = vmatpush1.bf16.msra.mxu0 %v2802
        %2882 = vmatprep.subr.bf16.mxu0 0
        %2883 = vmatpush1.bf16.msra.mxu0 %v2803
        %2884 = vmatprep.mubr.bf16.mxu0 %v2647
        %2885 = vmatmul.mubr.bf16.gmra.mrb[0].mxu0 %v2646
        %v2886 = vpop.f32.mrb[0].mxu0
        %v2887 = vadd.f32 %v2658, %v2886
        %v2888 = vpop.f32.mrb[0].mxu0
        %v2889 = vpop.f32.mrb[0].mxu0
        %v2890 = vadd.f32 %v2658, %v2889
        %v2891 = vpop.f32.mrb[0].mxu0
        %2892 = vmatprep.mubr.bf16.mxu0 %v2651
        %2893 = vmatmul.mubr.bf16.gmra.mrb[0].mxu0 %v2650
        %v2894 = vpop.f32.mrb[0].mxu0
        %v2895 = vadd.f32 %v2658, %v2894
        %v2896 = vpop.f32.mrb[0].mxu0
        %v2897 = vpop.f32.mrb[0].mxu0
        %v2898 = vpop.f32.mrb[0].mxu0
        %2899 = vdwg.mxu0
        %2900 = vmatprep.subr.bf16.mxu0 0
        %2901 = vmatpush1.bf16.msra.mxu0 %v2804
        %2902 = vmatprep.subr.bf16.mxu0 0
        %2903 = vmatpush1.bf16.msra.mxu0 %v2805
        %2904 = vmatprep.subr.bf16.mxu0 0
        %2905 = vmatpush1.bf16.msra.mxu0 %v2806
        %2906 = vmatprep.subr.bf16.mxu0 0
        %2907 = vmatpush1.bf16.msra.mxu0 %v2807
        %2908 = vmatprep.subr.bf16.mxu0 0
        %2909 = vmatpush1.bf16.msra.mxu0 %v2808
        %2910 = vmatprep.subr.bf16.mxu0 0
        %2911 = vmatpush1.bf16.msra.mxu0 %v2809
        %2912 = vmatprep.subr.bf16.mxu0 0
        %2913 = vmatpush1.bf16.msra.mxu0 %v2810
        %2914 = vmatprep.subr.bf16.mxu0 0
        %2915 = vmatpush1.bf16.msra.mxu0 %v2811
        %2916 = vmatprep.subr.bf16.mxu0 0
        %2917 = vmatpush1.bf16.msra.mxu0 %v2812
        %2918 = vmatprep.subr.bf16.mxu0 0
        %2919 = vmatpush1.bf16.msra.mxu0 %v2813
        %2920 = vmatprep.subr.bf16.mxu0 0
        %2921 = vmatpush1.bf16.msra.mxu0 %v2814
        %2922 = vmatprep.subr.bf16.mxu0 0
        %2923 = vmatpush1.bf16.msra.mxu0 %v2815
        %2924 = vmatprep.subr.bf16.mxu0 0
        %2925 = vmatpush1.bf16.msra.mxu0 %v2816
        %2926 = vmatprep.subr.bf16.mxu0 0
        %2927 = vmatpush1.bf16.msra.mxu0 %v2817
        %2928 = vmatprep.subr.bf16.mxu0 0
        %2929 = vmatpush1.bf16.msra.mxu0 %v2818
        %2930 = vmatprep.subr.bf16.mxu0 0
        %2931 = vmatpush1.bf16.msra.mxu0 %v2819
        %2932 = vmatprep.mubr.bf16.mxu0 %v2649
        %2933 = vmatmul.mubr.bf16.gmra.mrb[0].mxu0 %v2648
        %v2934 = vpop.f32.mrb[0].mxu0
        %v2935 = vadd.f32 %v2887, %v2934
        %v2936 = vpop.f32.mrb[0].mxu0
        %v2937 = vpop.f32.mrb[0].mxu0
        %v2938 = vadd.f32 %v2890, %v2937
        %v2939 = vpop.f32.mrb[0].mxu0
        %2940 = vmatprep.mubr.bf16.mxu0 %v2653
        %2941 = vmatmul.mubr.bf16.gmra.mrb[0].mxu0 %v2652
        %v2942 = vpop.f32.mrb[0].mxu0
        %v2943 = vadd.f32 %v2895, %v2942
        %v2944 = vpop.f32.mrb[0].mxu0
        %v2945 = vpop.f32.mrb[0].mxu0
        %v2946 = vpop.f32.mrb[0].mxu0
        %2947 = vdwg.mxu0
        %v2948 = vmax.f32 %v2935, 0.0
        %v2949 = vmax.f32 %v2938, 0.0
        %v2950 = vmax.f32 %v2943, 0.0
        %v2954 = vcombine.high %v2948, %v2948
        %v2956 = vunpack.c.l.s4 1966171168
        %v2957 = vunpack.c.0.s8 %v2956
        %v2958 = vlaneseq
        %v2959 = vshrl.u32 %v2958, 7
        %v2960 = vsub.s32 %v2957, %v2959
        %v2961 = vrot.slane %v2948, %v2960
        %v2963 = vunpack.c.l.s4 1966171168
        %v2964 = vunpack.c.0.s8 %v2963
        %v2965 = vlaneseq
        %v2966 = vshrl.u32 %v2965, 7
        %v2967 = vsub.s32 %v2964, %v2966
        %v2968 = vrot.slane %v2954, %v2967
        %v2969 = vcombine.high %v2961, %v2961
        %v2970 = vcombine.high %v2968, %v2968
        %v2972 = vunpack.c.l.s4 1966171168
        %v2973 = vunpack.c.0.s8 %v2972
        %v2974 = vlaneseq
        %v2975 = vshrl.u32 %v2974, 7
        %v2976 = vsub.s32 %v2973, %v2975
        %v2977 = vrot.slane %v2961, %v2976
        %v2979 = vunpack.c.l.s4 1966171168
        %v2980 = vunpack.c.0.s8 %v2979
        %v2981 = vlaneseq
        %v2982 = vshrl.u32 %v2981, 7
        %v2983 = vsub.s32 %v2980, %v2982
        %v2984 = vrot.slane %v2968, %v2983
        %v2986 = vunpack.c.l.s4 1966171168
        %v2987 = vunpack.c.0.s8 %v2986
        %v2988 = vlaneseq
        %v2989 = vshrl.u32 %v2988, 7
        %v2990 = vsub.s32 %v2987, %v2989
        %v2991 = vrot.slane %v2969, %v2990
        %v2993 = vunpack.c.l.s4 1966171168
        %v2994 = vunpack.c.0.s8 %v2993
        %v2995 = vlaneseq
        %v2996 = vshrl.u32 %v2995, 7
        %v2997 = vsub.s32 %v2994, %v2996
        %v2998 = vrot.slane %v2970, %v2997
        %v2999 = vcombine.high %v2977, %v2977
        %v3000 = vcombine.high %v2984, %v2984
        %v3001 = vcombine.high %v2991, %v2991
        %v3002 = vcombine.high %v2998, %v2998
        %v3003 = vcombine.high %v2949, %v2949
        %v3005 = vunpack.c.l.s4 1966171168
        %v3006 = vunpack.c.0.s8 %v3005
        %v3007 = vlaneseq
        %v3008 = vshrl.u32 %v3007, 7
        %v3009 = vsub.s32 %v3006, %v3008
        %v3010 = vrot.slane %v2949, %v3009
        %v3012 = vunpack.c.l.s4 1966171168
        %v3013 = vunpack.c.0.s8 %v3012
        %v3014 = vlaneseq
        %v3015 = vshrl.u32 %v3014, 7
        %v3016 = vsub.s32 %v3013, %v3015
        %v3017 = vrot.slane %v3003, %v3016
        %v3018 = vcombine.high %v3010, %v3010
        %v3019 = vcombine.high %v3017, %v3017
        %v3021 = vunpack.c.l.s4 1966171168
        %v3022 = vunpack.c.0.s8 %v3021
        %v3023 = vlaneseq
        %v3024 = vshrl.u32 %v3023, 7
        %v3025 = vsub.s32 %v3022, %v3024
        %v3026 = vrot.slane %v3010, %v3025
        %v3028 = vunpack.c.l.s4 1966171168
        %v3029 = vunpack.c.0.s8 %v3028
        %v3030 = vlaneseq
        %v3031 = vshrl.u32 %v3030, 7
        %v3032 = vsub.s32 %v3029, %v3031
        %v3033 = vrot.slane %v3017, %v3032
        %v3035 = vunpack.c.l.s4 1966171168
        %v3036 = vunpack.c.0.s8 %v3035
        %v3037 = vlaneseq
        %v3038 = vshrl.u32 %v3037, 7
        %v3039 = vsub.s32 %v3036, %v3038
        %v3040 = vrot.slane %v3018, %v3039
        %v3042 = vunpack.c.l.s4 1966171168
        %v3043 = vunpack.c.0.s8 %v3042
        %v3044 = vlaneseq
        %v3045 = vshrl.u32 %v3044, 7
        %v3046 = vsub.s32 %v3043, %v3045
        %v3047 = vrot.slane %v3019, %v3046
        %v3048 = vcombine.high %v3026, %v3026
        %v3049 = vcombine.high %v3033, %v3033
        %v3050 = vcombine.high %v3040, %v3040
        %v3051 = vcombine.high %v3047, %v3047
        %v3053 = vunpack.c.l.s4 1966171168
        %v3054 = vunpack.c.0.s8 %v3053
        %v3055 = vlaneseq
        %v3056 = vshrl.u32 %v3055, 7
        %v3057 = vsub.s32 %v3054, %v3056
        %v3058 = vrot.slane %v2950, %v3057
        %v3059 = vcombine.high %v3058, %v3058
        %v3061 = vunpack.c.l.s4 1966171168
        %v3062 = vunpack.c.0.s8 %v3061
        %v3063 = vlaneseq
        %v3064 = vshrl.u32 %v3063, 7
        %v3065 = vsub.s32 %v3062, %v3064
        %v3066 = vrot.slane %v3058, %v3065
        %v3068 = vunpack.c.l.s4 1966171168
        %v3069 = vunpack.c.0.s8 %v3068
        %v3070 = vlaneseq
        %v3071 = vshrl.u32 %v3070, 7
        %v3072 = vsub.s32 %v3069, %v3071
        %v3073 = vrot.slane %v3059, %v3072
        %v3074 = vcombine.low %v2977, %v3040
        %v3076 = vunpack.c.l.s4 1966171168
        %v3077 = vunpack.c.0.s8 %v3076
        %v3078 = vlaneseq
        %v3079 = vshrl.u32 %v3078, 7
        %v3080 = vsub.s32 %v3077, %v3079
        %v3081 = vrot.slane %v3074, %v3080
        %v3083 = vunpack.c.l.s4 1966171168
        %v3084 = vunpack.c.0.s8 %v3083
        %v3085 = vlaneseq
        %v3086 = vshrl.u32 %v3085, 7
        %v3087 = vsub.s32 %v3084, %v3086
        %v3088 = vrot.slane %v3081, %v3087
        %v3090 = vcombine.low %v2991, %v3048
        %v3092 = vunpack.c.l.s4 1966171168
        %v3093 = vunpack.c.0.s8 %v3092
        %v3094 = vlaneseq
        %v3095 = vshrl.u32 %v3094, 7
        %v3096 = vsub.s32 %v3093, %v3095
        %v3097 = vrot.slane %v3090, %v3096
        %v3099 = vunpack.c.l.s4 1966171168
        %v3100 = vunpack.c.0.s8 %v3099
        %v3101 = vlaneseq
        %v3102 = vshrl.u32 %v3101, 7
        %v3103 = vsub.s32 %v3100, %v3102
        %v3104 = vrot.slane %v3097, %v3103
        %3105 = vrot.lane.b32.xlu0 %v3104, 64
        %v3106 = vpop.permute.xlu0 %3105
        %v3108 = vcombine.low %v2999, %v3050
        %v3110 = vunpack.c.l.s4 1966171168
        %v3111 = vunpack.c.0.s8 %v3110
        %v3112 = vlaneseq
        %v3113 = vshrl.u32 %v3112, 7
        %v3114 = vsub.s32 %v3111, %v3113
        %v3115 = vrot.slane %v3108, %v3114
        %v3117 = vunpack.c.l.s4 1966171168
        %v3118 = vunpack.c.0.s8 %v3117
        %v3119 = vlaneseq
        %v3120 = vshrl.u32 %v3119, 7
        %v3121 = vsub.s32 %v3118, %v3120
        %v3122 = vrot.slane %v3115, %v3121
        %v3124 = vcombine.low %v3001, %v3033
        %v3126 = vunpack.c.l.s4 1966171168
        %v3127 = vunpack.c.0.s8 %v3126
        %v3128 = vlaneseq
        %v3129 = vshrl.u32 %v3128, 7
        %v3130 = vsub.s32 %v3127, %v3129
        %v3131 = vrot.slane %v3124, %v3130
        %v3133 = vunpack.c.l.s4 1966171168
        %v3134 = vunpack.c.0.s8 %v3133
        %v3135 = vlaneseq
        %v3136 = vshrl.u32 %v3135, 7
        %v3137 = vsub.s32 %v3134, %v3136
        %v3138 = vrot.slane %v3131, %v3137
        %3139 = vrot.lane.b32.xlu0 %v3138, 64
        %v3140 = vpop.permute.xlu0 %3139
        %v3142 = vcombine.low %v2984, %v3047
        %v3144 = vunpack.c.l.s4 1966171168
        %v3145 = vunpack.c.0.s8 %v3144
        %v3146 = vlaneseq
        %v3147 = vshrl.u32 %v3146, 7
        %v3148 = vsub.s32 %v3145, %v3147
        %v3149 = vrot.slane %v3142, %v3148
        %v3151 = vunpack.c.l.s4 1966171168
        %v3152 = vunpack.c.0.s8 %v3151
        %v3153 = vlaneseq
        %v3154 = vshrl.u32 %v3153, 7
        %v3155 = vsub.s32 %v3152, %v3154
        %v3156 = vrot.slane %v3149, %v3155
        %v3158 = vcombine.low %v2998, %v3049
        %v3160 = vunpack.c.l.s4 1966171168
        %v3161 = vunpack.c.0.s8 %v3160
        %v3162 = vlaneseq
        %v3163 = vshrl.u32 %v3162, 7
        %v3164 = vsub.s32 %v3161, %v3163
        %v3165 = vrot.slane %v3158, %v3164
        %v3167 = vunpack.c.l.s4 1966171168
        %v3168 = vunpack.c.0.s8 %v3167
        %v3169 = vlaneseq
        %v3170 = vshrl.u32 %v3169, 7
        %v3171 = vsub.s32 %v3168, %v3170
        %v3172 = vrot.slane %v3165, %v3171
        %3173 = vrot.lane.b32.xlu0 %v3172, 64
        %v3174 = vpop.permute.xlu0 %3173
        %v3176 = vcombine.low %v3000, %v3051
        %v3178 = vunpack.c.l.s4 1966171168
        %v3179 = vunpack.c.0.s8 %v3178
        %v3180 = vlaneseq
        %v3181 = vshrl.u32 %v3180, 7
        %v3182 = vsub.s32 %v3179, %v3181
        %v3183 = vrot.slane %v3176, %v3182
        %v3185 = vunpack.c.l.s4 1966171168
        %v3186 = vunpack.c.0.s8 %v3185
        %v3187 = vlaneseq
        %v3188 = vshrl.u32 %v3187, 7
        %v3189 = vsub.s32 %v3186, %v3188
        %v3190 = vrot.slane %v3183, %v3189
        %v3192 = vcombine.low %v3002, %v3066
        %v3194 = vunpack.c.l.s4 1966171168
        %v3195 = vunpack.c.0.s8 %v3194
        %v3196 = vlaneseq
        %v3197 = vshrl.u32 %v3196, 7
        %v3198 = vsub.s32 %v3195, %v3197
        %v3199 = vrot.slane %v3192, %v3198
        %v3201 = vunpack.c.l.s4 1966171168
        %v3202 = vunpack.c.0.s8 %v3201
        %v3203 = vlaneseq
        %v3204 = vshrl.u32 %v3203, 7
        %v3205 = vsub.s32 %v3202, %v3204
        %v3206 = vrot.slane %v3199, %v3205
        %3207 = vrot.lane.b32.xlu0 %v3206, 64
        %v3208 = vpop.permute.xlu0 %3207
        %v3210 = vcombine.low %v3026, %v3073
        %v3212 = vunpack.c.l.s4 1966171168
        %v3213 = vunpack.c.0.s8 %v3212
        %v3214 = vlaneseq
        %v3215 = vshrl.u32 %v3214, 7
        %v3216 = vsub.s32 %v3213, %v3215
        %v3217 = vrot.slane %v3210, %v3216
        %v3219 = vunpack.c.l.s4 1966171168
        %v3220 = vunpack.c.0.s8 %v3219
        %v3221 = vlaneseq
        %v3222 = vshrl.u32 %v3221, 7
        %v3223 = vsub.s32 %v3220, %v3222
        %v3224 = vrot.slane %v3217, %v3223
        %v3226 = vsel %vm901, %v3088, %v3106
        %v3227 = vsel %vm901, %v3122, %v3140
        %v3228 = vsel %vm901, %v3156, %v3174
        %v3229 = vsel %vm901, %v3190, %v3208
        %v3230 = vpack.c.bf16 %v3226, %v3226
        %v3231 = vpack.c.bf16 %v3227, %v3227
        %v3232 = vpack.c.bf16 %v3228, %v3228
        %v3233 = vpack.c.bf16 %v3229, %v3229
        %v3234 = vpack.c.bf16 %v3224, %v3224
        %v3236 = vlaneseq
        %v3237 = vshrl.u32 %v3236, 7
        %v3238 = vsub.s32 0, %v3237
        %v3239 = vrot.slane %v754, %v3238
        %v3313 = vunpack.c.l.b16 %v680
        %v3314 = vunpack.c.l.b16 %v681
        %v3315 = vunpack.c.l.b16 %v682
        %v3316 = vunpack.c.l.b16 %v683
        %v3317 = vunpack.c.l.b16 %v684
        %v3318 = vunpack.c.l.b16 %v685
        %v3319 = vunpack.c.l.b16 %v686
        %v3320 = vunpack.c.l.b16 %v687
        %v3321 = vunpack.c.l.b16 %v688
        %v3322 = vunpack.c.l.b16 %v689
        %v3323 = vunpack.c.l.b16 %v690
        %v3324 = vunpack.c.l.b16 %v691
        %v3325 = vunpack.c.l.b16 %v692
        %v3326 = vunpack.c.l.b16 %v693
        %v3327 = vunpack.c.l.b16 %v694
        %v3328 = vunpack.c.l.b16 %v695
        %v3329 = vunpack.c.l.b16 %v696
        %v3330 = vunpack.c.l.b16 %v697
        %v3331 = vunpack.c.l.b16 %v698
        %v3332 = vunpack.c.l.b16 %v699
        %v3333 = vunpack.c.l.b16 %v700
        %v3334 = vunpack.c.l.b16 %v701
        %v3335 = vunpack.c.l.b16 %v702
        %v3336 = vunpack.c.l.b16 %v703
        %v3337 = vunpack.c.l.b16 %v704
        %v3338 = vunpack.c.l.b16 %v705
        %v3339 = vunpack.c.l.b16 %v706
        %v3340 = vunpack.c.l.b16 %v707
        %v3341 = vunpack.c.l.b16 %v708
        %v3342 = vunpack.c.l.b16 %v709
        %v3343 = vunpack.c.l.b16 %v710
        %v3344 = vunpack.c.l.b16 %v711
        %v3345 = vunpack.c.l.b16 %v712
        %v3346 = vunpack.c.l.b16 %v713
        %v3347 = vunpack.c.l.b16 %v714
        %v3348 = vunpack.c.l.b16 %v715
        %v3349 = vunpack.c.l.b16 %v716
        %v3350 = vunpack.c.l.b16 %v717
        %v3351 = vunpack.c.l.b16 %v718
        %v3352 = vunpack.c.l.b16 %v719
        %v3353 = vunpack.c.l.b16 %v720
        %v3354 = vunpack.c.l.b16 %v721
        %v3355 = vunpack.c.l.b16 %v722
        %v3356 = vunpack.c.l.b16 %v723
        %v3357 = vunpack.c.l.b16 %v724
        %v3358 = vunpack.c.l.b16 %v725
        %v3359 = vunpack.c.l.b16 %v726
        %v3360 = vunpack.c.l.b16 %v727
        %v3361 = vunpack.c.l.b16 %v728
        %v3362 = vunpack.c.l.b16 %v729
        %v3363 = vunpack.c.l.b16 %v730
        %v3364 = vunpack.c.l.b16 %v731
        %v3365 = vunpack.c.l.b16 %v732
        %v3366 = vunpack.c.l.b16 %v733
        %v3367 = vunpack.c.l.b16 %v734
        %v3368 = vunpack.c.l.b16 %v735
        %v3369 = vunpack.c.l.b16 %v736
        %v3370 = vunpack.c.l.b16 %v737
        %v3371 = vunpack.c.l.b16 %v738
        %v3372 = vunpack.c.l.b16 %v739
        %v3373 = vunpack.c.l.b16 %v740
        %v3374 = vunpack.c.l.b16 %v741
        %v3375 = vunpack.c.l.b16 %v742
        %v3376 = vunpack.c.l.b16 %v743
        %v3377 = vunpack.c.l.b16 %v744
        %v3378 = vunpack.c.l.b16 %v745
        %v3379 = vunpack.c.l.b16 %v746
        %v3380 = vunpack.c.l.b16 %v747
        %v3381 = vunpack.c.l.b16 %v748
        %v3382 = vunpack.c.l.b16 %v749
        %v3383 = vunpack.c.l.b16 %v750
        %v3384 = vunpack.c.l.b16 %v751
        %v3385 = vpack.c.b16 %v3314, %v3313
        %v3386 = vpack.c.b16 %v3316, %v3315
        %v3387 = vpack.c.b16 %v3318, %v3317
        %v3388 = vpack.c.b16 %v3320, %v3319
        %v3389 = vpack.c.b16 %v3322, %v3321
        %v3390 = vpack.c.b16 %v3324, %v3323
        %v3391 = vpack.c.b16 %v3326, %v3325
        %v3392 = vpack.c.b16 %v3328, %v3327
        %v3393 = vpack.c.b16 %v3330, %v3329
        %v3394 = vpack.c.b16 %v3332, %v3331
        %v3395 = vpack.c.b16 %v3334, %v3333
        %v3396 = vpack.c.b16 %v3336, %v3335
        %v3397 = vpack.c.b16 %v3338, %v3337
        %v3398 = vpack.c.b16 %v3340, %v3339
        %v3399 = vpack.c.b16 %v3342, %v3341
        %v3400 = vpack.c.b16 %v3344, %v3343
        %v3401 = vpack.c.b16 %v3346, %v3345
        %v3402 = vpack.c.b16 %v3348, %v3347
        %v3403 = vpack.c.b16 %v3350, %v3349
        %v3404 = vpack.c.b16 %v3352, %v3351
        %v3405 = vpack.c.b16 %v3354, %v3353
        %v3406 = vpack.c.b16 %v3356, %v3355
        %v3407 = vpack.c.b16 %v3358, %v3357
        %v3408 = vpack.c.b16 %v3360, %v3359
        %v3409 = vpack.c.b16 %v3362, %v3361
        %v3410 = vpack.c.b16 %v3364, %v3363
        %v3411 = vpack.c.b16 %v3366, %v3365
        %v3412 = vpack.c.b16 %v3368, %v3367
        %v3413 = vpack.c.b16 %v3370, %v3369
        %v3414 = vpack.c.b16 %v3372, %v3371
        %v3415 = vpack.c.b16 %v3374, %v3373
        %v3416 = vpack.c.b16 %v3376, %v3375
        %v3417 = vpack.c.b16 %v3378, %v3377
        %v3418 = vpack.c.b16 %v3380, %v3379
        %v3419 = vpack.c.b16 %v3382, %v3381
        %v3420 = vpack.c.b16 %v3384, %v3383
        %v3458 = vsel %vm901, %v3234, 0
        %3460 = vmatprep.subr.bf16.mxu0 0
        %3461 = vmatpush1.bf16.msra.mxu0 %v3385
        %3462 = vmatprep.subr.bf16.mxu0 0
        %3463 = vmatpush1.bf16.msra.mxu0 %v3386
        %3464 = vmatprep.subr.bf16.mxu0 0
        %3465 = vmatpush1.bf16.msra.mxu0 %v3387
        %3466 = vmatprep.subr.bf16.mxu0 0
        %3467 = vmatpush1.bf16.msra.mxu0 %v3388
        %3468 = vmatprep.subr.bf16.mxu0 0
        %3469 = vmatpush1.bf16.msra.mxu0 %v3389
        %3470 = vmatprep.subr.bf16.mxu0 0
        %3471 = vmatpush1.bf16.msra.mxu0 %v3390
        %3472 = vmatprep.subr.bf16.mxu0 0
        %3473 = vmatpush1.bf16.msra.mxu0 %v3391
        %3474 = vmatprep.subr.bf16.mxu0 0
        %3475 = vmatpush1.bf16.msra.mxu0 %v3392
        %3476 = vmatprep.subr.bf16.mxu0 0
        %3477 = vmatpush1.bf16.msra.mxu0 %v3393
        %3478 = vmatprep.subr.bf16.mxu0 0
        %3479 = vmatpush1.bf16.msra.mxu0 %v3394
        %3480 = vmatprep.subr.bf16.mxu0 0
        %3481 = vmatpush1.bf16.msra.mxu0 %v3395
        %3482 = vmatprep.subr.bf16.mxu0 0
        %3483 = vmatpush1.bf16.msra.mxu0 %v3396
        %3484 = vmatprep.subr.bf16.mxu0 0
        %3485 = vmatpush1.bf16.msra.mxu0 %v3397
        %3486 = vmatprep.subr.bf16.mxu0 0
        %3487 = vmatpush1.bf16.msra.mxu0 %v3398
        %3488 = vmatprep.subr.bf16.mxu0 0
        %3489 = vmatpush1.bf16.msra.mxu0 %v3399
        %3490 = vmatprep.subr.bf16.mxu0 0
        %3491 = vmatpush1.bf16.msra.mxu0 %v3400
        %3492 = vmatprep.mubr.bf16.mxu0 %v3231
        %3493 = vmatmul.mubr.bf16.gmra.mrb[0].mxu0 %v3230
        %v3494 = vpop.f32.mrb[0].mxu0
        %v3495 = vadd.f32 %v3239, %v3494
        %v3496 = vpop.f32.mrb[0].mxu0
        %v3497 = vpop.f32.mrb[0].mxu0
        %v3498 = vpop.f32.mrb[0].mxu0
        %3499 = vdwg.mxu0
        %3500 = vmatprep.subr.bf16.mxu0 0
        %3501 = vmatpush1.bf16.msra.mxu0 %v3401
        %3502 = vmatprep.subr.bf16.mxu0 0
        %3503 = vmatpush1.bf16.msra.mxu0 %v3402
        %3504 = vmatprep.subr.bf16.mxu0 0
        %3505 = vmatpush1.bf16.msra.mxu0 %v3403
        %3506 = vmatprep.subr.bf16.mxu0 0
        %3507 = vmatpush1.bf16.msra.mxu0 %v3404
        %3508 = vmatprep.subr.bf16.mxu0 0
        %3509 = vmatpush1.bf16.msra.mxu0 %v3405
        %3510 = vmatprep.subr.bf16.mxu0 0
        %3511 = vmatpush1.bf16.msra.mxu0 %v3406
        %3512 = vmatprep.subr.bf16.mxu0 0
        %3513 = vmatpush1.bf16.msra.mxu0 %v3407
        %3514 = vmatprep.subr.bf16.mxu0 0
        %3515 = vmatpush1.bf16.msra.mxu0 %v3408
        %3516 = vmatprep.subr.bf16.mxu0 0
        %3517 = vmatpush1.bf16.msra.mxu0 %v3409
        %3518 = vmatprep.subr.bf16.mxu0 0
        %3519 = vmatpush1.bf16.msra.mxu0 %v3410
        %3520 = vmatprep.subr.bf16.mxu0 0
        %3521 = vmatpush1.bf16.msra.mxu0 %v3411
        %3522 = vmatprep.subr.bf16.mxu0 0
        %3523 = vmatpush1.bf16.msra.mxu0 %v3412
        %3524 = vmatprep.subr.bf16.mxu0 0
        %3525 = vmatpush1.bf16.msra.mxu0 %v3413
        %3526 = vmatprep.subr.bf16.mxu0 0
        %3527 = vmatpush1.bf16.msra.mxu0 %v3414
        %3528 = vmatprep.subr.bf16.mxu0 0
        %3529 = vmatpush1.bf16.msra.mxu0 %v3415
        %3530 = vmatprep.subr.bf16.mxu0 0
        %3531 = vmatpush1.bf16.msra.mxu0 %v3416
        %3532 = vmatprep.mubr.bf16.mxu0 %v3233
        %3533 = vmatmul.mubr.bf16.gmra.mrb[0].mxu0 %v3232
        %v3534 = vpop.f32.mrb[0].mxu0
        %v3535 = vadd.f32 %v3495, %v3534
        %v3536 = vpop.f32.mrb[0].mxu0
        %v3537 = vpop.f32.mrb[0].mxu0
        %v3538 = vpop.f32.mrb[0].mxu0
        %3539 = vdwg.mxu0
        %3540 = vmatprep.subr.bf16.mxu0 0
        %3541 = vmatpush1.bf16.msra.mxu0 %v3417
        %3542 = vmatprep.subr.bf16.mxu0 0
        %3543 = vmatpush1.bf16.msra.mxu0 %v3418
        %3544 = vmatprep.subr.bf16.mxu0 0
        %3545 = vmatpush1.bf16.msra.mxu0 %v3419
        %3546 = vmatprep.subr.bf16.mxu0 0
        %3547 = vmatpush1.bf16.msra.mxu0 %v3420
        %3548 = vmatprep.subr.bf16.mxu0 0
        %3549 = vmatpush1.bf16.msra.mxu0 0
        %3550 = vmatprep.subr.bf16.mxu0 0
        %3551 = vmatpush1.bf16.msra.mxu0 0
        %3552 = vmatprep.subr.bf16.mxu0 0
        %3553 = vmatpush1.bf16.msra.mxu0 0
        %3554 = vmatprep.subr.bf16.mxu0 0
        %3555 = vmatpush1.bf16.msra.mxu0 0
        %3556 = vmatprep.subr.bf16.mxu0 0
        %3557 = vmatpush1.bf16.msra.mxu0 0
        %3558 = vmatprep.subr.bf16.mxu0 0
        %3559 = vmatpush1.bf16.msra.mxu0 0
        %3560 = vmatprep.subr.bf16.mxu0 0
        %3561 = vmatpush1.bf16.msra.mxu0 0
        %3562 = vmatprep.subr.bf16.mxu0 0
        %3563 = vmatpush1.bf16.msra.mxu0 0
        %3564 = vmatprep.subr.bf16.mxu0 0
        %3565 = vmatpush1.bf16.msra.mxu0 0
        %3566 = vmatprep.subr.bf16.mxu0 0
        %3567 = vmatpush1.bf16.msra.mxu0 0
        %3568 = vmatprep.subr.bf16.mxu0 0
        %3569 = vmatpush1.bf16.msra.mxu0 0
        %3570 = vmatprep.subr.bf16.mxu0 0
        %3571 = vmatpush1.bf16.msra.mxu0 0
        %3572 = vmatprep.mubr.bf16.mxu0 0
        %3573 = vmatmul.mubr.bf16.gmra.mrb[0].mxu0 %v3458
        %v3574 = vpop.f32.mrb[0].mxu0
        %v3575 = vadd.f32 %v3535, %v3574
        %v3576 = vpop.f32.mrb[0].mxu0
        %v3577 = vpop.f32.mrb[0].mxu0
        %v3578 = vpop.f32.mrb[0].mxu0
        %3579 = vdwg.mxu0
        %v3580 = vmax.f32 %v3575, 0.0
        %v3581 = vpack.c.bf16 %v3580, %v3580
        %v3582 = vld [vmem:[%s3] sm:$0xff]
        %v3583 = vld [vmem:[%s3 + $0x8] sm:$0xff]
        %v3584 = vld [vmem:[%s3 + $0x10] sm:$0xff]
        %v3585 = vld [vmem:[%s3 + $0x18] sm:$0xff]
        %v3586 = vld [vmem:[%s3 + $0x20] sm:$0xff]
        %v3587 = vld [vmem:[%s3 + $0x28] sm:$0xff]
        %v3588 = vld [vmem:[%s3 + $0x30] sm:$0xff]
        %v3589 = vld [vmem:[%s3 + $0x38] sm:$0xff]
        %v3590 = vld [vmem:[%s3 + $0x40] sm:$0xff]
        %v3591 = vld [vmem:[%s3 + $0x48] sm:$0xff]
        %v3592 = vld [vmem:[%s3 + $0x50] sm:$0xff]
        %v3593 = vld [vmem:[%s3 + $0x58] sm:$0xff]
        %v3594 = vld [vmem:[%s3 + $0x60] sm:$0xff]
        %v3595 = vld [vmem:[%s3 + $0x68] sm:$0xff]
        %v3596 = vld [vmem:[%s3 + $0x70] sm:$0xff]
        %v3597 = vld [vmem:[%s3 + $0x78] sm:$0xff]
        %v3599 = vlaneseq
        %v3600 = vshrl.u32 %v3599, 7
        %v3601 = vsub.s32 0, %v3600
        %v3602 = vrot.slane %v755, %v3601
        %v3603 = vlaneseq
        %v3604 = vshrl.u32 %v3603, 7
        %v3605 = vsub.s32 1, %v3604
        %v3606 = vrot.slane %v755, %v3605
        %v3607 = vlaneseq
        %v3608 = vshrl.u32 %v3607, 7
        %v3609 = vsub.s32 2, %v3608
        %v3610 = vrot.slane %v755, %v3609
        %v3611 = vlaneseq
        %v3612 = vshrl.u32 %v3611, 7
        %v3613 = vsub.s32 3, %v3612
        %v3614 = vrot.slane %v755, %v3613
        %v3635 = vunpack.c.l.b16 %v3582
        %v3636 = vunpack.c.h.b16 %v3582
        %v3637 = vunpack.c.l.b16 %v3583
        %v3638 = vunpack.c.h.b16 %v3583
        %v3639 = vunpack.c.l.b16 %v3584
        %v3640 = vunpack.c.h.b16 %v3584
        %v3641 = vunpack.c.l.b16 %v3585
        %v3642 = vunpack.c.h.b16 %v3585
        %v3643 = vunpack.c.l.b16 %v3586
        %v3644 = vunpack.c.h.b16 %v3586
        %v3645 = vunpack.c.l.b16 %v3587
        %v3646 = vunpack.c.h.b16 %v3587
        %v3647 = vunpack.c.l.b16 %v3588
        %v3648 = vunpack.c.h.b16 %v3588
        %v3649 = vunpack.c.l.b16 %v3589
        %v3650 = vunpack.c.h.b16 %v3589
        %v3651 = vunpack.c.l.b16 %v3590
        %v3652 = vunpack.c.h.b16 %v3590
        %v3653 = vunpack.c.l.b16 %v3591
        %v3654 = vunpack.c.h.b16 %v3591
        %v3655 = vunpack.c.l.b16 %v3592
        %v3656 = vunpack.c.h.b16 %v3592
        %v3657 = vunpack.c.l.b16 %v3593
        %v3658 = vunpack.c.h.b16 %v3593
        %v3659 = vunpack.c.l.b16 %v3594
        %v3660 = vunpack.c.h.b16 %v3594
        %v3661 = vunpack.c.l.b16 %v3595
        %v3662 = vunpack.c.h.b16 %v3595
        %v3663 = vunpack.c.l.b16 %v3596
        %v3664 = vunpack.c.h.b16 %v3596
        %v3665 = vunpack.c.l.b16 %v3597
        %v3666 = vunpack.c.h.b16 %v3597
        %v3667 = vpack.c.b16 %v3639, %v3635
        %v3668 = vpack.c.b16 %v3640, %v3636
        %v3669 = vpack.c.b16 %v3641, %v3637
        %v3670 = vpack.c.b16 %v3642, %v3638
        %v3671 = vpack.c.b16 %v3647, %v3643
        %v3672 = vpack.c.b16 %v3648, %v3644
        %v3673 = vpack.c.b16 %v3649, %v3645
        %v3674 = vpack.c.b16 %v3650, %v3646
        %v3675 = vpack.c.b16 %v3655, %v3651
        %v3676 = vpack.c.b16 %v3656, %v3652
        %v3677 = vpack.c.b16 %v3657, %v3653
        %v3678 = vpack.c.b16 %v3658, %v3654
        %v3679 = vpack.c.b16 %v3663, %v3659
        %v3680 = vpack.c.b16 %v3664, %v3660
        %v3681 = vpack.c.b16 %v3665, %v3661
        %v3682 = vpack.c.b16 %v3666, %v3662
        %v3700 = vsel %vm901, %v3581, 0
        %3702 = vmatprep.subr.bf16.mxu0 %v3668
        %3703 = vmatpush1.bf16.msra.mxu0 %v3667
        %3704 = vmatprep.subr.bf16.mxu0 %v3672
        %3705 = vmatpush1.bf16.msra.mxu0 %v3671
        %3706 = vmatprep.subr.bf16.mxu0 %v3676
        %3707 = vmatpush1.bf16.msra.mxu0 %v3675
        %3708 = vmatprep.subr.bf16.mxu0 %v3680
        %3709 = vmatpush1.bf16.msra.mxu0 %v3679
        %3710 = vmatprep.subr.bf16.mxu0 0
        %3711 = vmatpush1.bf16.msra.mxu0 0
        %3712 = vmatprep.subr.bf16.mxu0 0
        %3713 = vmatpush1.bf16.msra.mxu0 0
        %3714 = vmatprep.subr.bf16.mxu0 0
        %3715 = vmatpush1.bf16.msra.mxu0 0
        %3716 = vmatprep.subr.bf16.mxu0 0
        %3717 = vmatpush1.bf16.msra.mxu0 0
        %3718 = vmatprep.subr.bf16.mxu0 0
        %3719 = vmatpush1.bf16.msra.mxu0 0
        %3720 = vmatprep.subr.bf16.mxu0 0
        %3721 = vmatpush1.bf16.msra.mxu0 0
        %3722 = vmatprep.subr.bf16.mxu0 0
        %3723 = vmatpush1.bf16.msra.mxu0 0
        %3724 = vmatprep.subr.bf16.mxu0 0
        %3725 = vmatpush1.bf16.msra.mxu0 0
        %3726 = vmatprep.subr.bf16.mxu0 0
        %3727 = vmatpush1.bf16.msra.mxu0 0
        %3728 = vmatprep.subr.bf16.mxu0 0
        %3729 = vmatpush1.bf16.msra.mxu0 0
        %3730 = vmatprep.subr.bf16.mxu0 0
        %3731 = vmatpush1.bf16.msra.mxu0 0
        %3732 = vmatprep.subr.bf16.mxu0 0
        %3733 = vmatpush1.bf16.msra.mxu0 0
        %3734 = vmatprep.mubr.bf16.mxu0 0
        %3735 = vmatmul.mubr.bf16.gmra.mrb[0].mxu0 %v3700
        %v3736 = vpop.f32.mrb[0].mxu0
        %v3737 = vadd.f32 %v3602, %v3736
        %v3738 = vpop.f32.mrb[0].mxu0
        %v3739 = vadd.f32 %v3606, %v3738
        %v3740 = vpop.f32.mrb[0].mxu0
        %v3741 = vpop.f32.mrb[0].mxu0
        %3742 = vdwg.mxu0
        %3743 = vmatprep.subr.bf16.mxu0 %v3670
        %3744 = vmatpush1.bf16.msra.mxu0 %v3669
        %3745 = vmatprep.subr.bf16.mxu0 %v3674
        %3746 = vmatpush1.bf16.msra.mxu0 %v3673
        %3747 = vmatprep.subr.bf16.mxu0 %v3678
        %3748 = vmatpush1.bf16.msra.mxu0 %v3677
        %3749 = vmatprep.subr.bf16.mxu0 %v3682
        %3750 = vmatpush1.bf16.msra.mxu0 %v3681
        %3751 = vmatprep.subr.bf16.mxu0 0
        %3752 = vmatpush1.bf16.msra.mxu0 0
        %3753 = vmatprep.subr.bf16.mxu0 0
        %3754 = vmatpush1.bf16.msra.mxu0 0
        %3755 = vmatprep.subr.bf16.mxu0 0
        %3756 = vmatpush1.bf16.msra.mxu0 0
        %3757 = vmatprep.subr.bf16.mxu0 0
        %3758 = vmatpush1.bf16.msra.mxu0 0
        %3759 = vmatprep.subr.bf16.mxu0 0
        %3760 = vmatpush1.bf16.msra.mxu0 0
        %3761 = vmatprep.subr.bf16.mxu0 0
        %3762 = vmatpush1.bf16.msra.mxu0 0
        %3763 = vmatprep.subr.bf16.mxu0 0
        %3764 = vmatpush1.bf16.msra.mxu0 0
        %3765 = vmatprep.subr.bf16.mxu0 0
        %3766 = vmatpush1.bf16.msra.mxu0 0
        %3767 = vmatprep.subr.bf16.mxu0 0
        %3768 = vmatpush1.bf16.msra.mxu0 0
        %3769 = vmatprep.subr.bf16.mxu0 0
        %3770 = vmatpush1.bf16.msra.mxu0 0
        %3771 = vmatprep.subr.bf16.mxu0 0
        %3772 = vmatpush1.bf16.msra.mxu0 0
        %3773 = vmatprep.subr.bf16.mxu0 0
        %3774 = vmatpush1.bf16.msra.mxu0 0
        %3775 = vmatprep.mubr.bf16.mxu0 0
        %3776 = vmatmul.mubr.bf16.gmra.mrb[0].mxu0 %v3700
        %v3777 = vpop.f32.mrb[0].mxu0
        %v3778 = vadd.f32 %v3610, %v3777
        %v3779 = vpop.f32.mrb[0].mxu0
        %v3780 = vadd.f32 %v3614, %v3779
        %v3781 = vpop.f32.mrb[0].mxu0
        %v3782 = vpop.f32.mrb[0].mxu0
        %3783 = vdwg.mxu0
        %v3784 = vmax.f32 %v3737, 0.0
        %v3785 = vmax.f32 %v3739, 0.0
        %v3786 = vmax.f32 %v3778, 0.0
        %v3787 = vmax.f32 %v3780, 0.0
        %v3788 = vpack.c.bf16 %v3784, %v3784
        %v3789 = vpack.c.bf16 %v3785, %v3785
        %v3790 = vpack.c.bf16 %v3786, %v3786
        %v3791 = vpack.c.bf16 %v3787, %v3787
        %v3792 = vld [vmem:[%s504] sm:$0xff]
        %v3793 = vld [vmem:[%s504 + $0x8] sm:$0xff]
        %v3794 = vld [vmem:[%s504 + $0x10] sm:$0xff]
        %v3795 = vld [vmem:[%s504 + $0x18] sm:$0xff]
        %v3796 = vld [vmem:[%s504 + $0x20] sm:$0xff]
        %v3797 = vld [vmem:[%s504 + $0x28] sm:$0xff]
        %v3798 = vld [vmem:[%s504 + $0x30] sm:$0xff]
        %v3799 = vld [vmem:[%s504 + $0x38] sm:$0xff]
        %v3800 = vld [vmem:[%s504 + $0x40] sm:$0xff]
        %v3801 = vld [vmem:[%s504 + $0x48] sm:$0xff]
        %v3802 = vld [vmem:[%s504 + $0x50] sm:$0xff]
        %v3803 = vld [vmem:[%s504 + $0x58] sm:$0xff]
        %v3804 = vld [vmem:[%s504 + $0x60] sm:$0xff]
        %v3805 = vld [vmem:[%s504 + $0x68] sm:$0xff]
        %v3806 = vld [vmem:[%s504 + $0x70] sm:$0xff]
        %v3807 = vld [vmem:[%s504 + $0x78] sm:$0xff]
        %v3808 = vld [vmem:[%s504 + $0x80] sm:$0xff]
        %v3809 = vld [vmem:[%s504 + $0x88] sm:$0xff]
        %v3810 = vld [vmem:[%s504 + $0x90] sm:$0xff]
        %v3811 = vld [vmem:[%s504 + $0x98] sm:$0xff]
        %v3812 = vld [vmem:[%s504 + $0xa0] sm:$0xff]
        %v3813 = vld [vmem:[%s504 + $0xa8] sm:$0xff]
        %v3814 = vld [vmem:[%s504 + $0xb0] sm:$0xff]
        %v3815 = vld [vmem:[%s504 + $0xb8] sm:$0xff]
        %v3816 = vld [vmem:[%s504 + $0xc0] sm:$0xff]
        %v3817 = vld [vmem:[%s504 + $0xc8] sm:$0xff]
        %v3818 = vld [vmem:[%s504 + $0xd0] sm:$0xff]
        %v3819 = vld [vmem:[%s504 + $0xd8] sm:$0xff]
        %v3820 = vld [vmem:[%s504 + $0xe0] sm:$0xff]
        %v3821 = vld [vmem:[%s504 + $0xe8] sm:$0xff]
        %v3822 = vld [vmem:[%s504 + $0xf0] sm:$0xff]
        %v3823 = vld [vmem:[%s504 + $0xf8] sm:$0xff]
        %v3824 = vld [vmem:[%s504 + $0x100] sm:$0xff]
        %v3825 = vld [vmem:[%s504 + $0x108] sm:$0xff]
        %v3826 = vld [vmem:[%s504 + $0x110] sm:$0xff]
        %v3827 = vld [vmem:[%s504 + $0x118] sm:$0xff]
        %v3828 = vld [vmem:[%s504 + $0x120] sm:$0xff]
        %v3829 = vld [vmem:[%s504 + $0x128] sm:$0xff]
        %v3830 = vld [vmem:[%s504 + $0x130] sm:$0xff]
        %v3831 = vld [vmem:[%s504 + $0x138] sm:$0xff]
        %v3832 = vld [vmem:[%s504 + $0x140] sm:$0xff]
        %v3833 = vld [vmem:[%s504 + $0x148] sm:$0xff]
        %v3834 = vld [vmem:[%s504 + $0x150] sm:$0xff]
        %v3835 = vld [vmem:[%s504 + $0x158] sm:$0xff]
        %v3836 = vld [vmem:[%s504 + $0x160] sm:$0xff]
        %v3837 = vld [vmem:[%s504 + $0x168] sm:$0xff]
        %v3838 = vld [vmem:[%s504 + $0x170] sm:$0xff]
        %v3839 = vld [vmem:[%s504 + $0x178] sm:$0xff]
        %v3840 = vld [vmem:[%s504 + $0x180] sm:$0xff]
        %v3841 = vld [vmem:[%s504 + $0x188] sm:$0xff]
        %v3842 = vld [vmem:[%s504 + $0x190] sm:$0xff]
        %v3843 = vld [vmem:[%s504 + $0x198] sm:$0xff]
        %v3844 = vld [vmem:[%s504 + $0x1a0] sm:$0xff]
        %v3845 = vld [vmem:[%s504 + $0x1a8] sm:$0xff]
        %v3846 = vld [vmem:[%s504 + $0x1b0] sm:$0xff]
        %v3847 = vld [vmem:[%s504 + $0x1b8] sm:$0xff]
        %v3848 = vld [vmem:[%s504 + $0x1c0] sm:$0xff]
        %v3849 = vld [vmem:[%s504 + $0x1c8] sm:$0xff]
        %v3850 = vld [vmem:[%s504 + $0x1d0] sm:$0xff]
        %v3851 = vld [vmem:[%s504 + $0x1d8] sm:$0xff]
        %v3852 = vld [vmem:[%s504 + $0x1e0] sm:$0xff]
        %v3853 = vld [vmem:[%s504 + $0x1e8] sm:$0xff]
        %v3854 = vld [vmem:[%s504 + $0x1f0] sm:$0xff]
        %v3855 = vld [vmem:[%s504 + $0x1f8] sm:$0xff]
        %v3856 = vld [vmem:[%s504 + $0x200] sm:$0xff]
        %v3857 = vld [vmem:[%s504 + $0x208] sm:$0xff]
        %v3858 = vld [vmem:[%s504 + $0x210] sm:$0xff]
        %v3859 = vld [vmem:[%s504 + $0x218] sm:$0xff]
        %v3860 = vld [vmem:[%s504 + $0x220] sm:$0xff]
        %v3861 = vld [vmem:[%s504 + $0x228] sm:$0xff]
        %v3862 = vld [vmem:[%s504 + $0x230] sm:$0xff]
        %v3863 = vld [vmem:[%s504 + $0x238] sm:$0xff]
        %v3864 = vld [vmem:[%s504 + $0x240] sm:$0xff]
        %v3865 = vld [vmem:[%s504 + $0x248] sm:$0xff]
        %v3866 = vld [vmem:[%s504 + $0x250] sm:$0xff]
        %v3867 = vld [vmem:[%s504 + $0x258] sm:$0xff]
        %v3868 = vld [vmem:[%s504 + $0x260] sm:$0xff]
        %v3869 = vld [vmem:[%s504 + $0x268] sm:$0xff]
        %v3870 = vld [vmem:[%s504 + $0x270] sm:$0xff]
        %v3871 = vld [vmem:[%s504 + $0x278] sm:$0xff]
        %v3872 = vld [vmem:[%s504 + $0x280] sm:$0xff]
        %v3873 = vld [vmem:[%s504 + $0x288] sm:$0xff]
        %v3874 = vld [vmem:[%s504 + $0x290] sm:$0xff]
        %v3875 = vld [vmem:[%s504 + $0x298] sm:$0xff]
        %v3876 = vld [vmem:[%s504 + $0x2a0] sm:$0xff]
        %v3877 = vld [vmem:[%s504 + $0x2a8] sm:$0xff]
        %v3878 = vld [vmem:[%s504 + $0x2b0] sm:$0xff]
        %v3879 = vld [vmem:[%s504 + $0x2b8] sm:$0xff]
        %v3880 = vld [vmem:[%s504 + $0x2c0] sm:$0xff]
        %v3881 = vld [vmem:[%s504 + $0x2c8] sm:$0xff]
        %v3882 = vld [vmem:[%s504 + $0x2d0] sm:$0xff]
        %v3883 = vld [vmem:[%s504 + $0x2d8] sm:$0xff]
        %v3884 = vld [vmem:[%s504 + $0x2e0] sm:$0xff]
        %v3885 = vld [vmem:[%s504 + $0x2e8] sm:$0xff]
        %v3886 = vld [vmem:[%s504 + $0x2f0] sm:$0xff]
        %v3887 = vld [vmem:[%s504 + $0x2f8] sm:$0xff]
        %v3888 = vld [vmem:[%s504 + $0x300] sm:$0xff]
        %v3889 = vld [vmem:[%s504 + $0x308] sm:$0xff]
        %v3890 = vld [vmem:[%s504 + $0x310] sm:$0xff]
        %v3891 = vld [vmem:[%s504 + $0x318] sm:$0xff]
        %v3892 = vld [vmem:[%s504 + $0x320] sm:$0xff]
        %v3893 = vld [vmem:[%s504 + $0x328] sm:$0xff]
        %v3894 = vld [vmem:[%s504 + $0x330] sm:$0xff]
        %v3895 = vld [vmem:[%s504 + $0x338] sm:$0xff]
        %v3896 = vld [vmem:[%s504 + $0x340] sm:$0xff]
        %v3897 = vld [vmem:[%s504 + $0x348] sm:$0xff]
        %v3898 = vld [vmem:[%s504 + $0x350] sm:$0xff]
        %v3899 = vld [vmem:[%s504 + $0x358] sm:$0xff]
        %v3900 = vld [vmem:[%s504 + $0x360] sm:$0xff]
        %v3901 = vld [vmem:[%s504 + $0x368] sm:$0xff]
        %v3902 = vld [vmem:[%s504 + $0x370] sm:$0xff]
        %v3903 = vld [vmem:[%s504 + $0x378] sm:$0xff]
        %v3904 = vld [vmem:[%s504 + $0x380] sm:$0xff]
        %v3905 = vld [vmem:[%s504 + $0x388] sm:$0xff]
        %v3906 = vld [vmem:[%s504 + $0x390] sm:$0xff]
        %v3907 = vld [vmem:[%s504 + $0x398] sm:$0xff]
        %v3908 = vld [vmem:[%s504 + $0x3a0] sm:$0xff]
        %v3909 = vld [vmem:[%s504 + $0x3a8] sm:$0xff]
        %v3910 = vld [vmem:[%s504 + $0x3b0] sm:$0xff]
        %v3911 = vld [vmem:[%s504 + $0x3b8] sm:$0xff]
        %v3912 = vld [vmem:[%s504 + $0x3c0] sm:$0xff]
        %v3913 = vld [vmem:[%s504 + $0x3c8] sm:$0xff]
        %v3914 = vld [vmem:[%s504 + $0x3d0] sm:$0xff]
        %v3915 = vld [vmem:[%s504 + $0x3d8] sm:$0xff]
        %v3916 = vld [vmem:[%s504 + $0x3e0] sm:$0xff]
        %v3917 = vld [vmem:[%s504 + $0x3e8] sm:$0xff]
        %v3918 = vld [vmem:[%s504 + $0x3f0] sm:$0xff]
        %v3919 = vld [vmem:[%s504 + $0x3f8] sm:$0xff]
        %v3920 = vld [vmem:[%s539] sm:$0xf]
        %v3922 = vlaneseq
        %v3923 = vshrl.u32 %v3922, 7
        %v3924 = vsub.s32 0, %v3923
        %v3925 = vrot.slane %v3920, %v3924
        %v3926 = vlaneseq
        %v3927 = vshrl.u32 %v3926, 7
        %v3928 = vsub.s32 1, %v3927
        %v3929 = vrot.slane %v3920, %v3928
        %v3930 = vlaneseq
        %v3931 = vshrl.u32 %v3930, 7
        %v3932 = vsub.s32 2, %v3931
        %v3933 = vrot.slane %v3920, %v3932
        %v3934 = vlaneseq
        %v3935 = vshrl.u32 %v3934, 7
        %v3936 = vsub.s32 3, %v3935
        %v3937 = vrot.slane %v3920, %v3936
        %v4070 = vunpack.c.l.b16 %v3792
        %v4071 = vunpack.c.h.b16 %v3792
        %v4072 = vunpack.c.l.b16 %v3793
        %v4073 = vunpack.c.h.b16 %v3793
        %v4074 = vunpack.c.l.b16 %v3794
        %v4075 = vunpack.c.h.b16 %v3794
        %v4076 = vunpack.c.l.b16 %v3795
        %v4077 = vunpack.c.h.b16 %v3795
        %v4078 = vunpack.c.l.b16 %v3796
        %v4079 = vunpack.c.h.b16 %v3796
        %v4080 = vunpack.c.l.b16 %v3797
        %v4081 = vunpack.c.h.b16 %v3797
        %v4082 = vunpack.c.l.b16 %v3798
        %v4083 = vunpack.c.h.b16 %v3798
        %v4084 = vunpack.c.l.b16 %v3799
        %v4085 = vunpack.c.h.b16 %v3799
        %v4086 = vunpack.c.l.b16 %v3800
        %v4087 = vunpack.c.h.b16 %v3800
        %v4088 = vunpack.c.l.b16 %v3801
        %v4089 = vunpack.c.h.b16 %v3801
        %v4090 = vunpack.c.l.b16 %v3802
        %v4091 = vunpack.c.h.b16 %v3802
        %v4092 = vunpack.c.l.b16 %v3803
        %v4093 = vunpack.c.h.b16 %v3803
        %v4094 = vunpack.c.l.b16 %v3804
        %v4095 = vunpack.c.h.b16 %v3804
        %v4096 = vunpack.c.l.b16 %v3805
        %v4097 = vunpack.c.h.b16 %v3805
        %v4098 = vunpack.c.l.b16 %v3806
        %v4099 = vunpack.c.h.b16 %v3806
        %v4100 = vunpack.c.l.b16 %v3807
        %v4101 = vunpack.c.h.b16 %v3807
        %v4102 = vunpack.c.l.b16 %v3808
        %v4103 = vunpack.c.h.b16 %v3808
        %v4104 = vunpack.c.l.b16 %v3809
        %v4105 = vunpack.c.h.b16 %v3809
        %v4106 = vunpack.c.l.b16 %v3810
        %v4107 = vunpack.c.h.b16 %v3810
        %v4108 = vunpack.c.l.b16 %v3811
        %v4109 = vunpack.c.h.b16 %v3811
        %v4110 = vunpack.c.l.b16 %v3812
        %v4111 = vunpack.c.h.b16 %v3812
        %v4112 = vunpack.c.l.b16 %v3813
        %v4113 = vunpack.c.h.b16 %v3813
        %v4114 = vunpack.c.l.b16 %v3814
        %v4115 = vunpack.c.h.b16 %v3814
        %v4116 = vunpack.c.l.b16 %v3815
        %v4117 = vunpack.c.h.b16 %v3815
        %v4118 = vunpack.c.l.b16 %v3816
        %v4119 = vunpack.c.h.b16 %v3816
        %v4120 = vunpack.c.l.b16 %v3817
        %v4121 = vunpack.c.h.b16 %v3817
        %v4122 = vunpack.c.l.b16 %v3818
        %v4123 = vunpack.c.h.b16 %v3818
        %v4124 = vunpack.c.l.b16 %v3819
        %v4125 = vunpack.c.h.b16 %v3819
        %v4126 = vunpack.c.l.b16 %v3820
        %v4127 = vunpack.c.h.b16 %v3820
        %v4128 = vunpack.c.l.b16 %v3821
        %v4129 = vunpack.c.h.b16 %v3821
        %v4130 = vunpack.c.l.b16 %v3822
        %v4131 = vunpack.c.h.b16 %v3822
        %v4132 = vunpack.c.l.b16 %v3823
        %v4133 = vunpack.c.h.b16 %v3823
        %v4134 = vunpack.c.l.b16 %v3824
        %v4135 = vunpack.c.h.b16 %v3824
        %v4136 = vunpack.c.l.b16 %v3825
        %v4137 = vunpack.c.h.b16 %v3825
        %v4138 = vunpack.c.l.b16 %v3826
        %v4139 = vunpack.c.h.b16 %v3826
        %v4140 = vunpack.c.l.b16 %v3827
        %v4141 = vunpack.c.h.b16 %v3827
        %v4142 = vunpack.c.l.b16 %v3828
        %v4143 = vunpack.c.h.b16 %v3828
        %v4144 = vunpack.c.l.b16 %v3829
        %v4145 = vunpack.c.h.b16 %v3829
        %v4146 = vunpack.c.l.b16 %v3830
        %v4147 = vunpack.c.h.b16 %v3830
        %v4148 = vunpack.c.l.b16 %v3831
        %v4149 = vunpack.c.h.b16 %v3831
        %v4150 = vunpack.c.l.b16 %v3832
        %v4151 = vunpack.c.h.b16 %v3832
        %v4152 = vunpack.c.l.b16 %v3833
        %v4153 = vunpack.c.h.b16 %v3833
        %v4154 = vunpack.c.l.b16 %v3834
        %v4155 = vunpack.c.h.b16 %v3834
        %v4156 = vunpack.c.l.b16 %v3835
        %v4157 = vunpack.c.h.b16 %v3835
        %v4158 = vunpack.c.l.b16 %v3836
        %v4159 = vunpack.c.h.b16 %v3836
        %v4160 = vunpack.c.l.b16 %v3837
        %v4161 = vunpack.c.h.b16 %v3837
        %v4162 = vunpack.c.l.b16 %v3838
        %v4163 = vunpack.c.h.b16 %v3838
        %v4164 = vunpack.c.l.b16 %v3839
        %v4165 = vunpack.c.h.b16 %v3839
        %v4166 = vunpack.c.l.b16 %v3840
        %v4167 = vunpack.c.h.b16 %v3840
        %v4168 = vunpack.c.l.b16 %v3841
        %v4169 = vunpack.c.h.b16 %v3841
        %v4170 = vunpack.c.l.b16 %v3842
        %v4171 = vunpack.c.h.b16 %v3842
        %v4172 = vunpack.c.l.b16 %v3843
        %v4173 = vunpack.c.h.b16 %v3843
        %v4174 = vunpack.c.l.b16 %v3844
        %v4175 = vunpack.c.h.b16 %v3844
        %v4176 = vunpack.c.l.b16 %v3845
        %v4177 = vunpack.c.h.b16 %v3845
        %v4178 = vunpack.c.l.b16 %v3846
        %v4179 = vunpack.c.h.b16 %v3846
        %v4180 = vunpack.c.l.b16 %v3847
        %v4181 = vunpack.c.h.b16 %v3847
        %v4182 = vunpack.c.l.b16 %v3848
        %v4183 = vunpack.c.h.b16 %v3848
        %v4184 = vunpack.c.l.b16 %v3849
        %v4185 = vunpack.c.h.b16 %v3849
        %v4186 = vunpack.c.l.b16 %v3850
        %v4187 = vunpack.c.h.b16 %v3850
        %v4188 = vunpack.c.l.b16 %v3851
        %v4189 = vunpack.c.h.b16 %v3851
        %v4190 = vunpack.c.l.b16 %v3852
        %v4191 = vunpack.c.h.b16 %v3852
        %v4192 = vunpack.c.l.b16 %v3853
        %v4193 = vunpack.c.h.b16 %v3853
        %v4194 = vunpack.c.l.b16 %v3854
        %v4195 = vunpack.c.h.b16 %v3854
        %v4196 = vunpack.c.l.b16 %v3855
        %v4197 = vunpack.c.h.b16 %v3855
        %v4198 = vunpack.c.l.b16 %v3856
        %v4199 = vunpack.c.h.b16 %v3856
        %v4200 = vunpack.c.l.b16 %v3857
        %v4201 = vunpack.c.h.b16 %v3857
        %v4202 = vunpack.c.l.b16 %v3858
        %v4203 = vunpack.c.h.b16 %v3858
        %v4204 = vunpack.c.l.b16 %v3859
        %v4205 = vunpack.c.h.b16 %v3859
        %v4206 = vunpack.c.l.b16 %v3860
        %v4207 = vunpack.c.h.b16 %v3860
        %v4208 = vunpack.c.l.b16 %v3861
        %v4209 = vunpack.c.h.b16 %v3861
        %v4210 = vunpack.c.l.b16 %v3862
        %v4211 = vunpack.c.h.b16 %v3862
        %v4212 = vunpack.c.l.b16 %v3863
        %v4213 = vunpack.c.h.b16 %v3863
        %v4214 = vunpack.c.l.b16 %v3864
        %v4215 = vunpack.c.h.b16 %v3864
        %v4216 = vunpack.c.l.b16 %v3865
        %v4217 = vunpack.c.h.b16 %v3865
        %v4218 = vunpack.c.l.b16 %v3866
        %v4219 = vunpack.c.h.b16 %v3866
        %v4220 = vunpack.c.l.b16 %v3867
        %v4221 = vunpack.c.h.b16 %v3867
        %v4222 = vunpack.c.l.b16 %v3868
        %v4223 = vunpack.c.h.b16 %v3868
        %v4224 = vunpack.c.l.b16 %v3869
        %v4225 = vunpack.c.h.b16 %v3869
        %v4226 = vunpack.c.l.b16 %v3870
        %v4227 = vunpack.c.h.b16 %v3870
        %v4228 = vunpack.c.l.b16 %v3871
        %v4229 = vunpack.c.h.b16 %v3871
        %v4230 = vunpack.c.l.b16 %v3872
        %v4231 = vunpack.c.h.b16 %v3872
        %v4232 = vunpack.c.l.b16 %v3873
        %v4233 = vunpack.c.h.b16 %v3873
        %v4234 = vunpack.c.l.b16 %v3874
        %v4235 = vunpack.c.h.b16 %v3874
        %v4236 = vunpack.c.l.b16 %v3875
        %v4237 = vunpack.c.h.b16 %v3875
        %v4238 = vunpack.c.l.b16 %v3876
        %v4239 = vunpack.c.h.b16 %v3876
        %v4240 = vunpack.c.l.b16 %v3877
        %v4241 = vunpack.c.h.b16 %v3877
        %v4242 = vunpack.c.l.b16 %v3878
        %v4243 = vunpack.c.h.b16 %v3878
        %v4244 = vunpack.c.l.b16 %v3879
        %v4245 = vunpack.c.h.b16 %v3879
        %v4246 = vunpack.c.l.b16 %v3880
        %v4247 = vunpack.c.h.b16 %v3880
        %v4248 = vunpack.c.l.b16 %v3881
        %v4249 = vunpack.c.h.b16 %v3881
        %v4250 = vunpack.c.l.b16 %v3882
        %v4251 = vunpack.c.h.b16 %v3882
        %v4252 = vunpack.c.l.b16 %v3883
        %v4253 = vunpack.c.h.b16 %v3883
        %v4254 = vunpack.c.l.b16 %v3884
        %v4255 = vunpack.c.h.b16 %v3884
        %v4256 = vunpack.c.l.b16 %v3885
        %v4257 = vunpack.c.h.b16 %v3885
        %v4258 = vunpack.c.l.b16 %v3886
        %v4259 = vunpack.c.h.b16 %v3886
        %v4260 = vunpack.c.l.b16 %v3887
        %v4261 = vunpack.c.h.b16 %v3887
        %v4262 = vunpack.c.l.b16 %v3888
        %v4263 = vunpack.c.h.b16 %v3888
        %v4264 = vunpack.c.l.b16 %v3889
        %v4265 = vunpack.c.h.b16 %v3889
        %v4266 = vunpack.c.l.b16 %v3890
        %v4267 = vunpack.c.h.b16 %v3890
        %v4268 = vunpack.c.l.b16 %v3891
        %v4269 = vunpack.c.h.b16 %v3891
        %v4270 = vunpack.c.l.b16 %v3892
        %v4271 = vunpack.c.h.b16 %v3892
        %v4272 = vunpack.c.l.b16 %v3893
        %v4273 = vunpack.c.h.b16 %v3893
        %v4274 = vunpack.c.l.b16 %v3894
        %v4275 = vunpack.c.h.b16 %v3894
        %v4276 = vunpack.c.l.b16 %v3895
        %v4277 = vunpack.c.h.b16 %v3895
        %v4278 = vunpack.c.l.b16 %v3896
        %v4279 = vunpack.c.h.b16 %v3896
        %v4280 = vunpack.c.l.b16 %v3897
        %v4281 = vunpack.c.h.b16 %v3897
        %v4282 = vunpack.c.l.b16 %v3898
        %v4283 = vunpack.c.h.b16 %v3898
        %v4284 = vunpack.c.l.b16 %v3899
        %v4285 = vunpack.c.h.b16 %v3899
        %v4286 = vunpack.c.l.b16 %v3900
        %v4287 = vunpack.c.h.b16 %v3900
        %v4288 = vunpack.c.l.b16 %v3901
        %v4289 = vunpack.c.h.b16 %v3901
        %v4290 = vunpack.c.l.b16 %v3902
        %v4291 = vunpack.c.h.b16 %v3902
        %v4292 = vunpack.c.l.b16 %v3903
        %v4293 = vunpack.c.h.b16 %v3903
        %v4294 = vunpack.c.l.b16 %v3904
        %v4295 = vunpack.c.h.b16 %v3904
        %v4296 = vunpack.c.l.b16 %v3905
        %v4297 = vunpack.c.h.b16 %v3905
        %v4298 = vunpack.c.l.b16 %v3906
        %v4299 = vunpack.c.h.b16 %v3906
        %v4300 = vunpack.c.l.b16 %v3907
        %v4301 = vunpack.c.h.b16 %v3907
        %v4302 = vunpack.c.l.b16 %v3908
        %v4303 = vunpack.c.h.b16 %v3908
        %v4304 = vunpack.c.l.b16 %v3909
        %v4305 = vunpack.c.h.b16 %v3909
        %v4306 = vunpack.c.l.b16 %v3910
        %v4307 = vunpack.c.h.b16 %v3910
        %v4308 = vunpack.c.l.b16 %v3911
        %v4309 = vunpack.c.h.b16 %v3911
        %v4310 = vunpack.c.l.b16 %v3912
        %v4311 = vunpack.c.h.b16 %v3912
        %v4312 = vunpack.c.l.b16 %v3913
        %v4313 = vunpack.c.h.b16 %v3913
        %v4314 = vunpack.c.l.b16 %v3914
        %v4315 = vunpack.c.h.b16 %v3914
        %v4316 = vunpack.c.l.b16 %v3915
        %v4317 = vunpack.c.h.b16 %v3915
        %v4318 = vunpack.c.l.b16 %v3916
        %v4319 = vunpack.c.h.b16 %v3916
        %v4320 = vunpack.c.l.b16 %v3917
        %v4321 = vunpack.c.h.b16 %v3917
        %v4322 = vunpack.c.l.b16 %v3918
        %v4323 = vunpack.c.h.b16 %v3918
        %v4324 = vunpack.c.l.b16 %v3919
        %v4325 = vunpack.c.h.b16 %v3919
        %v4326 = vpack.c.b16 %v4074, %v4070
        %v4327 = vpack.c.b16 %v4075, %v4071
        %v4328 = vpack.c.b16 %v4076, %v4072
        %v4329 = vpack.c.b16 %v4077, %v4073
        %v4330 = vpack.c.b16 %v4082, %v4078
        %v4331 = vpack.c.b16 %v4083, %v4079
        %v4332 = vpack.c.b16 %v4084, %v4080
        %v4333 = vpack.c.b16 %v4085, %v4081
        %v4334 = vpack.c.b16 %v4090, %v4086
        %v4335 = vpack.c.b16 %v4091, %v4087
        %v4336 = vpack.c.b16 %v4092, %v4088
        %v4337 = vpack.c.b16 %v4093, %v4089
        %v4338 = vpack.c.b16 %v4098, %v4094
        %v4339 = vpack.c.b16 %v4099, %v4095
        %v4340 = vpack.c.b16 %v4100, %v4096
        %v4341 = vpack.c.b16 %v4101, %v4097
        %v4342 = vpack.c.b16 %v4106, %v4102
        %v4343 = vpack.c.b16 %v4107, %v4103
        %v4344 = vpack.c.b16 %v4108, %v4104
        %v4345 = vpack.c.b16 %v4109, %v4105
        %v4346 = vpack.c.b16 %v4114, %v4110
        %v4347 = vpack.c.b16 %v4115, %v4111
        %v4348 = vpack.c.b16 %v4116, %v4112
        %v4349 = vpack.c.b16 %v4117, %v4113
        %v4350 = vpack.c.b16 %v4122, %v4118
        %v4351 = vpack.c.b16 %v4123, %v4119
        %v4352 = vpack.c.b16 %v4124, %v4120
        %v4353 = vpack.c.b16 %v4125, %v4121
        %v4354 = vpack.c.b16 %v4130, %v4126
        %v4355 = vpack.c.b16 %v4131, %v4127
        %v4356 = vpack.c.b16 %v4132, %v4128
        %v4357 = vpack.c.b16 %v4133, %v4129
        %v4358 = vpack.c.b16 %v4138, %v4134
        %v4359 = vpack.c.b16 %v4139, %v4135
        %v4360 = vpack.c.b16 %v4140, %v4136
        %v4361 = vpack.c.b16 %v4141, %v4137
        %v4362 = vpack.c.b16 %v4146, %v4142
        %v4363 = vpack.c.b16 %v4147, %v4143
        %v4364 = vpack.c.b16 %v4148, %v4144
        %v4365 = vpack.c.b16 %v4149, %v4145
        %v4366 = vpack.c.b16 %v4154, %v4150
        %v4367 = vpack.c.b16 %v4155, %v4151
        %v4368 = vpack.c.b16 %v4156, %v4152
        %v4369 = vpack.c.b16 %v4157, %v4153
        %v4370 = vpack.c.b16 %v4162, %v4158
        %v4371 = vpack.c.b16 %v4163, %v4159
        %v4372 = vpack.c.b16 %v4164, %v4160
        %v4373 = vpack.c.b16 %v4165, %v4161
        %v4374 = vpack.c.b16 %v4170, %v4166
        %v4375 = vpack.c.b16 %v4171, %v4167
        %v4376 = vpack.c.b16 %v4172, %v4168
        %v4377 = vpack.c.b16 %v4173, %v4169
        %v4378 = vpack.c.b16 %v4178, %v4174
        %v4379 = vpack.c.b16 %v4179, %v4175
        %v4380 = vpack.c.b16 %v4180, %v4176
        %v4381 = vpack.c.b16 %v4181, %v4177
        %v4382 = vpack.c.b16 %v4186, %v4182
        %v4383 = vpack.c.b16 %v4187, %v4183
        %v4384 = vpack.c.b16 %v4188, %v4184
        %v4385 = vpack.c.b16 %v4189, %v4185
        %v4386 = vpack.c.b16 %v4194, %v4190
        %v4387 = vpack.c.b16 %v4195, %v4191
        %v4388 = vpack.c.b16 %v4196, %v4192
        %v4389 = vpack.c.b16 %v4197, %v4193
        %v4390 = vpack.c.b16 %v4202, %v4198
        %v4391 = vpack.c.b16 %v4203, %v4199
        %v4392 = vpack.c.b16 %v4204, %v4200
        %v4393 = vpack.c.b16 %v4205, %v4201
        %v4394 = vpack.c.b16 %v4210, %v4206
        %v4395 = vpack.c.b16 %v4211, %v4207
        %v4396 = vpack.c.b16 %v4212, %v4208
        %v4397 = vpack.c.b16 %v4213, %v4209
        %v4398 = vpack.c.b16 %v4218, %v4214
        %v4399 = vpack.c.b16 %v4219, %v4215
        %v4400 = vpack.c.b16 %v4220, %v4216
        %v4401 = vpack.c.b16 %v4221, %v4217
        %v4402 = vpack.c.b16 %v4226, %v4222
        %v4403 = vpack.c.b16 %v4227, %v4223
        %v4404 = vpack.c.b16 %v4228, %v4224
        %v4405 = vpack.c.b16 %v4229, %v4225
        %v4406 = vpack.c.b16 %v4234, %v4230
        %v4407 = vpack.c.b16 %v4235, %v4231
        %v4408 = vpack.c.b16 %v4236, %v4232
        %v4409 = vpack.c.b16 %v4237, %v4233
        %v4410 = vpack.c.b16 %v4242, %v4238
        %v4411 = vpack.c.b16 %v4243, %v4239
        %v4412 = vpack.c.b16 %v4244, %v4240
        %v4413 = vpack.c.b16 %v4245, %v4241
        %v4414 = vpack.c.b16 %v4250, %v4246
        %v4415 = vpack.c.b16 %v4251, %v4247
        %v4416 = vpack.c.b16 %v4252, %v4248
        %v4417 = vpack.c.b16 %v4253, %v4249
        %v4418 = vpack.c.b16 %v4258, %v4254
        %v4419 = vpack.c.b16 %v4259, %v4255
        %v4420 = vpack.c.b16 %v4260, %v4256
        %v4421 = vpack.c.b16 %v4261, %v4257
        %v4422 = vpack.c.b16 %v4266, %v4262
        %v4423 = vpack.c.b16 %v4267, %v4263
        %v4424 = vpack.c.b16 %v4268, %v4264
        %v4425 = vpack.c.b16 %v4269, %v4265
        %v4426 = vpack.c.b16 %v4274, %v4270
        %v4427 = vpack.c.b16 %v4275, %v4271
        %v4428 = vpack.c.b16 %v4276, %v4272
        %v4429 = vpack.c.b16 %v4277, %v4273
        %v4430 = vpack.c.b16 %v4282, %v4278
        %v4431 = vpack.c.b16 %v4283, %v4279
        %v4432 = vpack.c.b16 %v4284, %v4280
        %v4433 = vpack.c.b16 %v4285, %v4281
        %v4434 = vpack.c.b16 %v4290, %v4286
        %v4435 = vpack.c.b16 %v4291, %v4287
        %v4436 = vpack.c.b16 %v4292, %v4288
        %v4437 = vpack.c.b16 %v4293, %v4289
        %v4438 = vpack.c.b16 %v4298, %v4294
        %v4439 = vpack.c.b16 %v4299, %v4295
        %v4440 = vpack.c.b16 %v4300, %v4296
        %v4441 = vpack.c.b16 %v4301, %v4297
        %v4442 = vpack.c.b16 %v4306, %v4302
        %v4443 = vpack.c.b16 %v4307, %v4303
        %v4444 = vpack.c.b16 %v4308, %v4304
        %v4445 = vpack.c.b16 %v4309, %v4305
        %v4446 = vpack.c.b16 %v4314, %v4310
        %v4447 = vpack.c.b16 %v4315, %v4311
        %v4448 = vpack.c.b16 %v4316, %v4312
        %v4449 = vpack.c.b16 %v4317, %v4313
        %v4450 = vpack.c.b16 %v4322, %v4318
        %v4451 = vpack.c.b16 %v4323, %v4319
        %v4452 = vpack.c.b16 %v4324, %v4320
        %v4453 = vpack.c.b16 %v4325, %v4321
        %4582 = vmatprep.subr.bf16.mxu0 %v4327
        %4583 = vmatpush1.bf16.msra.mxu0 %v4326
        %4584 = vmatprep.subr.bf16.mxu0 %v4331
        %4585 = vmatpush1.bf16.msra.mxu0 %v4330
        %4586 = vmatprep.subr.bf16.mxu0 %v4335
        %4587 = vmatpush1.bf16.msra.mxu0 %v4334
        %4588 = vmatprep.subr.bf16.mxu0 %v4339
        %4589 = vmatpush1.bf16.msra.mxu0 %v4338
        %4590 = vmatprep.subr.bf16.mxu0 %v4343
        %4591 = vmatpush1.bf16.msra.mxu0 %v4342
        %4592 = vmatprep.subr.bf16.mxu0 %v4347
        %4593 = vmatpush1.bf16.msra.mxu0 %v4346
        %4594 = vmatprep.subr.bf16.mxu0 %v4351
        %4595 = vmatpush1.bf16.msra.mxu0 %v4350
        %4596 = vmatprep.subr.bf16.mxu0 %v4355
        %4597 = vmatpush1.bf16.msra.mxu0 %v4354
        %4598 = vmatprep.subr.bf16.mxu0 %v4359
        %4599 = vmatpush1.bf16.msra.mxu0 %v4358
        %4600 = vmatprep.subr.bf16.mxu0 %v4363
        %4601 = vmatpush1.bf16.msra.mxu0 %v4362
        %4602 = vmatprep.subr.bf16.mxu0 %v4367
        %4603 = vmatpush1.bf16.msra.mxu0 %v4366
        %4604 = vmatprep.subr.bf16.mxu0 %v4371
        %4605 = vmatpush1.bf16.msra.mxu0 %v4370
        %4606 = vmatprep.subr.bf16.mxu0 %v4375
        %4607 = vmatpush1.bf16.msra.mxu0 %v4374
        %4608 = vmatprep.subr.bf16.mxu0 %v4379
        %4609 = vmatpush1.bf16.msra.mxu0 %v4378
        %4610 = vmatprep.subr.bf16.mxu0 %v4383
        %4611 = vmatpush1.bf16.msra.mxu0 %v4382
        %4612 = vmatprep.subr.bf16.mxu0 %v4387
        %4613 = vmatpush1.bf16.msra.mxu0 %v4386
        %4614 = vmatprep.mubr.bf16.mxu0 %v3789
        %4615 = vmatmul.mubr.bf16.gmra.mrb[0].mxu0 %v3788
        %v4616 = vpop.f32.mrb[0].mxu0
        %v4617 = vadd.f32 %v3925, %v4616
        %v4618 = vpop.f32.mrb[0].mxu0
        %v4619 = vadd.f32 %v3929, %v4618
        %v4620 = vpop.f32.mrb[0].mxu0
        %v4621 = vpop.f32.mrb[0].mxu0
        %4622 = vdwg.mxu0
        %4623 = vmatprep.subr.bf16.mxu0 %v4391
        %4624 = vmatpush1.bf16.msra.mxu0 %v4390
        %4625 = vmatprep.subr.bf16.mxu0 %v4395
        %4626 = vmatpush1.bf16.msra.mxu0 %v4394
        %4627 = vmatprep.subr.bf16.mxu0 %v4399
        %4628 = vmatpush1.bf16.msra.mxu0 %v4398
        %4629 = vmatprep.subr.bf16.mxu0 %v4403
        %4630 = vmatpush1.bf16.msra.mxu0 %v4402
        %4631 = vmatprep.subr.bf16.mxu0 %v4407
        %4632 = vmatpush1.bf16.msra.mxu0 %v4406
        %4633 = vmatprep.subr.bf16.mxu0 %v4411
        %4634 = vmatpush1.bf16.msra.mxu0 %v4410
        %4635 = vmatprep.subr.bf16.mxu0 %v4415
        %4636 = vmatpush1.bf16.msra.mxu0 %v4414
        %4637 = vmatprep.subr.bf16.mxu0 %v4419
        %4638 = vmatpush1.bf16.msra.mxu0 %v4418
        %4639 = vmatprep.subr.bf16.mxu0 %v4423
        %4640 = vmatpush1.bf16.msra.mxu0 %v4422
        %4641 = vmatprep.subr.bf16.mxu0 %v4427
        %4642 = vmatpush1.bf16.msra.mxu0 %v4426
        %4643 = vmatprep.subr.bf16.mxu0 %v4431
        %4644 = vmatpush1.bf16.msra.mxu0 %v4430
        %4645 = vmatprep.subr.bf16.mxu0 %v4435
        %4646 = vmatpush1.bf16.msra.mxu0 %v4434
        %4647 = vmatprep.subr.bf16.mxu0 %v4439
        %4648 = vmatpush1.bf16.msra.mxu0 %v4438
        %4649 = vmatprep.subr.bf16.mxu0 %v4443
        %4650 = vmatpush1.bf16.msra.mxu0 %v4442
        %4651 = vmatprep.subr.bf16.mxu0 %v4447
        %4652 = vmatpush1.bf16.msra.mxu0 %v4446
        %4653 = vmatprep.subr.bf16.mxu0 %v4451
        %4654 = vmatpush1.bf16.msra.mxu0 %v4450
        %4655 = vmatprep.mubr.bf16.mxu0 %v3791
        %4656 = vmatmul.mubr.bf16.gmra.mrb[0].mxu0 %v3790
        %v4657 = vpop.f32.mrb[0].mxu0
        %v4658 = vadd.f32 %v4617, %v4657
        %v4659 = vpop.f32.mrb[0].mxu0
        %v4660 = vadd.f32 %v4619, %v4659
        %v4661 = vpop.f32.mrb[0].mxu0
        %v4662 = vpop.f32.mrb[0].mxu0
        %4663 = vdwg.mxu0
        %4664 = vmatprep.subr.bf16.mxu0 %v4329
        %4665 = vmatpush1.bf16.msra.mxu0 %v4328
        %4666 = vmatprep.subr.bf16.mxu0 %v4333
        %4667 = vmatpush1.bf16.msra.mxu0 %v4332
        %4668 = vmatprep.subr.bf16.mxu0 %v4337
        %4669 = vmatpush1.bf16.msra.mxu0 %v4336
        %4670 = vmatprep.subr.bf16.mxu0 %v4341
        %4671 = vmatpush1.bf16.msra.mxu0 %v4340
        %4672 = vmatprep.subr.bf16.mxu0 %v4345
        %4673 = vmatpush1.bf16.msra.mxu0 %v4344
        %4674 = vmatprep.subr.bf16.mxu0 %v4349
        %4675 = vmatpush1.bf16.msra.mxu0 %v4348
        %4676 = vmatprep.subr.bf16.mxu0 %v4353
        %4677 = vmatpush1.bf16.msra.mxu0 %v4352
        %4678 = vmatprep.subr.bf16.mxu0 %v4357
        %4679 = vmatpush1.bf16.msra.mxu0 %v4356
        %4680 = vmatprep.subr.bf16.mxu0 %v4361
        %4681 = vmatpush1.bf16.msra.mxu0 %v4360
        %4682 = vmatprep.subr.bf16.mxu0 %v4365
        %4683 = vmatpush1.bf16.msra.mxu0 %v4364
        %4684 = vmatprep.subr.bf16.mxu0 %v4369
        %4685 = vmatpush1.bf16.msra.mxu0 %v4368
        %4686 = vmatprep.subr.bf16.mxu0 %v4373
        %4687 = vmatpush1.bf16.msra.mxu0 %v4372
        %4688 = vmatprep.subr.bf16.mxu0 %v4377
        %4689 = vmatpush1.bf16.msra.mxu0 %v4376
        %4690 = vmatprep.subr.bf16.mxu0 %v4381
        %4691 = vmatpush1.bf16.msra.mxu0 %v4380
        %4692 = vmatprep.subr.bf16.mxu0 %v4385
        %4693 = vmatpush1.bf16.msra.mxu0 %v4384
        %4694 = vmatprep.subr.bf16.mxu0 %v4389
        %4695 = vmatpush1.bf16.msra.mxu0 %v4388
        %4696 = vmatprep.mubr.bf16.mxu0 %v3789
        %4697 = vmatmul.mubr.bf16.gmra.mrb[0].mxu0 %v3788
        %v4698 = vpop.f32.mrb[0].mxu0
        %v4699 = vadd.f32 %v3933, %v4698
        %v4700 = vpop.f32.mrb[0].mxu0
        %v4701 = vadd.f32 %v3937, %v4700
        %v4702 = vpop.f32.mrb[0].mxu0
        %v4703 = vpop.f32.mrb[0].mxu0
        %4704 = vdwg.mxu0
        %4705 = vmatprep.subr.bf16.mxu0 %v4393
        %4706 = vmatpush1.bf16.msra.mxu0 %v4392
        %4707 = vmatprep.subr.bf16.mxu0 %v4397
        %4708 = vmatpush1.bf16.msra.mxu0 %v4396
        %4709 = vmatprep.subr.bf16.mxu0 %v4401
        %4710 = vmatpush1.bf16.msra.mxu0 %v4400
        %4711 = vmatprep.subr.bf16.mxu0 %v4405
        %4712 = vmatpush1.bf16.msra.mxu0 %v4404
        %4713 = vmatprep.subr.bf16.mxu0 %v4409
        %4714 = vmatpush1.bf16.msra.mxu0 %v4408
        %4715 = vmatprep.subr.bf16.mxu0 %v4413
        %4716 = vmatpush1.bf16.msra.mxu0 %v4412
        %4717 = vmatprep.subr.bf16.mxu0 %v4417
        %4718 = vmatpush1.bf16.msra.mxu0 %v4416
        %4719 = vmatprep.subr.bf16.mxu0 %v4421
        %4720 = vmatpush1.bf16.msra.mxu0 %v4420
        %4721 = vmatprep.subr.bf16.mxu0 %v4425
        %4722 = vmatpush1.bf16.msra.mxu0 %v4424
        %4723 = vmatprep.subr.bf16.mxu0 %v4429
        %4724 = vmatpush1.bf16.msra.mxu0 %v4428
        %4725 = vmatprep.subr.bf16.mxu0 %v4433
        %4726 = vmatpush1.bf16.msra.mxu0 %v4432
        %4727 = vmatprep.subr.bf16.mxu0 %v4437
        %4728 = vmatpush1.bf16.msra.mxu0 %v4436
        %4729 = vmatprep.subr.bf16.mxu0 %v4441
        %4730 = vmatpush1.bf16.msra.mxu0 %v4440
        %4731 = vmatprep.subr.bf16.mxu0 %v4445
        %4732 = vmatpush1.bf16.msra.mxu0 %v4444
        %4733 = vmatprep.subr.bf16.mxu0 %v4449
        %4734 = vmatpush1.bf16.msra.mxu0 %v4448
        %4735 = vmatprep.subr.bf16.mxu0 %v4453
        %4736 = vmatpush1.bf16.msra.mxu0 %v4452
        %4737 = vmatprep.mubr.bf16.mxu0 %v3791
        %4738 = vmatmul.mubr.bf16.gmra.mrb[0].mxu0 %v3790
        %v4739 = vpop.f32.mrb[0].mxu0
        %v4740 = vadd.f32 %v4699, %v4739
        %v4741 = vpop.f32.mrb[0].mxu0
        %v4742 = vadd.f32 %v4701, %v4741
        %v4743 = vpop.f32.mrb[0].mxu0
        %v4744 = vpop.f32.mrb[0].mxu0
        %4745 = vdwg.mxu0
        %v4750 = vcombine.low %v4658, %v4660
        %v4751 = vcombine.low %v4740, %v4742
        %v4753 = vunpack.c.l.s4 1983009808
        %v4754 = vunpack.c.0.s8 %v4753
        %v4755 = vlaneseq
        %v4756 = vshrl.u32 %v4755, 7
        %v4757 = vsub.s32 %v4754, %v4756
        %v4758 = vrot.slane %v4750, %v4757
        %v4760 = vunpack.c.l.s4 1983009808
        %v4761 = vunpack.c.0.s8 %v4760
        %v4762 = vlaneseq
        %v4763 = vshrl.u32 %v4762, 7
        %v4764 = vsub.s32 %v4761, %v4763
        %v4765 = vrot.slane %v4751, %v4764
        %v4766 = vcombine.low %v4758, %v4765
        %4768 = vst [vmem:[%s545] sm:$0xff] %v4766
        %s4769 = smul.u32 4, %s17
        %p4770 = scmp.lt.s32.totalorder %s4769, 7
        %s4771 = scalar_select %p4770, %s4769, 7
        %s4772 = smul.addr %s4771, 2
        %s4773 = scalar_lea.vmem %s6, %s4772
        // Predicated region
        $region68: #{qrdqn_forward_fused.1} parent=62 // pred_check
          %p4774 = pneg %p171
        $region69: #{qrdqn_forward_fused.1} parent=62 // pred_check_branch
          %4776 = sbr.rel (%p4774) target = $region71
        $region70: #{qrdqn_forward_fused.1} parent=62 // pred_region
          %s4777 = smul.u32 4, %s17
        $region71: #{qrdqn_forward_fused.1} parent=62 // pred_fallthru
          _
      $region63: #{qrdqn_forward_fused.1} parent=5 // pred_fallthru
        _
      %p4778 = scmp.le.s32.totalorder 2, %s12
      // Predicated region
      $region72: #{qrdqn_forward_fused.1} parent=5 // pred_check
        %p4779 = pneg %p4778
      $region73: #{qrdqn_forward_fused.1} parent=5 // pred_check_branch
        %4781 = sbr.rel (%p4779) target = $region75
      $region74: #{qrdqn_forward_fused.1} parent=5 // pred_region
        %s4782 = ssub.s32 %s12, 2
        // Predicated region
        $region76: #{qrdqn_forward_fused.1} parent=74 // pred_check
          %p4783 = pneg %p177
        $region77: #{qrdqn_forward_fused.1} parent=74 // pred_check_branch
          %4785 = sbr.rel (%p4783) target = $region79
        $region78: #{qrdqn_forward_fused.1} parent=74 // pred_region
          %s4786 = smul.u32 4, %s18
          %p4787 = scmp.lt.s32.totalorder %s4786, 7
          %s4788 = scalar_select %p4787, %s4786, 7
          %s4789 = smul.addr %s4788, 2
          %s4790 = scalar_lea.vmem %s6, %s4789
        $region79: #{qrdqn_forward_fused.1} parent=74 // pred_fallthru
          _
      $region75: #{qrdqn_forward_fused.1} parent=5 // pred_fallthru
        _
    $region6: #{qrdqn_forward_fused.1} parent=1 // loop_footer
      %s16 = sadd.s32 1, %s12
    $region7: #{qrdqn_forward_fused.1} parent=1 // loop_footer_branch
      %11 = sbr.rel target = $region3
    $region8: #{qrdqn_forward_fused.1} parent=1 // loop_exit
      _

</llo_original>
